<compile_context>
chip_gen: v5e
topology: v5e:2x2
jax: 0.10.0
libtpu: 0.0.40
codegen_flags: <defaults>
</compile_context>

<pallas_src>
import numpy as np
import jax
import jax.numpy as jnp
from jax import lax
from jax.experimental import pallas as pl
from jax.experimental.pallas import tpu as pltpu


def _round_up(n, m):
    return (n + m - 1) // m * m


def _encoder_lstm_kernel(
    x_ref,                          # (S*Bp, E)  f32 embedded tokens (seq-major, batch padded)
    wih_ref, b_ref,                 # (E, 8Hp), (1, 8Hp)   [fwd i,f,g,o | bwd i,f,g,o]
    whh_f_ref, whh_b_ref,           # (Hp, 4Hp) each
    wlh1_ref, wlh2_ref, blh_ref,    # linear_h split weights: (Hp,Hp), (Hp,Hp), (1,Hp)
    wlc1_ref, wlc2_ref, blc_ref,    # linear_c split weights
    out_ref,                        # (S*Bp, 2Hp)  fwd in lanes [0,Hp), bwd in lanes [Hp,2Hp)
    hh_ref, hc_ref,                 # (Bp, Hp) projected final hidden / cell
    xproj_ref,                      # scratch VMEM (S*Bp, 8Hp): hoisted input projection
):
    SB, _ = x_ref.shape
    Hp = whh_f_ref.shape[0]
    G = 4 * Hp
    Bp = hh_ref.shape[0]
    S = SB // Bp

    # ---- Hoisted input projection: one MXU-friendly matmul for all steps & both directions ----
    xproj_ref[...] = (
        jnp.dot(x_ref[...], wih_ref[...], preferred_element_type=jnp.float32)
        + b_ref[...]
    )

    def gates_to_hc(gates, c):
        # PyTorch gate order i, f, g, o; grouped sigmoid over [i|f] lanes -> fewer EUP pushes.
        sig_if = jax.nn.sigmoid(gates[:, 0:2 * Hp])
        i = sig_if[:, 0:Hp]
        f = sig_if[:, Hp:2 * Hp]
        g = jnp.tanh(gates[:, 2 * Hp:3 * Hp])
        o = jax.nn.sigmoid(gates[:, 3 * Hp:4 * Hp])
        c_new = f * c + i * g
        h_new = o * jnp.tanh(c_new)
        return h_new, c_new

    zeros = jnp.zeros((Bp, Hp), jnp.float32)

    # ---- Fused fwd/bwd recurrence: two independent h@Whh chains per iteration (2x ILP) ----
    def body(t, carry):
        h_f, c_f, h_b, c_b = carry
        rf = t * Bp               # fwd rows: time t
        rb = (S - 1 - t) * Bp     # bwd rows: time S-1-t
        gates_f = (jnp.dot(h_f, whh_f_ref[...], preferred_element_type=jnp.float32)
                   + xproj_ref[pl.ds(rf, Bp), 0:G])
        gates_b = (jnp.dot(h_b, whh_b_ref[...], preferred_element_type=jnp.float32)
                   + xproj_ref[pl.ds(rb, Bp), G:2 * G])
        h_f, c_f = gates_to_hc(gates_f, c_f)
        h_b, c_b = gates_to_hc(gates_b, c_b)
        out_ref[pl.ds(rf, Bp), 0:Hp] = h_f          # lane-aligned stores straight into the
        out_ref[pl.ds(rb, Bp), Hp:2 * Hp] = h_b     # concatenated bidirectional output
        return (h_f, c_f, h_b, c_b)

    h_f, c_f, h_b, c_b = lax.fori_loop(
        0, S, body, (zeros, zeros, zeros, zeros), unroll=True)

    # ---- linear_h / linear_c heads + ReLU ----
    # concat(h_f, h_b) @ W.T is computed as h_f @ W1 + h_b @ W2 (lane-friendly, no in-kernel concat).
    # TODO(synk): F.dropout(p=0.5) is omitted -- identity in eval mode (training=False).
    hh = (jnp.dot(h_f, wlh1_ref[...], preferred_element_type=jnp.float32)
          + jnp.dot(h_b, wlh2_ref[...], preferred_element_type=jnp.float32)
          + blh_ref[...])
    hc = (jnp.dot(c_f, wlc1_ref[...], preferred_element_type=jnp.float32)
          + jnp.dot(c_b, wlc2_ref[...], preferred_element_type=jnp.float32)
          + blc_ref[...])
    hh_ref[...] = jnp.maximum(hh, 0.0)
    hc_ref[...] = jnp.maximum(hc, 0.0)


def encoder_lstm_forward(input_batch, input_lens, params):
    """Pallas implementation of EncoderLSTM.forward."""
    del input_lens  # unused in the reference forward (no packing) -- kept for API parity
    emb_table = params["embedding"]                                      # (V, E)
    # TODO(synk): embedding gather left as XLA glue (could be fused as in-kernel row-DMA gather).
    x = jnp.take(emb_table, input_batch, axis=0).astype(jnp.float32)     # (S, B, E)
    S, B, E = x.shape
    H = params["whh_f"].shape[0]

    # Pad to full vregs: batch -> multiple of 8 (sublanes), hidden -> multiple of 128 (lanes).
    # Padded weight rows/cols are zero, so padded h/c lanes stay exactly zero.
    Bp = _round_up(B, 8)
    Hp = _round_up(H, 128)

    def pad_gates(w):            # (n, 4H) -> (n, 4Hp): pad each gate block independently
        n = w.shape[0]
        wr = w.reshape(n, 4, H)
        wr = jnp.pad(wr, ((0, 0), (0, 0), (0, Hp - H)))
        return wr.reshape(n, 4 * Hp)

    def pad_rows(w, new_rows):
        return jnp.pad(w, ((0, new_rows - w.shape[0]), (0, 0)))

    wih_cat = jnp.concatenate([pad_gates(params["wih_f"]),
                               pad_gates(params["wih_b"])], axis=1)      # (E, 8Hp)
    b_cat = jnp.concatenate([pad_gates(params["b_f"]),
                             pad_gates(params["b_b"])], axis=1)          # (1, 8Hp)
    whh_f_p = pad_rows(pad_gates(params["whh_f"]), Hp)                   # (Hp, 4Hp)
    whh_b_p = pad_rows(pad_gates(params["whh_b"]), Hp)

    def pad_lin_w(w):            # (H, H) -> (Hp, Hp)
        return jnp.pad(w, ((0, Hp - H), (0, Hp - H)))

    def pad_lin_b(b):            # (1, H) -> (1, Hp)
        return jnp.pad(b, ((0, 0), (0, Hp - H)))

    wlh1_p, wlh2_p = pad_lin_w(params["wlh1"]), pad_lin_w(params["wlh2"])
    wlc1_p, wlc2_p = pad_lin_w(params["wlc1"]), pad_lin_w(params["wlc2"])
    blh_p, blc_p = pad_lin_b(params["blh"]), pad_lin_b(params["blc"])

    x2d = jnp.pad(x, ((0, 0), (0, Bp - B), (0, 0))).reshape(S * Bp, E)

    vmem = pl.BlockSpec(memory_space=pltpu.MemorySpace.VMEM)
    kernel_in = (x2d, wih_cat, b_cat, whh_f_p, whh_b_p,
                 wlh1_p, wlh2_p, blh_p, wlc1_p, wlc2_p, blc_p)
    out_shapes = (
        jax.ShapeDtypeStruct((S * Bp, 2 * Hp), jnp.float32),   # concatenated bidir outputs
        jax.ShapeDtypeStruct((Bp, Hp), jnp.float32),           # hidden_h (pre-squeeze)
        jax.ShapeDtypeStruct((Bp, Hp), jnp.float32),           # hidden_c (pre-squeeze)
    )
    out2d, hh2d, hc2d = pl.pallas_call(
        _encoder_lstm_kernel,
        out_shape=out_shapes,
        in_specs=[vmem] * len(kernel_in),
        out_specs=tuple([vmem] * len(out_shapes)),
        scratch_shapes=[pltpu.VMEM((S * Bp, 8 * Hp), jnp.float32)],
        compiler_params=pltpu.CompilerParams(vmem_limit_bytes=32 * 1024 * 1024),
    )(*kernel_in)

    out3d = out2d.reshape(S, Bp, 2 * Hp)
    if Hp == H:
        output = out3d[:, :B, :]
    else:
        # strip lane padding (only taken when H is not already a multiple of 128)
        output = jnp.concatenate(
            [out3d[:, :B, :H], out3d[:, :B, Hp:Hp + H]], axis=-1)
    hidden_h = hh2d[:B, :H][None]
    hidden_c = hc2d[:B, :H][None]
    return output, (hidden_h, hidden_c)


def init_params(key, vocab_size, emb_size, hid_size, pad_token=-1):
    """Deterministic synthetic parameters (shapes match the nn.Module's __init__)."""
    ks = jax.random.split(key, 11)

    def u(k, shape, s):
        return jax.random.uniform(k, shape, jnp.float32, -s, s)

    emb = jax.random.normal(ks[0], (vocab_size, emb_size), jnp.float32)
    pad_idx = pad_token % vocab_size        # PyTorch normalizes negative padding_idx
    emb = emb.at[pad_idx].set(0.0)          # padding row is zero-initialized

    k_lstm = 1.0 / np.sqrt(hid_size)
    # LSTM weights stored pre-transposed so the kernel computes x @ W; bias = b_ih + b_hh folded.
    wih_f = u(ks[1], (emb_size, 4 * hid_size), k_lstm)
    whh_f = u(ks[2], (hid_size, 4 * hid_size), k_lstm)
    b_f = u(ks[3], (1, 4 * hid_size), k_lstm)
    wih_b = u(ks[4], (emb_size, 4 * hid_size), k_lstm)
    whh_b = u(ks[5], (hid_size, 4 * hid_size), k_lstm)
    b_b = u(ks[6], (1, 4 * hid_size), k_lstm)

    k_lin = 1.0 / np.sqrt(2 * hid_size)
    wlh = u(ks[7], (2 * hid_size, hid_size), k_lin)   # linear_h weight, transposed
    blh = u(ks[8], (1, hid_size), k_lin)
    wlc = u(ks[9], (2 * hid_size, hid_size), k_lin)   # linear_c weight, transposed
    blc = u(ks[10], (1, hid_size), k_lin)

    return dict(
        embedding=emb,
        wih_f=wih_f, whh_f=whh_f, b_f=b_f,
        wih_b=wih_b, whh_b=whh_b, b_b=b_b,
        wlh1=wlh[:hid_size], wlh2=wlh[hid_size:], blh=blh,
        wlc1=wlc[:hid_size], wlc2=wlc[hid_size:], blc=blc,
    )


def reference_forward(input_batch, params):
    """Pure-JAX reference (mirrors PyTorch semantics) for correctness checking."""
    x = jnp.take(params["embedding"], input_batch, axis=0).astype(jnp.float32)
    S, B, _ = x.shape
    H = params["whh_f"].shape[0]

    def run_dir(wih, whh, b, xs):
        def step(carry, x_t):
            h, c = carry
            gates = x_t @ wih + h @ whh + b
            i = jax.nn.sigmoid(gates[:, 0 * H:1 * H])
            f = jax.nn.sigmoid(gates[:, 1 * H:2 * H])
            g = jnp.tanh(gates[:, 2 * H:3 * H])
            o = jax.nn.sigmoid(gates[:, 3 * H:4 * H])
            c = f * c + i * g
            h = o * jnp.tanh(c)
            return (h, c), h
        init = (jnp.zeros((B, H), jnp.float32), jnp.zeros((B, H), jnp.float32))
        (h, c), hs = lax.scan(step, init, xs)
        return h, c, hs

    h_f, c_f, hs_f = run_dir(params["wih_f"], params["whh_f"], params["b_f"], x)
    h_b, c_b, hs_b = run_dir(params["wih_b"], params["whh_b"], params["b_b"], x[::-1])
    out = jnp.concatenate([hs_f, hs_b[::-1]], axis=-1)
    hh = jnp.maximum(h_f @ params["wlh1"] + h_b @ params["wlh2"] + params["blh"], 0.0)[None]
    hc = jnp.maximum(c_f @ params["wlc1"] + c_b @ params["wlc2"] + params["blc"], 0.0)[None]
    return out, (hh, hc)


if __name__ == "__main__":
    key = jax.random.PRNGKey(0)
    vocab_size, emb_size, hid_size = 20, 16, 32
    S, B = 8, 4

    k_params, k_ids = jax.random.split(key)
    params = init_params(k_params, vocab_size, emb_size, hid_size, pad_token=-1)
    input_batch = jax.random.randint(k_ids, (S, B), 0, vocab_size, dtype=jnp.int32)
    input_lens = jnp.full((B,), S, dtype=jnp.int32)

    output, (hidden_h, hidden_c) = encoder_lstm_forward(input_batch, input_lens, params)
    jax.block_until_ready((output, hidden_h, hidden_c))

    assert output.shape == (S, B, 2 * hid_size)
    assert hidden_h.shape == (1, B, hid_size)
    assert hidden_c.shape == (1, B, hid_size)

    ref_out, (ref_hh, ref_hc) = reference_forward(input_batch, params)
    np.testing.assert_allclose(np.asarray(output), np.asarray(ref_out), rtol=2e-2, atol=2e-2)
    np.testing.assert_allclose(np.asarray(hidden_h), np.asarray(ref_hh), rtol=2e-2, atol=2e-2)
    np.testing.assert_allclose(np.asarray(hidden_c), np.asarray(ref_hc), rtol=2e-2, atol=2e-2)

    print("KERNEL_OK")
</pallas_src>

<mosaic_0001>
module attributes {stable_mosaic.version = 11 : i64} {
  func.func @_encoder_lstm_kernel(%arg0: memref<64x16xf32, #tpu.memory_space<vmem>>, %arg1: memref<16x1024xf32, #tpu.memory_space<vmem>>, %arg2: memref<1x1024xf32, #tpu.memory_space<vmem>>, %arg3: memref<128x512xf32, #tpu.memory_space<vmem>>, %arg4: memref<128x512xf32, #tpu.memory_space<vmem>>, %arg5: memref<128x128xf32, #tpu.memory_space<vmem>>, %arg6: memref<128x128xf32, #tpu.memory_space<vmem>>, %arg7: memref<1x128xf32, #tpu.memory_space<vmem>>, %arg8: memref<128x128xf32, #tpu.memory_space<vmem>>, %arg9: memref<128x128xf32, #tpu.memory_space<vmem>>, %arg10: memref<1x128xf32, #tpu.memory_space<vmem>>, %arg11: memref<64x256xf32, #tpu.memory_space<vmem>>, %arg12: memref<8x128xf32, #tpu.memory_space<vmem>>, %arg13: memref<8x128xf32, #tpu.memory_space<vmem>>, %arg14: memref<64x1024xf32, #tpu.memory_space<vmem>>) attributes {dimension_semantics = [], scalar_prefetch = 0 : i64, scratch_operands = 1 : i64, tpu.core_type = #tpu.core_type<tc>} {
    %c0 = arith.constant 0 : index
    %c0_0 = arith.constant 0 : index
    %0 = vector.load %arg0[%c0, %c0_0] : memref<64x16xf32, #tpu.memory_space<vmem>>, vector<64x16xf32>
    %c0_1 = arith.constant 0 : index
    %c0_2 = arith.constant 0 : index
    %1 = vector.load %arg1[%c0_1, %c0_2] : memref<16x1024xf32, #tpu.memory_space<vmem>>, vector<16x1024xf32>
    %cst = arith.constant dense<0.000000e+00> : vector<64x1024xf32>
    %2 = tpu.matmul %0, %1, %cst {dimension_numbers = #tpu.dot_dimension_numbers<[1], [0], [0], [1], [0, 0, 1, 1], [], []>} : vector<64x16xf32>, vector<16x1024xf32>, vector<64x1024xf32> -> vector<64x1024xf32>
    %c0_3 = arith.constant 0 : index
    %c0_4 = arith.constant 0 : index
    %3 = vector.load %arg2[%c0_3, %c0_4] : memref<1x1024xf32, #tpu.memory_space<vmem>>, vector<1x1024xf32>
    %4 = vector.broadcast %3 : vector<1x1024xf32> to vector<64x1024xf32>
    %5 = arith.addf %2, %4 : vector<64x1024xf32>
    %c0_5 = arith.constant 0 : index
    %c0_6 = arith.constant 0 : index
    %6 = vector.load %arg14[%c0_5, %c0_6] : memref<64x1024xf32, #tpu.memory_space<vmem>>, vector<64x1024xf32>
    tpu.vector_store %arg14[%c0_5, %c0_6], %5 {strides = array<i32>} : memref<64x1024xf32, #tpu.memory_space<vmem>>, vector<64x1024xf32>,
    %cst_7 = arith.constant 0.000000e+00 : f32
    %7 = vector.broadcast %cst_7 : f32 to vector<8x128xf32>
    %c0_i32 = arith.constant 0 : i32
    %c8_i32 = arith.constant 8 : i32
    %8 = arith.muli %c0_i32, %c8_i32 : i32
    %c7_i32 = arith.constant 7 : i32
    %9 = arith.subi %c7_i32, %c0_i32 : i32
    %c8_i32_8 = arith.constant 8 : i32
    %10 = arith.muli %9, %c8_i32_8 : i32
    %c0_9 = arith.constant 0 : index
    %c0_10 = arith.constant 0 : index
    %11 = vector.load %arg3[%c0_9, %c0_10] : memref<128x512xf32, #tpu.memory_space<vmem>>, vector<128x512xf32>
    %cst_11 = arith.constant dense<0.000000e+00> : vector<8x512xf32>
    %12 = tpu.matmul %7, %11, %cst_11 {dimension_numbers = #tpu.dot_dimension_numbers<[1], [0], [0], [1], [0, 0, 1, 1], [], []>} : vector<8x128xf32>, vector<128x512xf32>, vector<8x512xf32> -> vector<8x512xf32>
    %13 = arith.index_cast %8 : i32 to index
    %c0_12 = arith.constant 0 : index
    %14 = vector.load %arg14[%13, %c0_12] : memref<64x1024xf32, #tpu.memory_space<vmem>>, vector<8x512xf32>
    %15 = arith.addf %12, %14 : vector<8x512xf32>
    %c0_13 = arith.constant 0 : index
    %c0_14 = arith.constant 0 : index
    %16 = vector.load %arg4[%c0_13, %c0_14] : memref<128x512xf32, #tpu.memory_space<vmem>>, vector<128x512xf32>
    %cst_15 = arith.constant dense<0.000000e+00> : vector<8x512xf32>
    %17 = tpu.matmul %7, %16, %cst_15 {dimension_numbers = #tpu.dot_dimension_numbers<[1], [0], [0], [1], [0, 0, 1, 1], [], []>} : vector<8x128xf32>, vector<128x512xf32>, vector<8x512xf32> -> vector<8x512xf32>
    %18 = arith.index_cast %10 : i32 to index
    %c512 = arith.constant 512 : index
    %19 = vector.load %arg14[%18, %c512] : memref<64x1024xf32, #tpu.memory_space<vmem>>, vector<8x512xf32>
    %20 = arith.addf %17, %19 : vector<8x512xf32>
    %21 = vector.extract_strided_slice %15 {offsets = [0, 0], sizes = [8, 256], strides = [1, 1]} : vector<8x512xf32> to vector<8x256xf32>
    %22 = arith.negf %21 : vector<8x256xf32>
    %23 = math.exp %22 : vector<8x256xf32>
    %cst_16 = arith.constant 1.000000e+00 : f32
    %24 = vector.broadcast %cst_16 : f32 to vector<8x256xf32>
    %25 = arith.addf %24, %23 : vector<8x256xf32>
    %26 = arith.divf %24, %25 : vector<8x256xf32>
    %27 = vector.extract_strided_slice %26 {offsets = [0, 0], sizes = [8, 128], strides = [1, 1]} : vector<8x256xf32> to vector<8x128xf32>
    %28 = vector.extract_strided_slice %26 {offsets = [0, 128], sizes = [8, 128], strides = [1, 1]} : vector<8x256xf32> to vector<8x128xf32>
    %29 = vector.extract_strided_slice %15 {offsets = [0, 256], sizes = [8, 128], strides = [1, 1]} : vector<8x512xf32> to vector<8x128xf32>
    %30 = math.tanh %29 : vector<8x128xf32>
    %31 = vector.extract_strided_slice %15 {offsets = [0, 384], sizes = [8, 128], strides = [1, 1]} : vector<8x512xf32> to vector<8x128xf32>
    %32 = arith.negf %31 : vector<8x128xf32>
    %33 = math.exp %32 : vector<8x128xf32>
    %cst_17 = arith.constant 1.000000e+00 : f32
    %34 = vector.broadcast %cst_17 : f32 to vector<8x128xf32>
    %35 = arith.addf %34, %33 : vector<8x128xf32>
    %36 = arith.divf %34, %35 : vector<8x128xf32>
    %37 = arith.mulf %28, %7 : vector<8x128xf32>
    %38 = arith.mulf %27, %30 : vector<8x128xf32>
    %39 = arith.addf %37, %38 : vector<8x128xf32>
    %40 = math.tanh %39 : vector<8x128xf32>
    %41 = arith.mulf %36, %40 : vector<8x128xf32>
    %42 = vector.extract_strided_slice %20 {offsets = [0, 0], sizes = [8, 256], strides = [1, 1]} : vector<8x512xf32> to vector<8x256xf32>
    %43 = arith.negf %42 : vector<8x256xf32>
    %44 = math.exp %43 : vector<8x256xf32>
    %cst_18 = arith.constant 1.000000e+00 : f32
    %45 = vector.broadcast %cst_18 : f32 to vector<8x256xf32>
    %46 = arith.addf %45, %44 : vector<8x256xf32>
    %47 = arith.divf %45, %46 : vector<8x256xf32>
    %48 = vector.extract_strided_slice %47 {offsets = [0, 0], sizes = [8, 128], strides = [1, 1]} : vector<8x256xf32> to vector<8x128xf32>
    %49 = vector.extract_strided_slice %47 {offsets = [0, 128], sizes = [8, 128], strides = [1, 1]} : vector<8x256xf32> to vector<8x128xf32>
    %50 = vector.extract_strided_slice %20 {offsets = [0, 256], sizes = [8, 128], strides = [1, 1]} : vector<8x512xf32> to vector<8x128xf32>
    %51 = math.tanh %50 : vector<8x128xf32>
    %52 = vector.extract_strided_slice %20 {offsets = [0, 384], sizes = [8, 128], strides = [1, 1]} : vector<8x512xf32> to vector<8x128xf32>
    %53 = arith.negf %52 : vector<8x128xf32>
    %54 = math.exp %53 : vector<8x128xf32>
    %cst_19 = arith.constant 1.000000e+00 : f32
    %55 = vector.broadcast %cst_19 : f32 to vector<8x128xf32>
    %56 = arith.addf %55, %54 : vector<8x128xf32>
    %57 = arith.divf %55, %56 : vector<8x128xf32>
    %58 = arith.mulf %49, %7 : vector<8x128xf32>
    %59 = arith.mulf %48, %51 : vector<8x128xf32>
    %60 = arith.addf %58, %59 : vector<8x128xf32>
    %61 = math.tanh %60 : vector<8x128xf32>
    %62 = arith.mulf %57, %61 : vector<8x128xf32>
    %63 = arith.index_cast %8 : i32 to index
    %c0_20 = arith.constant 0 : index
    %64 = vector.load %arg11[%63, %c0_20] : memref<64x256xf32, #tpu.memory_space<vmem>>, vector<8x128xf32>
    tpu.vector_store %arg11[%63, %c0_20], %41 {strides = array<i32>} : memref<64x256xf32, #tpu.memory_space<vmem>>, vector<8x128xf32>,
    %65 = arith.index_cast %10 : i32 to index
    %c128 = arith.constant 128 : index
    %66 = vector.load %arg11[%65, %c128] : memref<64x256xf32, #tpu.memory_space<vmem>>, vector<8x128xf32>
    tpu.vector_store %arg11[%65, %c128], %62 {strides = array<i32>} : memref<64x256xf32, #tpu.memory_space<vmem>>, vector<8x128xf32>,
    %c1_i32 = arith.constant 1 : i32
    %c8_i32_21 = arith.constant 8 : i32
    %67 = arith.muli %c1_i32, %c8_i32_21 : i32
    %c7_i32_22 = arith.constant 7 : i32
    %68 = arith.subi %c7_i32_22, %c1_i32 : i32
    %c8_i32_23 = arith.constant 8 : i32
    %69 = arith.muli %68, %c8_i32_23 : i32
    %c0_24 = arith.constant 0 : index
    %c0_25 = arith.constant 0 : index
    %70 = vector.load %arg3[%c0_24, %c0_25] : memref<128x512xf32, #tpu.memory_space<vmem>>, vector<128x512xf32>
    %cst_26 = arith.constant dense<0.000000e+00> : vector<8x512xf32>
    %71 = tpu.matmul %41, %70, %cst_26 {dimension_numbers = #tpu.dot_dimension_numbers<[1], [0], [0], [1], [0, 0, 1, 1], [], []>} : vector<8x128xf32>, vector<128x512xf32>, vector<8x512xf32> -> vector<8x512xf32>
    %72 = arith.index_cast %67 : i32 to index
    %c0_27 = arith.constant 0 : index
    %73 = vector.load %arg14[%72, %c0_27] : memref<64x1024xf32, #tpu.memory_space<vmem>>, vector<8x512xf32>
    %74 = arith.addf %71, %73 : vector<8x512xf32>
    %c0_28 = arith.constant 0 : index
    %c0_29 = arith.constant 0 : index
    %75 = vector.load %arg4[%c0_28, %c0_29] : memref<128x512xf32, #tpu.memory_space<vmem>>, vector<128x512xf32>
    %cst_30 = arith.constant dense<0.000000e+00> : vector<8x512xf32>
    %76 = tpu.matmul %62, %75, %cst_30 {dimension_numbers = #tpu.dot_dimension_numbers<[1], [0], [0], [1], [0, 0, 1, 1], [], []>} : vector<8x128xf32>, vector<128x512xf32>, vector<8x512xf32> -> vector<8x512xf32>
    %77 = arith.index_cast %69 : i32 to index
    %c512_31 = arith.constant 512 : index
    %78 = vector.load %arg14[%77, %c512_31] : memref<64x1024xf32, #tpu.memory_space<vmem>>, vector<8x512xf32>
    %79 = arith.addf %76, %78 : vector<8x512xf32>
    %80 = vector.extract_strided_slice %74 {offsets = [0, 0], sizes = [8, 256], strides = [1, 1]} : vector<8x512xf32> to vector<8x256xf32>
    %81 = arith.negf %80 : vector<8x256xf32>
    %82 = math.exp %81 : vector<8x256xf32>
    %cst_32 = arith.constant 1.000000e+00 : f32
    %83 = vector.broadcast %cst_32 : f32 to vector<8x256xf32>
    %84 = arith.addf %83, %82 : vector<8x256xf32>
    %85 = arith.divf %83, %84 : vector<8x256xf32>
    %86 = vector.extract_strided_slice %85 {offsets = [0, 0], sizes = [8, 128], strides = [1, 1]} : vector<8x256xf32> to vector<8x128xf32>
    %87 = vector.extract_strided_slice %85 {offsets = [0, 128], sizes = [8, 128], strides = [1, 1]} : vector<8x256xf32> to vector<8x128xf32>
    %88 = vector.extract_strided_slice %74 {offsets = [0, 256], sizes = [8, 128], strides = [1, 1]} : vector<8x512xf32> to vector<8x128xf32>
    %89 = math.tanh %88 : vector<8x128xf32>
    %90 = vector.extract_strided_slice %74 {offsets = [0, 384], sizes = [8, 128], strides = [1, 1]} : vector<8x512xf32> to vector<8x128xf32>
    %91 = arith.negf %90 : vector<8x128xf32>
    %92 = math.exp %91 : vector<8x128xf32>
    %cst_33 = arith.constant 1.000000e+00 : f32
    %93 = vector.broadcast %cst_33 : f32 to vector<8x128xf32>
    %94 = arith.addf %93, %92 : vector<8x128xf32>
    %95 = arith.divf %93, %94 : vector<8x128xf32>
    %96 = arith.mulf %87, %39 : vector<8x128xf32>
    %97 = arith.mulf %86, %89 : vector<8x128xf32>
    %98 = arith.addf %96, %97 : vector<8x128xf32>
    %99 = math.tanh %98 : vector<8x128xf32>
    %100 = arith.mulf %95, %99 : vector<8x128xf32>
    %101 = vector.extract_strided_slice %79 {offsets = [0, 0], sizes = [8, 256], strides = [1, 1]} : vector<8x512xf32> to vector<8x256xf32>
    %102 = arith.negf %101 : vector<8x256xf32>
    %103 = math.exp %102 : vector<8x256xf32>
    %cst_34 = arith.constant 1.000000e+00 : f32
    %104 = vector.broadcast %cst_34 : f32 to vector<8x256xf32>
    %105 = arith.addf %104, %103 : vector<8x256xf32>
    %106 = arith.divf %104, %105 : vector<8x256xf32>
    %107 = vector.extract_strided_slice %106 {offsets = [0, 0], sizes = [8, 128], strides = [1, 1]} : vector<8x256xf32> to vector<8x128xf32>
    %108 = vector.extract_strided_slice %106 {offsets = [0, 128], sizes = [8, 128], strides = [1, 1]} : vector<8x256xf32> to vector<8x128xf32>
    %109 = vector.extract_strided_slice %79 {offsets = [0, 256], sizes = [8, 128], strides = [1, 1]} : vector<8x512xf32> to vector<8x128xf32>
    %110 = math.tanh %109 : vector<8x128xf32>
    %111 = vector.extract_strided_slice %79 {offsets = [0, 384], sizes = [8, 128], strides = [1, 1]} : vector<8x512xf32> to vector<8x128xf32>
    %112 = arith.negf %111 : vector<8x128xf32>
    %113 = math.exp %112 : vector<8x128xf32>
    %cst_35 = arith.constant 1.000000e+00 : f32
    %114 = vector.broadcast %cst_35 : f32 to vector<8x128xf32>
    %115 = arith.addf %114, %113 : vector<8x128xf32>
    %116 = arith.divf %114, %115 : vector<8x128xf32>
    %117 = arith.mulf %108, %60 : vector<8x128xf32>
    %118 = arith.mulf %107, %110 : vector<8x128xf32>
    %119 = arith.addf %117, %118 : vector<8x128xf32>
    %120 = math.tanh %119 : vector<8x128xf32>
    %121 = arith.mulf %116, %120 : vector<8x128xf32>
    %122 = arith.index_cast %67 : i32 to index
    %c0_36 = arith.constant 0 : index
    %123 = vector.load %arg11[%122, %c0_36] : memref<64x256xf32, #tpu.memory_space<vmem>>, vector<8x128xf32>
    tpu.vector_store %arg11[%122, %c0_36], %100 {strides = array<i32>} : memref<64x256xf32, #tpu.memory_space<vmem>>, vector<8x128xf32>,
    %124 = arith.index_cast %69 : i32 to index
    %c128_37 = arith.constant 128 : index
    %125 = vector.load %arg11[%124, %c128_37] : memref<64x256xf32, #tpu.memory_space<vmem>>, vector<8x128xf32>
    tpu.vector_store %arg11[%124, %c128_37], %121 {strides = array<i32>} : memref<64x256xf32, #tpu.memory_space<vmem>>, vector<8x128xf32>,
    %c2_i32 = arith.constant 2 : i32
    %c8_i32_38 = arith.constant 8 : i32
    %126 = arith.muli %c2_i32, %c8_i32_38 : i32
    %c7_i32_39 = arith.constant 7 : i32
    %127 = arith.subi %c7_i32_39, %c2_i32 : i32
    %c8_i32_40 = arith.constant 8 : i32
    %128 = arith.muli %127, %c8_i32_40 : i32
    %c0_41 = arith.constant 0 : index
    %c0_42 = arith.constant 0 : index
    %129 = vector.load %arg3[%c0_41, %c0_42] : memref<128x512xf32, #tpu.memory_space<vmem>>, vector<128x512xf32>
    %cst_43 = arith.constant dense<0.000000e+00> : vector<8x512xf32>
    %130 = tpu.matmul %100, %129, %cst_43 {dimension_numbers = #tpu.dot_dimension_numbers<[1], [0], [0], [1], [0, 0, 1, 1], [], []>} : vector<8x128xf32>, vector<128x512xf32>, vector<8x512xf32> -> vector<8x512xf32>
    %131 = arith.index_cast %126 : i32 to index
    %c0_44 = arith.constant 0 : index
    %132 = vector.load %arg14[%131, %c0_44] : memref<64x1024xf32, #tpu.memory_space<vmem>>, vector<8x512xf32>
    %133 = arith.addf %130, %132 : vector<8x512xf32>
    %c0_45 = arith.constant 0 : index
    %c0_46 = arith.constant 0 : index
    %134 = vector.load %arg4[%c0_45, %c0_46] : memref<128x512xf32, #tpu.memory_space<vmem>>, vector<128x512xf32>
    %cst_47 = arith.constant dense<0.000000e+00> : vector<8x512xf32>
    %135 = tpu.matmul %121, %134, %cst_47 {dimension_numbers = #tpu.dot_dimension_numbers<[1], [0], [0], [1], [0, 0, 1, 1], [], []>} : vector<8x128xf32>, vector<128x512xf32>, vector<8x512xf32> -> vector<8x512xf32>
    %136 = arith.index_cast %128 : i32 to index
    %c512_48 = arith.constant 512 : index
    %137 = vector.load %arg14[%136, %c512_48] : memref<64x1024xf32, #tpu.memory_space<vmem>>, vector<8x512xf32>
    %138 = arith.addf %135, %137 : vector<8x512xf32>
    %139 = vector.extract_strided_slice %133 {offsets = [0, 0], sizes = [8, 256], strides = [1, 1]} : vector<8x512xf32> to vector<8x256xf32>
    %140 = arith.negf %139 : vector<8x256xf32>
    %141 = math.exp %140 : vector<8x256xf32>
    %cst_49 = arith.constant 1.000000e+00 : f32
    %142 = vector.broadcast %cst_49 : f32 to vector<8x256xf32>
    %143 = arith.addf %142, %141 : vector<8x256xf32>
    %144 = arith.divf %142, %143 : vector<8x256xf32>
    %145 = vector.extract_strided_slice %144 {offsets = [0, 0], sizes = [8, 128], strides = [1, 1]} : vector<8x256xf32> to vector<8x128xf32>
    %146 = vector.extract_strided_slice %144 {offsets = [0, 128], sizes = [8, 128], strides = [1, 1]} : vector<8x256xf32> to vector<8x128xf32>
    %147 = vector.extract_strided_slice %133 {offsets = [0, 256], sizes = [8, 128], strides = [1, 1]} : vector<8x512xf32> to vector<8x128xf32>
    %148 = math.tanh %147 : vector<8x128xf32>
    %149 = vector.extract_strided_slice %133 {offsets = [0, 384], sizes = [8, 128], strides = [1, 1]} : vector<8x512xf32> to vector<8x128xf32>
    %150 = arith.negf %149 : vector<8x128xf32>
    %151 = math.exp %150 : vector<8x128xf32>
    %cst_50 = arith.constant 1.000000e+00 : f32
    %152 = vector.broadcast %cst_50 : f32 to vector<8x128xf32>
    %153 = arith.addf %152, %151 : vector<8x128xf32>
    %154 = arith.divf %152, %153 : vector<8x128xf32>
    %155 = arith.mulf %146, %98 : vector<8x128xf32>
    %156 = arith.mulf %145, %148 : vector<8x128xf32>
    %157 = arith.addf %155, %156 : vector<8x128xf32>
    %158 = math.tanh %157 : vector<8x128xf32>
    %159 = arith.mulf %154, %158 : vector<8x128xf32>
    %160 = vector.extract_strided_slice %138 {offsets = [0, 0], sizes = [8, 256], strides = [1, 1]} : vector<8x512xf32> to vector<8x256xf32>
    %161 = arith.negf %160 : vector<8x256xf32>
    %162 = math.exp %161 : vector<8x256xf32>
    %cst_51 = arith.constant 1.000000e+00 : f32
    %163 = vector.broadcast %cst_51 : f32 to vector<8x256xf32>
    %164 = arith.addf %163, %162 : vector<8x256xf32>
    %165 = arith.divf %163, %164 : vector<8x256xf32>
    %166 = vector.extract_strided_slice %165 {offsets = [0, 0], sizes = [8, 128], strides = [1, 1]} : vector<8x256xf32> to vector<8x128xf32>
    %167 = vector.extract_strided_slice %165 {offsets = [0, 128], sizes = [8, 128], strides = [1, 1]} : vector<8x256xf32> to vector<8x128xf32>
    %168 = vector.extract_strided_slice %138 {offsets = [0, 256], sizes = [8, 128], strides = [1, 1]} : vector<8x512xf32> to vector<8x128xf32>
    %169 = math.tanh %168 : vector<8x128xf32>
    %170 = vector.extract_strided_slice %138 {offsets = [0, 384], sizes = [8, 128], strides = [1, 1]} : vector<8x512xf32> to vector<8x128xf32>
    %171 = arith.negf %170 : vector<8x128xf32>
    %172 = math.exp %171 : vector<8x128xf32>
    %cst_52 = arith.constant 1.000000e+00 : f32
    %173 = vector.broadcast %cst_52 : f32 to vector<8x128xf32>
    %174 = arith.addf %173, %172 : vector<8x128xf32>
    %175 = arith.divf %173, %174 : vector<8x128xf32>
    %176 = arith.mulf %167, %119 : vector<8x128xf32>
    %177 = arith.mulf %166, %169 : vector<8x128xf32>
    %178 = arith.addf %176, %177 : vector<8x128xf32>
    %179 = math.tanh %178 : vector<8x128xf32>
    %180 = arith.mulf %175, %179 : vector<8x128xf32>
    %181 = arith.index_cast %126 : i32 to index
    %c0_53 = arith.constant 0 : index
    %182 = vector.load %arg11[%181, %c0_53] : memref<64x256xf32, #tpu.memory_space<vmem>>, vector<8x128xf32>
    tpu.vector_store %arg11[%181, %c0_53], %159 {strides = array<i32>} : memref<64x256xf32, #tpu.memory_space<vmem>>, vector<8x128xf32>,
    %183 = arith.index_cast %128 : i32 to index
    %c128_54 = arith.constant 128 : index
    %184 = vector.load %arg11[%183, %c128_54] : memref<64x256xf32, #tpu.memory_space<vmem>>, vector<8x128xf32>
    tpu.vector_store %arg11[%183, %c128_54], %180 {strides = array<i32>} : memref<64x256xf32, #tpu.memory_space<vmem>>, vector<8x128xf32>,
    %c3_i32 = arith.constant 3 : i32
    %c8_i32_55 = arith.constant 8 : i32
    %185 = arith.muli %c3_i32, %c8_i32_55 : i32
    %c7_i32_56 = arith.constant 7 : i32
    %186 = arith.subi %c7_i32_56, %c3_i32 : i32
    %c8_i32_57 = arith.constant 8 : i32
    %187 = arith.muli %186, %c8_i32_57 : i32
    %c0_58 = arith.constant 0 : index
    %c0_59 = arith.constant 0 : index
    %188 = vector.load %arg3[%c0_58, %c0_59] : memref<128x512xf32, #tpu.memory_space<vmem>>, vector<128x512xf32>
    %cst_60 = arith.constant dense<0.000000e+00> : vector<8x512xf32>
    %189 = tpu.matmul %159, %188, %cst_60 {dimension_numbers = #tpu.dot_dimension_numbers<[1], [0], [0], [1], [0, 0, 1, 1], [], []>} : vector<8x128xf32>, vector<128x512xf32>, vector<8x512xf32> -> vector<8x512xf32>
    %190 = arith.index_cast %185 : i32 to index
    %c0_61 = arith.constant 0 : index
    %191 = vector.load %arg14[%190, %c0_61] : memref<64x1024xf32, #tpu.memory_space<vmem>>, vector<8x512xf32>
    %192 = arith.addf %189, %191 : vector<8x512xf32>
    %c0_62 = arith.constant 0 : index
    %c0_63 = arith.constant 0 : index
    %193 = vector.load %arg4[%c0_62, %c0_63] : memref<128x512xf32, #tpu.memory_space<vmem>>, vector<128x512xf32>
    %cst_64 = arith.constant dense<0.000000e+00> : vector<8x512xf32>
    %194 = tpu.matmul %180, %193, %cst_64 {dimension_numbers = #tpu.dot_dimension_numbers<[1], [0], [0], [1], [0, 0, 1, 1], [], []>} : vector<8x128xf32>, vector<128x512xf32>, vector<8x512xf32> -> vector<8x512xf32>
    %195 = arith.index_cast %187 : i32 to index
    %c512_65 = arith.constant 512 : index
    %196 = vector.load %arg14[%195, %c512_65] : memref<64x1024xf32, #tpu.memory_space<vmem>>, vector<8x512xf32>
    %197 = arith.addf %194, %196 : vector<8x512xf32>
    %198 = vector.extract_strided_slice %192 {offsets = [0, 0], sizes = [8, 256], strides = [1, 1]} : vector<8x512xf32> to vector<8x256xf32>
    %199 = arith.negf %198 : vector<8x256xf32>
    %200 = math.exp %199 : vector<8x256xf32>
    %cst_66 = arith.constant 1.000000e+00 : f32
    %201 = vector.broadcast %cst_66 : f32 to vector<8x256xf32>
    %202 = arith.addf %201, %200 : vector<8x256xf32>
    %203 = arith.divf %201, %202 : vector<8x256xf32>
    %204 = vector.extract_strided_slice %203 {offsets = [0, 0], sizes = [8, 128], strides = [1, 1]} : vector<8x256xf32> to vector<8x128xf32>
    %205 = vector.extract_strided_slice %203 {offsets = [0, 128], sizes = [8, 128], strides = [1, 1]} : vector<8x256xf32> to vector<8x128xf32>
    %206 = vector.extract_strided_slice %192 {offsets = [0, 256], sizes = [8, 128], strides = [1, 1]} : vector<8x512xf32> to vector<8x128xf32>
    %207 = math.tanh %206 : vector<8x128xf32>
    %208 = vector.extract_strided_slice %192 {offsets = [0, 384], sizes = [8, 128], strides = [1, 1]} : vector<8x512xf32> to vector<8x128xf32>
    %209 = arith.negf %208 : vector<8x128xf32>
    %210 = math.exp %209 : vector<8x128xf32>
    %cst_67 = arith.constant 1.000000e+00 : f32
    %211 = vector.broadcast %cst_67 : f32 to vector<8x128xf32>
    %212 = arith.addf %211, %210 : vector<8x128xf32>
    %213 = arith.divf %211, %212 : vector<8x128xf32>
    %214 = arith.mulf %205, %157 : vector<8x128xf32>
    %215 = arith.mulf %204, %207 : vector<8x128xf32>
    %216 = arith.addf %214, %215 : vector<8x128xf32>
    %217 = math.tanh %216 : vector<8x128xf32>
    %218 = arith.mulf %213, %217 : vector<8x128xf32>
    %219 = vector.extract_strided_slice %197 {offsets = [0, 0], sizes = [8, 256], strides = [1, 1]} : vector<8x512xf32> to vector<8x256xf32>
    %220 = arith.negf %219 : vector<8x256xf32>
    %221 = math.exp %220 : vector<8x256xf32>
    %cst_68 = arith.constant 1.000000e+00 : f32
    %222 = vector.broadcast %cst_68 : f32 to vector<8x256xf32>
    %223 = arith.addf %222, %221 : vector<8x256xf32>
    %224 = arith.divf %222, %223 : vector<8x256xf32>
    %225 = vector.extract_strided_slice %224 {offsets = [0, 0], sizes = [8, 128], strides = [1, 1]} : vector<8x256xf32> to vector<8x128xf32>
    %226 = vector.extract_strided_slice %224 {offsets = [0, 128], sizes = [8, 128], strides = [1, 1]} : vector<8x256xf32> to vector<8x128xf32>
    %227 = vector.extract_strided_slice %197 {offsets = [0, 256], sizes = [8, 128], strides = [1, 1]} : vector<8x512xf32> to vector<8x128xf32>
    %228 = math.tanh %227 : vector<8x128xf32>
    %229 = vector.extract_strided_slice %197 {offsets = [0, 384], sizes = [8, 128], strides = [1, 1]} : vector<8x512xf32> to vector<8x128xf32>
    %230 = arith.negf %229 : vector<8x128xf32>
    %231 = math.exp %230 : vector<8x128xf32>
    %cst_69 = arith.constant 1.000000e+00 : f32
    %232 = vector.broadcast %cst_69 : f32 to vector<8x128xf32>
    %233 = arith.addf %232, %231 : vector<8x128xf32>
    %234 = arith.divf %232, %233 : vector<8x128xf32>
    %235 = arith.mulf %226, %178 : vector<8x128xf32>
    %236 = arith.mulf %225, %228 : vector<8x128xf32>
    %237 = arith.addf %235, %236 : vector<8x128xf32>
    %238 = math.tanh %237 : vector<8x128xf32>
    %239 = arith.mulf %234, %238 : vector<8x128xf32>
    %240 = arith.index_cast %185 : i32 to index
    %c0_70 = arith.constant 0 : index
    %241 = vector.load %arg11[%240, %c0_70] : memref<64x256xf32, #tpu.memory_space<vmem>>, vector<8x128xf32>
    tpu.vector_store %arg11[%240, %c0_70], %218 {strides = array<i32>} : memref<64x256xf32, #tpu.memory_space<vmem>>, vector<8x128xf32>,
    %242 = arith.index_cast %187 : i32 to index
    %c128_71 = arith.constant 128 : index
    %243 = vector.load %arg11[%242, %c128_71] : memref<64x256xf32, #tpu.memory_space<vmem>>, vector<8x128xf32>
    tpu.vector_store %arg11[%242, %c128_71], %239 {strides = array<i32>} : memref<64x256xf32, #tpu.memory_space<vmem>>, vector<8x128xf32>,
    %c4_i32 = arith.constant 4 : i32
    %c8_i32_72 = arith.constant 8 : i32
    %244 = arith.muli %c4_i32, %c8_i32_72 : i32
    %c7_i32_73 = arith.constant 7 : i32
    %245 = arith.subi %c7_i32_73, %c4_i32 : i32
    %c8_i32_74 = arith.constant 8 : i32
    %246 = arith.muli %245, %c8_i32_74 : i32
    %c0_75 = arith.constant 0 : index
    %c0_76 = arith.constant 0 : index
    %247 = vector.load %arg3[%c0_75, %c0_76] : memref<128x512xf32, #tpu.memory_space<vmem>>, vector<128x512xf32>
    %cst_77 = arith.constant dense<0.000000e+00> : vector<8x512xf32>
    %248 = tpu.matmul %218, %247, %cst_77 {dimension_numbers = #tpu.dot_dimension_numbers<[1], [0], [0], [1], [0, 0, 1, 1], [], []>} : vector<8x128xf32>, vector<128x512xf32>, vector<8x512xf32> -> vector<8x512xf32>
    %249 = arith.index_cast %244 : i32 to index
    %c0_78 = arith.constant 0 : index
    %250 = vector.load %arg14[%249, %c0_78] : memref<64x1024xf32, #tpu.memory_space<vmem>>, vector<8x512xf32>
    %251 = arith.addf %248, %250 : vector<8x512xf32>
    %c0_79 = arith.constant 0 : index
    %c0_80 = arith.constant 0 : index
    %252 = vector.load %arg4[%c0_79, %c0_80] : memref<128x512xf32, #tpu.memory_space<vmem>>, vector<128x512xf32>
    %cst_81 = arith.constant dense<0.000000e+00> : vector<8x512xf32>
    %253 = tpu.matmul %239, %252, %cst_81 {dimension_numbers = #tpu.dot_dimension_numbers<[1], [0], [0], [1], [0, 0, 1, 1], [], []>} : vector<8x128xf32>, vector<128x512xf32>, vector<8x512xf32> -> vector<8x512xf32>
    %254 = arith.index_cast %246 : i32 to index
    %c512_82 = arith.constant 512 : index
    %255 = vector.load %arg14[%254, %c512_82] : memref<64x1024xf32, #tpu.memory_space<vmem>>, vector<8x512xf32>
    %256 = arith.addf %253, %255 : vector<8x512xf32>
    %257 = vector.extract_strided_slice %251 {offsets = [0, 0], sizes = [8, 256], strides = [1, 1]} : vector<8x512xf32> to vector<8x256xf32>
    %258 = arith.negf %257 : vector<8x256xf32>
    %259 = math.exp %258 : vector<8x256xf32>
    %cst_83 = arith.constant 1.000000e+00 : f32
    %260 = vector.broadcast %cst_83 : f32 to vector<8x256xf32>
    %261 = arith.addf %260, %259 : vector<8x256xf32>
    %262 = arith.divf %260, %261 : vector<8x256xf32>
    %263 = vector.extract_strided_slice %262 {offsets = [0, 0], sizes = [8, 128], strides = [1, 1]} : vector<8x256xf32> to vector<8x128xf32>
    %264 = vector.extract_strided_slice %262 {offsets = [0, 128], sizes = [8, 128], strides = [1, 1]} : vector<8x256xf32> to vector<8x128xf32>
    %265 = vector.extract_strided_slice %251 {offsets = [0, 256], sizes = [8, 128], strides = [1, 1]} : vector<8x512xf32> to vector<8x128xf32>
    %266 = math.tanh %265 : vector<8x128xf32>
    %267 = vector.extract_strided_slice %251 {offsets = [0, 384], sizes = [8, 128], strides = [1, 1]} : vector<8x512xf32> to vector<8x128xf32>
    %268 = arith.negf %267 : vector<8x128xf32>
    %269 = math.exp %268 : vector<8x128xf32>
    %cst_84 = arith.constant 1.000000e+00 : f32
    %270 = vector.broadcast %cst_84 : f32 to vector<8x128xf32>
    %271 = arith.addf %270, %269 : vector<8x128xf32>
    %272 = arith.divf %270, %271 : vector<8x128xf32>
    %273 = arith.mulf %264, %216 : vector<8x128xf32>
    %274 = arith.mulf %263, %266 : vector<8x128xf32>
    %275 = arith.addf %273, %274 : vector<8x128xf32>
    %276 = math.tanh %275 : vector<8x128xf32>
    %277 = arith.mulf %272, %276 : vector<8x128xf32>
    %278 = vector.extract_strided_slice %256 {offsets = [0, 0], sizes = [8, 256], strides = [1, 1]} : vector<8x512xf32> to vector<8x256xf32>
    %279 = arith.negf %278 : vector<8x256xf32>
    %280 = math.exp %279 : vector<8x256xf32>
    %cst_85 = arith.constant 1.000000e+00 : f32
    %281 = vector.broadcast %cst_85 : f32 to vector<8x256xf32>
    %282 = arith.addf %281, %280 : vector<8x256xf32>
    %283 = arith.divf %281, %282 : vector<8x256xf32>
    %284 = vector.extract_strided_slice %283 {offsets = [0, 0], sizes = [8, 128], strides = [1, 1]} : vector<8x256xf32> to vector<8x128xf32>
    %285 = vector.extract_strided_slice %283 {offsets = [0, 128], sizes = [8, 128], strides = [1, 1]} : vector<8x256xf32> to vector<8x128xf32>
    %286 = vector.extract_strided_slice %256 {offsets = [0, 256], sizes = [8, 128], strides = [1, 1]} : vector<8x512xf32> to vector<8x128xf32>
    %287 = math.tanh %286 : vector<8x128xf32>
    %288 = vector.extract_strided_slice %256 {offsets = [0, 384], sizes = [8, 128], strides = [1, 1]} : vector<8x512xf32> to vector<8x128xf32>
    %289 = arith.negf %288 : vector<8x128xf32>
    %290 = math.exp %289 : vector<8x128xf32>
    %cst_86 = arith.constant 1.000000e+00 : f32
    %291 = vector.broadcast %cst_86 : f32 to vector<8x128xf32>
    %292 = arith.addf %291, %290 : vector<8x128xf32>
    %293 = arith.divf %291, %292 : vector<8x128xf32>
    %294 = arith.mulf %285, %237 : vector<8x128xf32>
    %295 = arith.mulf %284, %287 : vector<8x128xf32>
    %296 = arith.addf %294, %295 : vector<8x128xf32>
    %297 = math.tanh %296 : vector<8x128xf32>
    %298 = arith.mulf %293, %297 : vector<8x128xf32>
    %299 = arith.index_cast %244 : i32 to index
    %c0_87 = arith.constant 0 : index
    %300 = vector.load %arg11[%299, %c0_87] : memref<64x256xf32, #tpu.memory_space<vmem>>, vector<8x128xf32>
    tpu.vector_store %arg11[%299, %c0_87], %277 {strides = array<i32>} : memref<64x256xf32, #tpu.memory_space<vmem>>, vector<8x128xf32>,
    %301 = arith.index_cast %246 : i32 to index
    %c128_88 = arith.constant 128 : index
    %302 = vector.load %arg11[%301, %c128_88] : memref<64x256xf32, #tpu.memory_space<vmem>>, vector<8x128xf32>
    tpu.vector_store %arg11[%301, %c128_88], %298 {strides = array<i32>} : memref<64x256xf32, #tpu.memory_space<vmem>>, vector<8x128xf32>,
    %c5_i32 = arith.constant 5 : i32
    %c8_i32_89 = arith.constant 8 : i32
    %303 = arith.muli %c5_i32, %c8_i32_89 : i32
    %c7_i32_90 = arith.constant 7 : i32
    %304 = arith.subi %c7_i32_90, %c5_i32 : i32
    %c8_i32_91 = arith.constant 8 : i32
    %305 = arith.muli %304, %c8_i32_91 : i32
    %c0_92 = arith.constant 0 : index
    %c0_93 = arith.constant 0 : index
    %306 = vector.load %arg3[%c0_92, %c0_93] : memref<128x512xf32, #tpu.memory_space<vmem>>, vector<128x512xf32>
    %cst_94 = arith.constant dense<0.000000e+00> : vector<8x512xf32>
    %307 = tpu.matmul %277, %306, %cst_94 {dimension_numbers = #tpu.dot_dimension_numbers<[1], [0], [0], [1], [0, 0, 1, 1], [], []>} : vector<8x128xf32>, vector<128x512xf32>, vector<8x512xf32> -> vector<8x512xf32>
    %308 = arith.index_cast %303 : i32 to index
    %c0_95 = arith.constant 0 : index
    %309 = vector.load %arg14[%308, %c0_95] : memref<64x1024xf32, #tpu.memory_space<vmem>>, vector<8x512xf32>
    %310 = arith.addf %307, %309 : vector<8x512xf32>
    %c0_96 = arith.constant 0 : index
    %c0_97 = arith.constant 0 : index
    %311 = vector.load %arg4[%c0_96, %c0_97] : memref<128x512xf32, #tpu.memory_space<vmem>>, vector<128x512xf32>
    %cst_98 = arith.constant dense<0.000000e+00> : vector<8x512xf32>
    %312 = tpu.matmul %298, %311, %cst_98 {dimension_numbers = #tpu.dot_dimension_numbers<[1], [0], [0], [1], [0, 0, 1, 1], [], []>} : vector<8x128xf32>, vector<128x512xf32>, vector<8x512xf32> -> vector<8x512xf32>
    %313 = arith.index_cast %305 : i32 to index
    %c512_99 = arith.constant 512 : index
    %314 = vector.load %arg14[%313, %c512_99] : memref<64x1024xf32, #tpu.memory_space<vmem>>, vector<8x512xf32>
    %315 = arith.addf %312, %314 : vector<8x512xf32>
    %316 = vector.extract_strided_slice %310 {offsets = [0, 0], sizes = [8, 256], strides = [1, 1]} : vector<8x512xf32> to vector<8x256xf32>
    %317 = arith.negf %316 : vector<8x256xf32>
    %318 = math.exp %317 : vector<8x256xf32>
    %cst_100 = arith.constant 1.000000e+00 : f32
    %319 = vector.broadcast %cst_100 : f32 to vector<8x256xf32>
    %320 = arith.addf %319, %318 : vector<8x256xf32>
    %321 = arith.divf %319, %320 : vector<8x256xf32>
    %322 = vector.extract_strided_slice %321 {offsets = [0, 0], sizes = [8, 128], strides = [1, 1]} : vector<8x256xf32> to vector<8x128xf32>
    %323 = vector.extract_strided_slice %321 {offsets = [0, 128], sizes = [8, 128], strides = [1, 1]} : vector<8x256xf32> to vector<8x128xf32>
    %324 = vector.extract_strided_slice %310 {offsets = [0, 256], sizes = [8, 128], strides = [1, 1]} : vector<8x512xf32> to vector<8x128xf32>
    %325 = math.tanh %324 : vector<8x128xf32>
    %326 = vector.extract_strided_slice %310 {offsets = [0, 384], sizes = [8, 128], strides = [1, 1]} : vector<8x512xf32> to vector<8x128xf32>
    %327 = arith.negf %326 : vector<8x128xf32>
    %328 = math.exp %327 : vector<8x128xf32>
    %cst_101 = arith.constant 1.000000e+00 : f32
    %329 = vector.broadcast %cst_101 : f32 to vector<8x128xf32>
    %330 = arith.addf %329, %328 : vector<8x128xf32>
    %331 = arith.divf %329, %330 : vector<8x128xf32>
    %332 = arith.mulf %323, %275 : vector<8x128xf32>
    %333 = arith.mulf %322, %325 : vector<8x128xf32>
    %334 = arith.addf %332, %333 : vector<8x128xf32>
    %335 = math.tanh %334 : vector<8x128xf32>
    %336 = arith.mulf %331, %335 : vector<8x128xf32>
    %337 = vector.extract_strided_slice %315 {offsets = [0, 0], sizes = [8, 256], strides = [1, 1]} : vector<8x512xf32> to vector<8x256xf32>
    %338 = arith.negf %337 : vector<8x256xf32>
    %339 = math.exp %338 : vector<8x256xf32>
    %cst_102 = arith.constant 1.000000e+00 : f32
    %340 = vector.broadcast %cst_102 : f32 to vector<8x256xf32>
    %341 = arith.addf %340, %339 : vector<8x256xf32>
    %342 = arith.divf %340, %341 : vector<8x256xf32>
    %343 = vector.extract_strided_slice %342 {offsets = [0, 0], sizes = [8, 128], strides = [1, 1]} : vector<8x256xf32> to vector<8x128xf32>
    %344 = vector.extract_strided_slice %342 {offsets = [0, 128], sizes = [8, 128], strides = [1, 1]} : vector<8x256xf32> to vector<8x128xf32>
    %345 = vector.extract_strided_slice %315 {offsets = [0, 256], sizes = [8, 128], strides = [1, 1]} : vector<8x512xf32> to vector<8x128xf32>
    %346 = math.tanh %345 : vector<8x128xf32>
    %347 = vector.extract_strided_slice %315 {offsets = [0, 384], sizes = [8, 128], strides = [1, 1]} : vector<8x512xf32> to vector<8x128xf32>
    %348 = arith.negf %347 : vector<8x128xf32>
    %349 = math.exp %348 : vector<8x128xf32>
    %cst_103 = arith.constant 1.000000e+00 : f32
    %350 = vector.broadcast %cst_103 : f32 to vector<8x128xf32>
    %351 = arith.addf %350, %349 : vector<8x128xf32>
    %352 = arith.divf %350, %351 : vector<8x128xf32>
    %353 = arith.mulf %344, %296 : vector<8x128xf32>
    %354 = arith.mulf %343, %346 : vector<8x128xf32>
    %355 = arith.addf %353, %354 : vector<8x128xf32>
    %356 = math.tanh %355 : vector<8x128xf32>
    %357 = arith.mulf %352, %356 : vector<8x128xf32>
    %358 = arith.index_cast %303 : i32 to index
    %c0_104 = arith.constant 0 : index
    %359 = vector.load %arg11[%358, %c0_104] : memref<64x256xf32, #tpu.memory_space<vmem>>, vector<8x128xf32>
    tpu.vector_store %arg11[%358, %c0_104], %336 {strides = array<i32>} : memref<64x256xf32, #tpu.memory_space<vmem>>, vector<8x128xf32>,
    %360 = arith.index_cast %305 : i32 to index
    %c128_105 = arith.constant 128 : index
    %361 = vector.load %arg11[%360, %c128_105] : memref<64x256xf32, #tpu.memory_space<vmem>>, vector<8x128xf32>
    tpu.vector_store %arg11[%360, %c128_105], %357 {strides = array<i32>} : memref<64x256xf32, #tpu.memory_space<vmem>>, vector<8x128xf32>,
    %c6_i32 = arith.constant 6 : i32
    %c8_i32_106 = arith.constant 8 : i32
    %362 = arith.muli %c6_i32, %c8_i32_106 : i32
    %c7_i32_107 = arith.constant 7 : i32
    %363 = arith.subi %c7_i32_107, %c6_i32 : i32
    %c8_i32_108 = arith.constant 8 : i32
    %364 = arith.muli %363, %c8_i32_108 : i32
    %c0_109 = arith.constant 0 : index
    %c0_110 = arith.constant 0 : index
    %365 = vector.load %arg3[%c0_109, %c0_110] : memref<128x512xf32, #tpu.memory_space<vmem>>, vector<128x512xf32>
    %cst_111 = arith.constant dense<0.000000e+00> : vector<8x512xf32>
    %366 = tpu.matmul %336, %365, %cst_111 {dimension_numbers = #tpu.dot_dimension_numbers<[1], [0], [0], [1], [0, 0, 1, 1], [], []>} : vector<8x128xf32>, vector<128x512xf32>, vector<8x512xf32> -> vector<8x512xf32>
    %367 = arith.index_cast %362 : i32 to index
    %c0_112 = arith.constant 0 : index
    %368 = vector.load %arg14[%367, %c0_112] : memref<64x1024xf32, #tpu.memory_space<vmem>>, vector<8x512xf32>
    %369 = arith.addf %366, %368 : vector<8x512xf32>
    %c0_113 = arith.constant 0 : index
    %c0_114 = arith.constant 0 : index
    %370 = vector.load %arg4[%c0_113, %c0_114] : memref<128x512xf32, #tpu.memory_space<vmem>>, vector<128x512xf32>
    %cst_115 = arith.constant dense<0.000000e+00> : vector<8x512xf32>
    %371 = tpu.matmul %357, %370, %cst_115 {dimension_numbers = #tpu.dot_dimension_numbers<[1], [0], [0], [1], [0, 0, 1, 1], [], []>} : vector<8x128xf32>, vector<128x512xf32>, vector<8x512xf32> -> vector<8x512xf32>
    %372 = arith.index_cast %364 : i32 to index
    %c512_116 = arith.constant 512 : index
    %373 = vector.load %arg14[%372, %c512_116] : memref<64x1024xf32, #tpu.memory_space<vmem>>, vector<8x512xf32>
    %374 = arith.addf %371, %373 : vector<8x512xf32>
    %375 = vector.extract_strided_slice %369 {offsets = [0, 0], sizes = [8, 256], strides = [1, 1]} : vector<8x512xf32> to vector<8x256xf32>
    %376 = arith.negf %375 : vector<8x256xf32>
    %377 = math.exp %376 : vector<8x256xf32>
    %cst_117 = arith.constant 1.000000e+00 : f32
    %378 = vector.broadcast %cst_117 : f32 to vector<8x256xf32>
    %379 = arith.addf %378, %377 : vector<8x256xf32>
    %380 = arith.divf %378, %379 : vector<8x256xf32>
    %381 = vector.extract_strided_slice %380 {offsets = [0, 0], sizes = [8, 128], strides = [1, 1]} : vector<8x256xf32> to vector<8x128xf32>
    %382 = vector.extract_strided_slice %380 {offsets = [0, 128], sizes = [8, 128], strides = [1, 1]} : vector<8x256xf32> to vector<8x128xf32>
    %383 = vector.extract_strided_slice %369 {offsets = [0, 256], sizes = [8, 128], strides = [1, 1]} : vector<8x512xf32> to vector<8x128xf32>
    %384 = math.tanh %383 : vector<8x128xf32>
    %385 = vector.extract_strided_slice %369 {offsets = [0, 384], sizes = [8, 128], strides = [1, 1]} : vector<8x512xf32> to vector<8x128xf32>
    %386 = arith.negf %385 : vector<8x128xf32>
    %387 = math.exp %386 : vector<8x128xf32>
    %cst_118 = arith.constant 1.000000e+00 : f32
    %388 = vector.broadcast %cst_118 : f32 to vector<8x128xf32>
    %389 = arith.addf %388, %387 : vector<8x128xf32>
    %390 = arith.divf %388, %389 : vector<8x128xf32>
    %391 = arith.mulf %382, %334 : vector<8x128xf32>
    %392 = arith.mulf %381, %384 : vector<8x128xf32>
    %393 = arith.addf %391, %392 : vector<8x128xf32>
    %394 = math.tanh %393 : vector<8x128xf32>
    %395 = arith.mulf %390, %394 : vector<8x128xf32>
    %396 = vector.extract_strided_slice %374 {offsets = [0, 0], sizes = [8, 256], strides = [1, 1]} : vector<8x512xf32> to vector<8x256xf32>
    %397 = arith.negf %396 : vector<8x256xf32>
    %398 = math.exp %397 : vector<8x256xf32>
    %cst_119 = arith.constant 1.000000e+00 : f32
    %399 = vector.broadcast %cst_119 : f32 to vector<8x256xf32>
    %400 = arith.addf %399, %398 : vector<8x256xf32>
    %401 = arith.divf %399, %400 : vector<8x256xf32>
    %402 = vector.extract_strided_slice %401 {offsets = [0, 0], sizes = [8, 128], strides = [1, 1]} : vector<8x256xf32> to vector<8x128xf32>
    %403 = vector.extract_strided_slice %401 {offsets = [0, 128], sizes = [8, 128], strides = [1, 1]} : vector<8x256xf32> to vector<8x128xf32>
    %404 = vector.extract_strided_slice %374 {offsets = [0, 256], sizes = [8, 128], strides = [1, 1]} : vector<8x512xf32> to vector<8x128xf32>
    %405 = math.tanh %404 : vector<8x128xf32>
    %406 = vector.extract_strided_slice %374 {offsets = [0, 384], sizes = [8, 128], strides = [1, 1]} : vector<8x512xf32> to vector<8x128xf32>
    %407 = arith.negf %406 : vector<8x128xf32>
    %408 = math.exp %407 : vector<8x128xf32>
    %cst_120 = arith.constant 1.000000e+00 : f32
    %409 = vector.broadcast %cst_120 : f32 to vector<8x128xf32>
    %410 = arith.addf %409, %408 : vector<8x128xf32>
    %411 = arith.divf %409, %410 : vector<8x128xf32>
    %412 = arith.mulf %403, %355 : vector<8x128xf32>
    %413 = arith.mulf %402, %405 : vector<8x128xf32>
    %414 = arith.addf %412, %413 : vector<8x128xf32>
    %415 = math.tanh %414 : vector<8x128xf32>
    %416 = arith.mulf %411, %415 : vector<8x128xf32>
    %417 = arith.index_cast %362 : i32 to index
    %c0_121 = arith.constant 0 : index
    %418 = vector.load %arg11[%417, %c0_121] : memref<64x256xf32, #tpu.memory_space<vmem>>, vector<8x128xf32>
    tpu.vector_store %arg11[%417, %c0_121], %395 {strides = array<i32>} : memref<64x256xf32, #tpu.memory_space<vmem>>, vector<8x128xf32>,
    %419 = arith.index_cast %364 : i32 to index
    %c128_122 = arith.constant 128 : index
    %420 = vector.load %arg11[%419, %c128_122] : memref<64x256xf32, #tpu.memory_space<vmem>>, vector<8x128xf32>
    tpu.vector_store %arg11[%419, %c128_122], %416 {strides = array<i32>} : memref<64x256xf32, #tpu.memory_space<vmem>>, vector<8x128xf32>,
    %c7_i32_123 = arith.constant 7 : i32
    %c8_i32_124 = arith.constant 8 : i32
    %421 = arith.muli %c7_i32_123, %c8_i32_124 : i32
    %c7_i32_125 = arith.constant 7 : i32
    %422 = arith.subi %c7_i32_125, %c7_i32_123 : i32
    %c8_i32_126 = arith.constant 8 : i32
    %423 = arith.muli %422, %c8_i32_126 : i32
    %c0_127 = arith.constant 0 : index
    %c0_128 = arith.constant 0 : index
    %424 = vector.load %arg3[%c0_127, %c0_128] : memref<128x512xf32, #tpu.memory_space<vmem>>, vector<128x512xf32>
    %cst_129 = arith.constant dense<0.000000e+00> : vector<8x512xf32>
    %425 = tpu.matmul %395, %424, %cst_129 {dimension_numbers = #tpu.dot_dimension_numbers<[1], [0], [0], [1], [0, 0, 1, 1], [], []>} : vector<8x128xf32>, vector<128x512xf32>, vector<8x512xf32> -> vector<8x512xf32>
    %426 = arith.index_cast %421 : i32 to index
    %c0_130 = arith.constant 0 : index
    %427 = vector.load %arg14[%426, %c0_130] : memref<64x1024xf32, #tpu.memory_space<vmem>>, vector<8x512xf32>
    %428 = arith.addf %425, %427 : vector<8x512xf32>
    %c0_131 = arith.constant 0 : index
    %c0_132 = arith.constant 0 : index
    %429 = vector.load %arg4[%c0_131, %c0_132] : memref<128x512xf32, #tpu.memory_space<vmem>>, vector<128x512xf32>
    %cst_133 = arith.constant dense<0.000000e+00> : vector<8x512xf32>
    %430 = tpu.matmul %416, %429, %cst_133 {dimension_numbers = #tpu.dot_dimension_numbers<[1], [0], [0], [1], [0, 0, 1, 1], [], []>} : vector<8x128xf32>, vector<128x512xf32>, vector<8x512xf32> -> vector<8x512xf32>
    %431 = arith.index_cast %423 : i32 to index
    %c512_134 = arith.constant 512 : index
    %432 = vector.load %arg14[%431, %c512_134] : memref<64x1024xf32, #tpu.memory_space<vmem>>, vector<8x512xf32>
    %433 = arith.addf %430, %432 : vector<8x512xf32>
    %434 = vector.extract_strided_slice %428 {offsets = [0, 0], sizes = [8, 256], strides = [1, 1]} : vector<8x512xf32> to vector<8x256xf32>
    %435 = arith.negf %434 : vector<8x256xf32>
    %436 = math.exp %435 : vector<8x256xf32>
    %cst_135 = arith.constant 1.000000e+00 : f32
    %437 = vector.broadcast %cst_135 : f32 to vector<8x256xf32>
    %438 = arith.addf %437, %436 : vector<8x256xf32>
    %439 = arith.divf %437, %438 : vector<8x256xf32>
    %440 = vector.extract_strided_slice %439 {offsets = [0, 0], sizes = [8, 128], strides = [1, 1]} : vector<8x256xf32> to vector<8x128xf32>
    %441 = vector.extract_strided_slice %439 {offsets = [0, 128], sizes = [8, 128], strides = [1, 1]} : vector<8x256xf32> to vector<8x128xf32>
    %442 = vector.extract_strided_slice %428 {offsets = [0, 256], sizes = [8, 128], strides = [1, 1]} : vector<8x512xf32> to vector<8x128xf32>
    %443 = math.tanh %442 : vector<8x128xf32>
    %444 = vector.extract_strided_slice %428 {offsets = [0, 384], sizes = [8, 128], strides = [1, 1]} : vector<8x512xf32> to vector<8x128xf32>
    %445 = arith.negf %444 : vector<8x128xf32>
    %446 = math.exp %445 : vector<8x128xf32>
    %cst_136 = arith.constant 1.000000e+00 : f32
    %447 = vector.broadcast %cst_136 : f32 to vector<8x128xf32>
    %448 = arith.addf %447, %446 : vector<8x128xf32>
    %449 = arith.divf %447, %448 : vector<8x128xf32>
    %450 = arith.mulf %441, %393 : vector<8x128xf32>
    %451 = arith.mulf %440, %443 : vector<8x128xf32>
    %452 = arith.addf %450, %451 : vector<8x128xf32>
    %453 = math.tanh %452 : vector<8x128xf32>
    %454 = arith.mulf %449, %453 : vector<8x128xf32>
    %455 = vector.extract_strided_slice %433 {offsets = [0, 0], sizes = [8, 256], strides = [1, 1]} : vector<8x512xf32> to vector<8x256xf32>
    %456 = arith.negf %455 : vector<8x256xf32>
    %457 = math.exp %456 : vector<8x256xf32>
    %cst_137 = arith.constant 1.000000e+00 : f32
    %458 = vector.broadcast %cst_137 : f32 to vector<8x256xf32>
    %459 = arith.addf %458, %457 : vector<8x256xf32>
    %460 = arith.divf %458, %459 : vector<8x256xf32>
    %461 = vector.extract_strided_slice %460 {offsets = [0, 0], sizes = [8, 128], strides = [1, 1]} : vector<8x256xf32> to vector<8x128xf32>
    %462 = vector.extract_strided_slice %460 {offsets = [0, 128], sizes = [8, 128], strides = [1, 1]} : vector<8x256xf32> to vector<8x128xf32>
    %463 = vector.extract_strided_slice %433 {offsets = [0, 256], sizes = [8, 128], strides = [1, 1]} : vector<8x512xf32> to vector<8x128xf32>
    %464 = math.tanh %463 : vector<8x128xf32>
    %465 = vector.extract_strided_slice %433 {offsets = [0, 384], sizes = [8, 128], strides = [1, 1]} : vector<8x512xf32> to vector<8x128xf32>
    %466 = arith.negf %465 : vector<8x128xf32>
    %467 = math.exp %466 : vector<8x128xf32>
    %cst_138 = arith.constant 1.000000e+00 : f32
    %468 = vector.broadcast %cst_138 : f32 to vector<8x128xf32>
    %469 = arith.addf %468, %467 : vector<8x128xf32>
    %470 = arith.divf %468, %469 : vector<8x128xf32>
    %471 = arith.mulf %462, %414 : vector<8x128xf32>
    %472 = arith.mulf %461, %464 : vector<8x128xf32>
    %473 = arith.addf %471, %472 : vector<8x128xf32>
    %474 = math.tanh %473 : vector<8x128xf32>
    %475 = arith.mulf %470, %474 : vector<8x128xf32>
    %476 = arith.index_cast %421 : i32 to index
    %c0_139 = arith.constant 0 : index
    %477 = vector.load %arg11[%476, %c0_139] : memref<64x256xf32, #tpu.memory_space<vmem>>, vector<8x128xf32>
    tpu.vector_store %arg11[%476, %c0_139], %454 {strides = array<i32>} : memref<64x256xf32, #tpu.memory_space<vmem>>, vector<8x128xf32>,
    %478 = arith.index_cast %423 : i32 to index
    %c128_140 = arith.constant 128 : index
    %479 = vector.load %arg11[%478, %c128_140] : memref<64x256xf32, #tpu.memory_space<vmem>>, vector<8x128xf32>
    tpu.vector_store %arg11[%478, %c128_140], %475 {strides = array<i32>} : memref<64x256xf32, #tpu.memory_space<vmem>>, vector<8x128xf32>,
    %c8_i32_141 = arith.constant 8 : i32
    %c0_142 = arith.constant 0 : index
    %c0_143 = arith.constant 0 : index
    %480 = vector.load %arg5[%c0_142, %c0_143] : memref<128x128xf32, #tpu.memory_space<vmem>>, vector<128x128xf32>
    %cst_144 = arith.constant dense<0.000000e+00> : vector<8x128xf32>
    %481 = tpu.matmul %454, %480, %cst_144 {dimension_numbers = #tpu.dot_dimension_numbers<[1], [0], [0], [1], [0, 0, 1, 1], [], []>} : vector<8x128xf32>, vector<128x128xf32>, vector<8x128xf32> -> vector<8x128xf32>
    %c0_145 = arith.constant 0 : index
    %c0_146 = arith.constant 0 : index
    %482 = vector.load %arg6[%c0_145, %c0_146] : memref<128x128xf32, #tpu.memory_space<vmem>>, vector<128x128xf32>
    %cst_147 = arith.constant dense<0.000000e+00> : vector<8x128xf32>
    %483 = tpu.matmul %475, %482, %cst_147 {dimension_numbers = #tpu.dot_dimension_numbers<[1], [0], [0], [1], [0, 0, 1, 1], [], []>} : vector<8x128xf32>, vector<128x128xf32>, vector<8x128xf32> -> vector<8x128xf32>
    %484 = arith.addf %481, %483 : vector<8x128xf32>
    %c0_148 = arith.constant 0 : index
    %c0_149 = arith.constant 0 : index
    %485 = vector.load %arg7[%c0_148, %c0_149] : memref<1x128xf32, #tpu.memory_space<vmem>>, vector<1x128xf32>
    %486 = vector.broadcast %485 : vector<1x128xf32> to vector<8x128xf32>
    %487 = arith.addf %484, %486 : vector<8x128xf32>
    %c0_150 = arith.constant 0 : index
    %c0_151 = arith.constant 0 : index
    %488 = vector.load %arg8[%c0_150, %c0_151] : memref<128x128xf32, #tpu.memory_space<vmem>>, vector<128x128xf32>
    %cst_152 = arith.constant dense<0.000000e+00> : vector<8x128xf32>
    %489 = tpu.matmul %452, %488, %cst_152 {dimension_numbers = #tpu.dot_dimension_numbers<[1], [0], [0], [1], [0, 0, 1, 1], [], []>} : vector<8x128xf32>, vector<128x128xf32>, vector<8x128xf32> -> vector<8x128xf32>
    %c0_153 = arith.constant 0 : index
    %c0_154 = arith.constant 0 : index
    %490 = vector.load %arg9[%c0_153, %c0_154] : memref<128x128xf32, #tpu.memory_space<vmem>>, vector<128x128xf32>
    %cst_155 = arith.constant dense<0.000000e+00> : vector<8x128xf32>
    %491 = tpu.matmul %473, %490, %cst_155 {dimension_numbers = #tpu.dot_dimension_numbers<[1], [0], [0], [1], [0, 0, 1, 1], [], []>} : vector<8x128xf32>, vector<128x128xf32>, vector<8x128xf32> -> vector<8x128xf32>
    %492 = arith.addf %489, %491 : vector<8x128xf32>
    %c0_156 = arith.constant 0 : index
    %c0_157 = arith.constant 0 : index
    %493 = vector.load %arg10[%c0_156, %c0_157] : memref<1x128xf32, #tpu.memory_space<vmem>>, vector<1x128xf32>
    %494 = vector.broadcast %493 : vector<1x128xf32> to vector<8x128xf32>
    %495 = arith.addf %492, %494 : vector<8x128xf32>
    %cst_158 = arith.constant 0.000000e+00 : f32
    %496 = vector.broadcast %cst_158 : f32 to vector<8x128xf32>
    %497 = arith.maximumf %487, %496 : vector<8x128xf32>
    %c0_159 = arith.constant 0 : index
    %c0_160 = arith.constant 0 : index
    %498 = vector.load %arg12[%c0_159, %c0_160] : memref<8x128xf32, #tpu.memory_space<vmem>>, vector<8x128xf32>
    tpu.vector_store %arg12[%c0_159, %c0_160], %497 {strides = array<i32>} : memref<8x128xf32, #tpu.memory_space<vmem>>, vector<8x128xf32>,
    %cst_161 = arith.constant 0.000000e+00 : f32
    %499 = vector.broadcast %cst_161 : f32 to vector<8x128xf32>
    %500 = arith.maximumf %495, %499 : vector<8x128xf32>
    %c0_162 = arith.constant 0 : index
    %c0_163 = arith.constant 0 : index
    %501 = vector.load %arg13[%c0_162, %c0_163] : memref<8x128xf32, #tpu.memory_space<vmem>>, vector<8x128xf32>
    tpu.vector_store %arg13[%c0_162, %c0_163], %500 {strides = array<i32>} : memref<8x128xf32, #tpu.memory_space<vmem>>, vector<8x128xf32>,
    return
  }
}

</mosaic_0001>

<llo_original>
// kernel: tpu_custom_call.1
$region0: #{tpu_custom_call.1}
  #allocation0 [shape = 'u32[]', space=smem, size = 0x4, offset = 0x4, fixed_abs, tag = 'smem constant byte address 0x4 - core index']
  #allocation1 [shape = 'u32[72,128]{1,0:T(1,128)}', space=vmem, size = 0x9000, scoped, tag = 'internal scratch']
  #allocation2 [shape = 'f32[64,1024]{1,0:T(8,128)}', space=vmem, size = 0x40000, scoped, tag = 'scratch operand']
  %s0 = inlined_call_operand.vmem [shape: f32[64,16], index: 0, kind: input, shape index: {}]
  %s1 = inlined_call_operand.hbm [shape: f32[16,1024], index: 1, kind: input, shape index: {}]
  %s2 = inlined_call_operand.vmem [shape: f32[1,1024], index: 2, kind: input, shape index: {}]
  %s3 = inlined_call_operand.hbm [shape: f32[128,512], index: 3, kind: input, shape index: {}]
  %s4 = inlined_call_operand.hbm [shape: f32[128,512], index: 4, kind: input, shape index: {}]
  %s5 = inlined_call_operand.hbm [shape: f32[128,128], index: 5, kind: input, shape index: {}]
  %s6 = inlined_call_operand.hbm [shape: f32[128,128], index: 6, kind: input, shape index: {}]
  %s7 = inlined_call_operand.vmem [shape: f32[1,128], index: 7, kind: input, shape index: {}]
  %s8 = inlined_call_operand.hbm [shape: f32[128,128], index: 8, kind: input, shape index: {}]
  %s9 = inlined_call_operand.hbm [shape: f32[128,128], index: 9, kind: input, shape index: {}]
  %s10 = inlined_call_operand.vmem [shape: f32[1,128], index: 10, kind: input, shape index: {}]
  %s11 = inlined_call_operand.hbm [shape: f32[64,256], index: 11, kind: output, shape index: {0}]
  %s12 = inlined_call_operand.hbm [shape: f32[8,128], index: 12, kind: output, shape index: {1}]
  %s13 = inlined_call_operand.hbm [shape: f32[8,128], index: 13, kind: output, shape index: {2}]
  %14 = xla_tuple %s11, %s12, %s13
  %s15 = sld [smem:[#allocation0]]
  $region98: #{tpu_custom_call.1} parent=0
    _
  %s17 = ssub.s32 1, %s15
  %s18 = scalar_select 0, %s17, %s15
  $region1: #{tpu_custom_call.1} parent=0
    #allocation3 [shape = 'u8[65536]{0}', space=vmem, size = 0x10000, scoped, tag = 'input window, operand 1, single buffered']
    #allocation4 [shape = 's32[1]{0}', space=sflag, size = 0x4, scoped, tag = 'scoped memory for tpu_custom_call.1']
    #allocation5 [shape = 's32[1]{0}', space=sflag, size = 0x4, scoped, tag = 'scoped memory for tpu_custom_call.1']
    #allocation6 [shape = 'u8[262144]{0}', space=vmem, size = 0x40000, scoped, tag = 'input window, operand 3, single buffered']
    #allocation7 [shape = 's32[1]{0}', space=sflag, size = 0x4, scoped, tag = 'scoped memory for tpu_custom_call.1']
    #allocation8 [shape = 'u8[262144]{0}', space=vmem, size = 0x40000, scoped, tag = 'input window, operand 4, single buffered']
    #allocation9 [shape = 'u8[65536]{0}', space=vmem, size = 0x10000, scoped, tag = 'input window, operand 5, single buffered']
    #allocation10 [shape = 's32[1]{0}', space=sflag, size = 0x4, scoped, tag = 'scoped memory for tpu_custom_call.1']
    #allocation11 [shape = 'u8[65536]{0}', space=vmem, size = 0x10000, scoped, tag = 'input window, operand 6, single buffered']
    #allocation12 [shape = 'u8[65536]{0}', space=vmem, size = 0x10000, scoped, tag = 'input window, operand 8, single buffered']
    #allocation13 [shape = 's32[1]{0}', space=sflag, size = 0x4, scoped, tag = 'scoped memory for tpu_custom_call.1']
    #allocation14 [shape = 'u8[65536]{0}', space=vmem, size = 0x10000, scoped, tag = 'input window, operand 9, single buffered']
    #allocation15 [shape = 'u8[65536]{0}', space=vmem, size = 0x10000, scoped, tag = 'output window, operand 0, single buffered']
    #allocation16 [shape = 'u8[4096]{0}', space=vmem, size = 0x1000, scoped, tag = 'output window, operand 1, single buffered']
    #allocation17 [shape = 's32[1]{0}', space=sflag, size = 0x4, scoped, tag = 'scoped memory for tpu_custom_call.1']
    #allocation18 [shape = 'u8[4096]{0}', space=vmem, size = 0x1000, scoped, tag = 'output window, operand 2, single buffered']
    %19 = vsyncpa [#allocation4], 0
    %20 = vsyncpa [#allocation7], 0
    %21 = vsyncpa [#allocation10], 0
    %22 = vsyncpa [#allocation13], 0
    %23 = vsyncpa [#allocation5], 0
    %24 = vsyncpa [#allocation17], 0
    // Predicated region
    $region2: #{tpu_custom_call.1} parent=1 // pred_check
      _
    $region3: #{tpu_custom_call.1} parent=1 // pred_check_branch
      %26 = sbr.rel (0) target = $region5
    $region4: #{tpu_custom_call.1} parent=1 // pred_region
      _
    $region5: #{tpu_custom_call.1} parent=1 // pred_fallthru
      _
    // Predicated region
    $region6: #{tpu_custom_call.1} parent=1 // pred_check
      _
    $region7: #{tpu_custom_call.1} parent=1 // pred_check_branch
      %28 = sbr.rel (0) target = $region9
    $region8: #{tpu_custom_call.1} parent=1 // pred_region
      %30 = vsyncadd [#allocation4], 0
      %s31 = sshll.u32 %s1, 4
      %s32 = int_to_ptr.hbm [resolvable:$true] %s31
      %s33 = sshll.u32 [#allocation3], 4
      %s34 = int_to_ptr.vmem [resolvable:$true] %s33
      %39 = dma.hbm_to_vmem [thread:$0]  %s32, 2048, %s34, [#allocation4], 1024, 1024, 64
    $region9: #{tpu_custom_call.1} parent=1 // pred_fallthru
      _
    // Predicated region
    $region10: #{tpu_custom_call.1} parent=1 // pred_check
      _
    $region11: #{tpu_custom_call.1} parent=1 // pred_check_branch
      %41 = sbr.rel (0) target = $region13
    $region12: #{tpu_custom_call.1} parent=1 // pred_region
      _
    $region13: #{tpu_custom_call.1} parent=1 // pred_fallthru
      _
    // Predicated region
    $region14: #{tpu_custom_call.1} parent=1 // pred_check
      _
    $region15: #{tpu_custom_call.1} parent=1 // pred_check_branch
      %43 = sbr.rel (0) target = $region17
    $region16: #{tpu_custom_call.1} parent=1 // pred_region
      %45 = vsyncadd [#allocation7], 0
      %s46 = sshll.u32 %s3, 4
      %s47 = int_to_ptr.hbm [resolvable:$true] %s46
      %s48 = sshll.u32 [#allocation6], 4
      %s49 = int_to_ptr.vmem [resolvable:$true] %s48
      %54 = dma.hbm_to_vmem [thread:$0]  %s47, 8192, %s49, [#allocation7], 512, 512, 32
    $region17: #{tpu_custom_call.1} parent=1 // pred_fallthru
      _
    // Predicated region
    $region18: #{tpu_custom_call.1} parent=1 // pred_check
      _
    $region19: #{tpu_custom_call.1} parent=1 // pred_check_branch
      %56 = sbr.rel (0) target = $region21
    $region20: #{tpu_custom_call.1} parent=1 // pred_region
      %58 = vsyncadd [#allocation7], 0
      %s59 = sshll.u32 %s4, 4
      %s60 = int_to_ptr.hbm [resolvable:$true] %s59
      %s61 = sshll.u32 [#allocation8], 4
      %s62 = int_to_ptr.vmem [resolvable:$true] %s61
      %67 = dma.hbm_to_vmem [thread:$0]  %s60, 8192, %s62, [#allocation7], 512, 512, 32
    $region21: #{tpu_custom_call.1} parent=1 // pred_fallthru
      _
    // Predicated region
    $region22: #{tpu_custom_call.1} parent=1 // pred_check
      _
    $region23: #{tpu_custom_call.1} parent=1 // pred_check_branch
      %69 = sbr.rel (0) target = $region25
    $region24: #{tpu_custom_call.1} parent=1 // pred_region
      %71 = vsyncadd [#allocation10], 0
      %s72 = sshll.u32 %s5, 4
      %s73 = int_to_ptr.hbm [resolvable:$true] %s72
      %s74 = sshll.u32 [#allocation9], 4
      %s75 = int_to_ptr.vmem [resolvable:$true] %s74
      %80 = dma.hbm_to_vmem [thread:$0]  %s73, 2048, %s75, [#allocation10], 128, 128, 8
    $region25: #{tpu_custom_call.1} parent=1 // pred_fallthru
      _
    // Predicated region
    $region26: #{tpu_custom_call.1} parent=1 // pred_check
      _
    $region27: #{tpu_custom_call.1} parent=1 // pred_check_branch
      %82 = sbr.rel (0) target = $region29
    $region28: #{tpu_custom_call.1} parent=1 // pred_region
      %84 = vsyncadd [#allocation10], 0
      %s85 = sshll.u32 %s6, 4
      %s86 = int_to_ptr.hbm [resolvable:$true] %s85
      %s87 = sshll.u32 [#allocation11], 4
      %s88 = int_to_ptr.vmem [resolvable:$true] %s87
      %93 = dma.hbm_to_vmem [thread:$0]  %s86, 2048, %s88, [#allocation10], 128, 128, 8
    $region29: #{tpu_custom_call.1} parent=1 // pred_fallthru
      _
    // Predicated region
    $region30: #{tpu_custom_call.1} parent=1 // pred_check
      _
    $region31: #{tpu_custom_call.1} parent=1 // pred_check_branch
      %95 = sbr.rel (0) target = $region33
    $region32: #{tpu_custom_call.1} parent=1 // pred_region
      _
    $region33: #{tpu_custom_call.1} parent=1 // pred_fallthru
      _
    // Predicated region
    $region34: #{tpu_custom_call.1} parent=1 // pred_check
      _
    $region35: #{tpu_custom_call.1} parent=1 // pred_check_branch
      %97 = sbr.rel (0) target = $region37
    $region36: #{tpu_custom_call.1} parent=1 // pred_region
      %99 = vsyncadd [#allocation13], 0
      %s100 = sshll.u32 %s8, 4
      %s101 = int_to_ptr.hbm [resolvable:$true] %s100
      %s102 = sshll.u32 [#allocation12], 4
      %s103 = int_to_ptr.vmem [resolvable:$true] %s102
      %108 = dma.hbm_to_vmem [thread:$0]  %s101, 2048, %s103, [#allocation13], 128, 128, 8
    $region37: #{tpu_custom_call.1} parent=1 // pred_fallthru
      _
    // Predicated region
    $region38: #{tpu_custom_call.1} parent=1 // pred_check
      _
    $region39: #{tpu_custom_call.1} parent=1 // pred_check_branch
      %110 = sbr.rel (0) target = $region41
    $region40: #{tpu_custom_call.1} parent=1 // pred_region
      %112 = vsyncadd [#allocation13], 0
      %s113 = sshll.u32 %s9, 4
      %s114 = int_to_ptr.hbm [resolvable:$true] %s113
      %s115 = sshll.u32 [#allocation14], 4
      %s116 = int_to_ptr.vmem [resolvable:$true] %s115
      %121 = dma.hbm_to_vmem [thread:$0]  %s114, 2048, %s116, [#allocation13], 128, 128, 8
    $region41: #{tpu_custom_call.1} parent=1 // pred_fallthru
      _
    // Predicated region
    $region42: #{tpu_custom_call.1} parent=1 // pred_check
      _
    $region43: #{tpu_custom_call.1} parent=1 // pred_check_branch
      %123 = sbr.rel (0) target = $region45
    $region44: #{tpu_custom_call.1} parent=1 // pred_region
      _
    $region45: #{tpu_custom_call.1} parent=1 // pred_fallthru
      _
    // Predicated region
    $region46: #{tpu_custom_call.1} parent=1 // pred_check
      _
    $region47: #{tpu_custom_call.1} parent=1 // pred_check_branch
      %125 = sbr.rel (0) target = $region49
    $region48: #{tpu_custom_call.1} parent=1 // pred_region
      %127 = dma.done [#allocation4], 2048
    $region49: #{tpu_custom_call.1} parent=1 // pred_fallthru
      _
    // Predicated region
    $region50: #{tpu_custom_call.1} parent=1 // pred_check
      _
    $region51: #{tpu_custom_call.1} parent=1 // pred_check_branch
      %129 = sbr.rel (0) target = $region53
    $region52: #{tpu_custom_call.1} parent=1 // pred_region
      %131 = dma.done [#allocation7], 8192
    $region53: #{tpu_custom_call.1} parent=1 // pred_fallthru
      _
    // Predicated region
    $region54: #{tpu_custom_call.1} parent=1 // pred_check
      _
    $region55: #{tpu_custom_call.1} parent=1 // pred_check_branch
      %133 = sbr.rel (0) target = $region57
    $region56: #{tpu_custom_call.1} parent=1 // pred_region
      %135 = dma.done [#allocation7], 8192
    $region57: #{tpu_custom_call.1} parent=1 // pred_fallthru
      _
    // Predicated region
    $region58: #{tpu_custom_call.1} parent=1 // pred_check
      _
    $region59: #{tpu_custom_call.1} parent=1 // pred_check_branch
      %137 = sbr.rel (0) target = $region61
    $region60: #{tpu_custom_call.1} parent=1 // pred_region
      %139 = dma.done [#allocation10], 2048
    $region61: #{tpu_custom_call.1} parent=1 // pred_fallthru
      _
    // Predicated region
    $region62: #{tpu_custom_call.1} parent=1 // pred_check
      _
    $region63: #{tpu_custom_call.1} parent=1 // pred_check_branch
      %141 = sbr.rel (0) target = $region65
    $region64: #{tpu_custom_call.1} parent=1 // pred_region
      %143 = dma.done [#allocation10], 2048
    $region65: #{tpu_custom_call.1} parent=1 // pred_fallthru
      _
    // Predicated region
    $region66: #{tpu_custom_call.1} parent=1 // pred_check
      _
    $region67: #{tpu_custom_call.1} parent=1 // pred_check_branch
      %145 = sbr.rel (0) target = $region69
    $region68: #{tpu_custom_call.1} parent=1 // pred_region
      %147 = dma.done [#allocation13], 2048
    $region69: #{tpu_custom_call.1} parent=1 // pred_fallthru
      _
    // Predicated region
    $region70: #{tpu_custom_call.1} parent=1 // pred_check
      _
    $region71: #{tpu_custom_call.1} parent=1 // pred_check_branch
      %149 = sbr.rel (0) target = $region73
    $region72: #{tpu_custom_call.1} parent=1 // pred_region
      %151 = dma.done [#allocation13], 2048
    $region73: #{tpu_custom_call.1} parent=1 // pred_fallthru
      _
    %v152 = vld [vmem:[%s0] sm:$0xff]
    %v153 = vld [vmem:[%s0 + $0x8] sm:$0xff]
    %v154 = vld [vmem:[%s0 + $0x10] sm:$0xff]
    %v155 = vld [vmem:[%s0 + $0x18] sm:$0xff]
    %v156 = vld [vmem:[%s0 + $0x20] sm:$0xff]
    %v157 = vld [vmem:[%s0 + $0x28] sm:$0xff]
    %v158 = vld [vmem:[%s0 + $0x30] sm:$0xff]
    %v159 = vld [vmem:[%s0 + $0x38] sm:$0xff]
    %v160 = vld [vmem:[#allocation3] sm:$0xff]
    %v161 = vld [vmem:[#allocation3 + $0x8] sm:$0xff]
    %v162 = vld [vmem:[#allocation3 + $0x10] sm:$0xff]
    %v163 = vld [vmem:[#allocation3 + $0x18] sm:$0xff]
    %v164 = vld [vmem:[#allocation3 + $0x20] sm:$0xff]
    %v165 = vld [vmem:[#allocation3 + $0x28] sm:$0xff]
    %v166 = vld [vmem:[#allocation3 + $0x30] sm:$0xff]
    %v167 = vld [vmem:[#allocation3 + $0x38] sm:$0xff]
    %v168 = vld [vmem:[#allocation3 + $0x40] sm:$0xff]
    %v169 = vld [vmem:[#allocation3 + $0x48] sm:$0xff]
    %v170 = vld [vmem:[#allocation3 + $0x50] sm:$0xff]
    %v171 = vld [vmem:[#allocation3 + $0x58] sm:$0xff]
    %v172 = vld [vmem:[#allocation3 + $0x60] sm:$0xff]
    %v173 = vld [vmem:[#allocation3 + $0x68] sm:$0xff]
    %v174 = vld [vmem:[#allocation3 + $0x70] sm:$0xff]
    %v175 = vld [vmem:[#allocation3 + $0x78] sm:$0xff]
    %v176 = vld [vmem:[%s2] sm:$0xff]
    %v178 = vperm.slane %v176, 0
    %v179 = vperm.slane %v176, 1
    %v180 = vperm.slane %v176, 2
    %v181 = vperm.slane %v176, 3
    %v182 = vperm.slane %v176, 4
    %v183 = vperm.slane %v176, 5
    %v184 = vperm.slane %v176, 6
    %v185 = vperm.slane %v176, 7
    %vm194 = vcmask 130048
    %v196 = vsel %vm194, %v152, 0
    %v199 = vsel %vm194, %v153, 0
    %v202 = vsel %vm194, %v154, 0
    %v205 = vsel %vm194, %v155, 0
    %v208 = vsel %vm194, %v156, 0
    %v211 = vsel %vm194, %v157, 0
    %v214 = vsel %vm194, %v158, 0
    %v217 = vsel %vm194, %v159, 0
    %219 = vmatpush.msra.mxu0 0.0
    %220 = vmatpush.msra.mxu0 0.0
    %221 = vmatpush.msra.mxu0 0.0
    %222 = vmatpush.msra.mxu0 0.0
    %223 = vmatpush.msra.mxu0 0.0
    %224 = vmatpush.msra.mxu0 0.0
    %225 = vmatpush.msra.mxu0 0.0
    %226 = vmatpush.msra.mxu0 0.0
    %227 = vmatpush.msra.mxu0 0.0
    %228 = vmatpush.msra.mxu0 0.0
    %229 = vmatpush.msra.mxu0 0.0
    %230 = vmatpush.msra.mxu0 0.0
    %231 = vmatpush.msra.mxu0 0.0
    %232 = vmatpush.msra.mxu0 0.0
    %233 = vmatpush.msra.mxu0 %v168
    %234 = vmatpush.msra.mxu0 %v160
    %235 = vmatmul.f32.gmra.mxu0 %v196
    %v236 = vpop.f32.mrf.mxu0
    %v237 = vadd.f32 %v178, %v236
    %238 = vmatmul.f32.gmra.mxu0 %v199
    %v239 = vpop.f32.mrf.mxu0
    %v240 = vadd.f32 %v178, %v239
    %241 = vmatmul.f32.gmra.mxu0 %v202
    %v242 = vpop.f32.mrf.mxu0
    %v243 = vadd.f32 %v178, %v242
    %244 = vmatmul.f32.gmra.mxu0 %v205
    %v245 = vpop.f32.mrf.mxu0
    %v246 = vadd.f32 %v178, %v245
    %247 = vmatmul.f32.gmra.mxu0 %v208
    %v248 = vpop.f32.mrf.mxu0
    %v249 = vadd.f32 %v178, %v248
    %250 = vmatmul.f32.gmra.mxu0 %v211
    %v251 = vpop.f32.mrf.mxu0
    %v252 = vadd.f32 %v178, %v251
    %253 = vmatmul.f32.gmra.mxu0 %v214
    %v254 = vpop.f32.mrf.mxu0
    %v255 = vadd.f32 %v178, %v254
    %256 = vmatmul.f32.gmra.mxu0 %v217
    %v257 = vpop.f32.mrf.mxu0
    %v258 = vadd.f32 %v178, %v257
    %259 = vdwg.mxu0
    %260 = vmatpush.msra.mxu0 0.0
    %261 = vmatpush.msra.mxu0 0.0
    %262 = vmatpush.msra.mxu0 0.0
    %263 = vmatpush.msra.mxu0 0.0
    %264 = vmatpush.msra.mxu0 0.0
    %265 = vmatpush.msra.mxu0 0.0
    %266 = vmatpush.msra.mxu0 0.0
    %267 = vmatpush.msra.mxu0 0.0
    %268 = vmatpush.msra.mxu0 0.0
    %269 = vmatpush.msra.mxu0 0.0
    %270 = vmatpush.msra.mxu0 0.0
    %271 = vmatpush.msra.mxu0 0.0
    %272 = vmatpush.msra.mxu0 0.0
    %273 = vmatpush.msra.mxu0 0.0
    %274 = vmatpush.msra.mxu0 %v169
    %275 = vmatpush.msra.mxu0 %v161
    %276 = vmatmul.f32.gmra.mxu0 %v196
    %v277 = vpop.f32.mrf.mxu0
    %v278 = vadd.f32 %v179, %v277
    %279 = vmatmul.f32.gmra.mxu0 %v199
    %v280 = vpop.f32.mrf.mxu0
    %v281 = vadd.f32 %v179, %v280
    %282 = vmatmul.f32.gmra.mxu0 %v202
    %v283 = vpop.f32.mrf.mxu0
    %v284 = vadd.f32 %v179, %v283
    %285 = vmatmul.f32.gmra.mxu0 %v205
    %v286 = vpop.f32.mrf.mxu0
    %v287 = vadd.f32 %v179, %v286
    %288 = vmatmul.f32.gmra.mxu0 %v208
    %v289 = vpop.f32.mrf.mxu0
    %v290 = vadd.f32 %v179, %v289
    %291 = vmatmul.f32.gmra.mxu0 %v211
    %v292 = vpop.f32.mrf.mxu0
    %v293 = vadd.f32 %v179, %v292
    %294 = vmatmul.f32.gmra.mxu0 %v214
    %v295 = vpop.f32.mrf.mxu0
    %v296 = vadd.f32 %v179, %v295
    %297 = vmatmul.f32.gmra.mxu0 %v217
    %v298 = vpop.f32.mrf.mxu0
    %v299 = vadd.f32 %v179, %v298
    %300 = vdwg.mxu0
    %301 = vmatpush.msra.mxu0 0.0
    %302 = vmatpush.msra.mxu0 0.0
    %303 = vmatpush.msra.mxu0 0.0
    %304 = vmatpush.msra.mxu0 0.0
    %305 = vmatpush.msra.mxu0 0.0
    %306 = vmatpush.msra.mxu0 0.0
    %307 = vmatpush.msra.mxu0 0.0
    %308 = vmatpush.msra.mxu0 0.0
    %309 = vmatpush.msra.mxu0 0.0
    %310 = vmatpush.msra.mxu0 0.0
    %311 = vmatpush.msra.mxu0 0.0
    %312 = vmatpush.msra.mxu0 0.0
    %313 = vmatpush.msra.mxu0 0.0
    %314 = vmatpush.msra.mxu0 0.0
    %315 = vmatpush.msra.mxu0 %v170
    %316 = vmatpush.msra.mxu0 %v162
    %317 = vmatmul.f32.gmra.mxu0 %v196
    %v318 = vpop.f32.mrf.mxu0
    %v319 = vadd.f32 %v180, %v318
    %320 = vmatmul.f32.gmra.mxu0 %v199
    %v321 = vpop.f32.mrf.mxu0
    %v322 = vadd.f32 %v180, %v321
    %323 = vmatmul.f32.gmra.mxu0 %v202
    %v324 = vpop.f32.mrf.mxu0
    %v325 = vadd.f32 %v180, %v324
    %326 = vmatmul.f32.gmra.mxu0 %v205
    %v327 = vpop.f32.mrf.mxu0
    %v328 = vadd.f32 %v180, %v327
    %329 = vmatmul.f32.gmra.mxu0 %v208
    %v330 = vpop.f32.mrf.mxu0
    %v331 = vadd.f32 %v180, %v330
    %332 = vmatmul.f32.gmra.mxu0 %v211
    %v333 = vpop.f32.mrf.mxu0
    %v334 = vadd.f32 %v180, %v333
    %335 = vmatmul.f32.gmra.mxu0 %v214
    %v336 = vpop.f32.mrf.mxu0
    %v337 = vadd.f32 %v180, %v336
    %338 = vmatmul.f32.gmra.mxu0 %v217
    %v339 = vpop.f32.mrf.mxu0
    %v340 = vadd.f32 %v180, %v339
    %341 = vdwg.mxu0
    %342 = vmatpush.msra.mxu0 0.0
    %343 = vmatpush.msra.mxu0 0.0
    %344 = vmatpush.msra.mxu0 0.0
    %345 = vmatpush.msra.mxu0 0.0
    %346 = vmatpush.msra.mxu0 0.0
    %347 = vmatpush.msra.mxu0 0.0
    %348 = vmatpush.msra.mxu0 0.0
    %349 = vmatpush.msra.mxu0 0.0
    %350 = vmatpush.msra.mxu0 0.0
    %351 = vmatpush.msra.mxu0 0.0
    %352 = vmatpush.msra.mxu0 0.0
    %353 = vmatpush.msra.mxu0 0.0
    %354 = vmatpush.msra.mxu0 0.0
    %355 = vmatpush.msra.mxu0 0.0
    %356 = vmatpush.msra.mxu0 %v171
    %357 = vmatpush.msra.mxu0 %v163
    %358 = vmatmul.f32.gmra.mxu0 %v196
    %v359 = vpop.f32.mrf.mxu0
    %v360 = vadd.f32 %v181, %v359
    %361 = vmatmul.f32.gmra.mxu0 %v199
    %v362 = vpop.f32.mrf.mxu0
    %v363 = vadd.f32 %v181, %v362
    %364 = vmatmul.f32.gmra.mxu0 %v202
    %v365 = vpop.f32.mrf.mxu0
    %v366 = vadd.f32 %v181, %v365
    %367 = vmatmul.f32.gmra.mxu0 %v205
    %v368 = vpop.f32.mrf.mxu0
    %v369 = vadd.f32 %v181, %v368
    %370 = vmatmul.f32.gmra.mxu0 %v208
    %v371 = vpop.f32.mrf.mxu0
    %v372 = vadd.f32 %v181, %v371
    %373 = vmatmul.f32.gmra.mxu0 %v211
    %v374 = vpop.f32.mrf.mxu0
    %v375 = vadd.f32 %v181, %v374
    %376 = vmatmul.f32.gmra.mxu0 %v214
    %v377 = vpop.f32.mrf.mxu0
    %v378 = vadd.f32 %v181, %v377
    %379 = vmatmul.f32.gmra.mxu0 %v217
    %v380 = vpop.f32.mrf.mxu0
    %v381 = vadd.f32 %v181, %v380
    %382 = vdwg.mxu0
    %383 = vmatpush.msra.mxu0 0.0
    %384 = vmatpush.msra.mxu0 0.0
    %385 = vmatpush.msra.mxu0 0.0
    %386 = vmatpush.msra.mxu0 0.0
    %387 = vmatpush.msra.mxu0 0.0
    %388 = vmatpush.msra.mxu0 0.0
    %389 = vmatpush.msra.mxu0 0.0
    %390 = vmatpush.msra.mxu0 0.0
    %391 = vmatpush.msra.mxu0 0.0
    %392 = vmatpush.msra.mxu0 0.0
    %393 = vmatpush.msra.mxu0 0.0
    %394 = vmatpush.msra.mxu0 0.0
    %395 = vmatpush.msra.mxu0 0.0
    %396 = vmatpush.msra.mxu0 0.0
    %397 = vmatpush.msra.mxu0 %v172
    %398 = vmatpush.msra.mxu0 %v164
    %399 = vmatmul.f32.gmra.mxu0 %v196
    %v400 = vpop.f32.mrf.mxu0
    %v401 = vadd.f32 %v182, %v400
    %402 = vmatmul.f32.gmra.mxu0 %v199
    %v403 = vpop.f32.mrf.mxu0
    %v404 = vadd.f32 %v182, %v403
    %405 = vmatmul.f32.gmra.mxu0 %v202
    %v406 = vpop.f32.mrf.mxu0
    %v407 = vadd.f32 %v182, %v406
    %408 = vmatmul.f32.gmra.mxu0 %v205
    %v409 = vpop.f32.mrf.mxu0
    %v410 = vadd.f32 %v182, %v409
    %411 = vmatmul.f32.gmra.mxu0 %v208
    %v412 = vpop.f32.mrf.mxu0
    %v413 = vadd.f32 %v182, %v412
    %414 = vmatmul.f32.gmra.mxu0 %v211
    %v415 = vpop.f32.mrf.mxu0
    %v416 = vadd.f32 %v182, %v415
    %417 = vmatmul.f32.gmra.mxu0 %v214
    %v418 = vpop.f32.mrf.mxu0
    %v419 = vadd.f32 %v182, %v418
    %420 = vmatmul.f32.gmra.mxu0 %v217
    %v421 = vpop.f32.mrf.mxu0
    %v422 = vadd.f32 %v182, %v421
    %423 = vdwg.mxu0
    %424 = vmatpush.msra.mxu0 0.0
    %425 = vmatpush.msra.mxu0 0.0
    %426 = vmatpush.msra.mxu0 0.0
    %427 = vmatpush.msra.mxu0 0.0
    %428 = vmatpush.msra.mxu0 0.0
    %429 = vmatpush.msra.mxu0 0.0
    %430 = vmatpush.msra.mxu0 0.0
    %431 = vmatpush.msra.mxu0 0.0
    %432 = vmatpush.msra.mxu0 0.0
    %433 = vmatpush.msra.mxu0 0.0
    %434 = vmatpush.msra.mxu0 0.0
    %435 = vmatpush.msra.mxu0 0.0
    %436 = vmatpush.msra.mxu0 0.0
    %437 = vmatpush.msra.mxu0 0.0
    %438 = vmatpush.msra.mxu0 %v173
    %439 = vmatpush.msra.mxu0 %v165
    %440 = vmatmul.f32.gmra.mxu0 %v196
    %v441 = vpop.f32.mrf.mxu0
    %v442 = vadd.f32 %v183, %v441
    %443 = vmatmul.f32.gmra.mxu0 %v199
    %v444 = vpop.f32.mrf.mxu0
    %v445 = vadd.f32 %v183, %v444
    %446 = vmatmul.f32.gmra.mxu0 %v202
    %v447 = vpop.f32.mrf.mxu0
    %v448 = vadd.f32 %v183, %v447
    %449 = vmatmul.f32.gmra.mxu0 %v205
    %v450 = vpop.f32.mrf.mxu0
    %v451 = vadd.f32 %v183, %v450
    %452 = vmatmul.f32.gmra.mxu0 %v208
    %v453 = vpop.f32.mrf.mxu0
    %v454 = vadd.f32 %v183, %v453
    %455 = vmatmul.f32.gmra.mxu0 %v211
    %v456 = vpop.f32.mrf.mxu0
    %v457 = vadd.f32 %v183, %v456
    %458 = vmatmul.f32.gmra.mxu0 %v214
    %v459 = vpop.f32.mrf.mxu0
    %v460 = vadd.f32 %v183, %v459
    %461 = vmatmul.f32.gmra.mxu0 %v217
    %v462 = vpop.f32.mrf.mxu0
    %v463 = vadd.f32 %v183, %v462
    %464 = vdwg.mxu0
    %465 = vmatpush.msra.mxu0 0.0
    %466 = vmatpush.msra.mxu0 0.0
    %467 = vmatpush.msra.mxu0 0.0
    %468 = vmatpush.msra.mxu0 0.0
    %469 = vmatpush.msra.mxu0 0.0
    %470 = vmatpush.msra.mxu0 0.0
    %471 = vmatpush.msra.mxu0 0.0
    %472 = vmatpush.msra.mxu0 0.0
    %473 = vmatpush.msra.mxu0 0.0
    %474 = vmatpush.msra.mxu0 0.0
    %475 = vmatpush.msra.mxu0 0.0
    %476 = vmatpush.msra.mxu0 0.0
    %477 = vmatpush.msra.mxu0 0.0
    %478 = vmatpush.msra.mxu0 0.0
    %479 = vmatpush.msra.mxu0 %v174
    %480 = vmatpush.msra.mxu0 %v166
    %481 = vmatmul.f32.gmra.mxu0 %v196
    %v482 = vpop.f32.mrf.mxu0
    %v483 = vadd.f32 %v184, %v482
    %484 = vmatmul.f32.gmra.mxu0 %v199
    %v485 = vpop.f32.mrf.mxu0
    %v486 = vadd.f32 %v184, %v485
    %487 = vmatmul.f32.gmra.mxu0 %v202
    %v488 = vpop.f32.mrf.mxu0
    %v489 = vadd.f32 %v184, %v488
    %490 = vmatmul.f32.gmra.mxu0 %v205
    %v491 = vpop.f32.mrf.mxu0
    %v492 = vadd.f32 %v184, %v491
    %493 = vmatmul.f32.gmra.mxu0 %v208
    %v494 = vpop.f32.mrf.mxu0
    %v495 = vadd.f32 %v184, %v494
    %496 = vmatmul.f32.gmra.mxu0 %v211
    %v497 = vpop.f32.mrf.mxu0
    %v498 = vadd.f32 %v184, %v497
    %499 = vmatmul.f32.gmra.mxu0 %v214
    %v500 = vpop.f32.mrf.mxu0
    %v501 = vadd.f32 %v184, %v500
    %502 = vmatmul.f32.gmra.mxu0 %v217
    %v503 = vpop.f32.mrf.mxu0
    %v504 = vadd.f32 %v184, %v503
    %505 = vdwg.mxu0
    %506 = vmatpush.msra.mxu0 0.0
    %507 = vmatpush.msra.mxu0 0.0
    %508 = vmatpush.msra.mxu0 0.0
    %509 = vmatpush.msra.mxu0 0.0
    %510 = vmatpush.msra.mxu0 0.0
    %511 = vmatpush.msra.mxu0 0.0
    %512 = vmatpush.msra.mxu0 0.0
    %513 = vmatpush.msra.mxu0 0.0
    %514 = vmatpush.msra.mxu0 0.0
    %515 = vmatpush.msra.mxu0 0.0
    %516 = vmatpush.msra.mxu0 0.0
    %517 = vmatpush.msra.mxu0 0.0
    %518 = vmatpush.msra.mxu0 0.0
    %519 = vmatpush.msra.mxu0 0.0
    %520 = vmatpush.msra.mxu0 %v175
    %521 = vmatpush.msra.mxu0 %v167
    %522 = vmatmul.f32.gmra.mxu0 %v196
    %v523 = vpop.f32.mrf.mxu0
    %v524 = vadd.f32 %v185, %v523
    %525 = vmatmul.f32.gmra.mxu0 %v199
    %v526 = vpop.f32.mrf.mxu0
    %v527 = vadd.f32 %v185, %v526
    %528 = vmatmul.f32.gmra.mxu0 %v202
    %v529 = vpop.f32.mrf.mxu0
    %v530 = vadd.f32 %v185, %v529
    %531 = vmatmul.f32.gmra.mxu0 %v205
    %v532 = vpop.f32.mrf.mxu0
    %v533 = vadd.f32 %v185, %v532
    %534 = vmatmul.f32.gmra.mxu0 %v208
    %v535 = vpop.f32.mrf.mxu0
    %v536 = vadd.f32 %v185, %v535
    %537 = vmatmul.f32.gmra.mxu0 %v211
    %v538 = vpop.f32.mrf.mxu0
    %v539 = vadd.f32 %v185, %v538
    %540 = vmatmul.f32.gmra.mxu0 %v214
    %v541 = vpop.f32.mrf.mxu0
    %v542 = vadd.f32 %v185, %v541
    %543 = vmatmul.f32.gmra.mxu0 %v217
    %v544 = vpop.f32.mrf.mxu0
    %v545 = vadd.f32 %v185, %v544
    %546 = vdwg.mxu0
    %547 = vst [vmem:[#allocation2] sm:$0xff] %v237
    %548 = vst [vmem:[#allocation2 + $0x8] sm:$0xff] %v278
    %549 = vst [vmem:[#allocation2 + $0x10] sm:$0xff] %v319
    %550 = vst [vmem:[#allocation2 + $0x18] sm:$0xff] %v360
    %551 = vst [vmem:[#allocation2 + $0x20] sm:$0xff] %v401
    %552 = vst [vmem:[#allocation2 + $0x28] sm:$0xff] %v442
    %553 = vst [vmem:[#allocation2 + $0x30] sm:$0xff] %v483
    %554 = vst [vmem:[#allocation2 + $0x38] sm:$0xff] %v524
    %555 = vst [vmem:[#allocation2 + $0x40] sm:$0xff] %v240
    %556 = vst [vmem:[#allocation2 + $0x48] sm:$0xff] %v281
    %557 = vst [vmem:[#allocation2 + $0x50] sm:$0xff] %v322
    %558 = vst [vmem:[#allocation2 + $0x58] sm:$0xff] %v363
    %559 = vst [vmem:[#allocation2 + $0x60] sm:$0xff] %v404
    %560 = vst [vmem:[#allocation2 + $0x68] sm:$0xff] %v445
    %561 = vst [vmem:[#allocation2 + $0x70] sm:$0xff] %v486
    %562 = vst [vmem:[#allocation2 + $0x78] sm:$0xff] %v527
    %563 = vst [vmem:[#allocation2 + $0x80] sm:$0xff] %v243
    %564 = vst [vmem:[#allocation2 + $0x88] sm:$0xff] %v284
    %565 = vst [vmem:[#allocation2 + $0x90] sm:$0xff] %v325
    %566 = vst [vmem:[#allocation2 + $0x98] sm:$0xff] %v366
    %567 = vst [vmem:[#allocation2 + $0xa0] sm:$0xff] %v407
    %568 = vst [vmem:[#allocation2 + $0xa8] sm:$0xff] %v448
    %569 = vst [vmem:[#allocation2 + $0xb0] sm:$0xff] %v489
    %570 = vst [vmem:[#allocation2 + $0xb8] sm:$0xff] %v530
    %571 = vst [vmem:[#allocation2 + $0xc0] sm:$0xff] %v246
    %572 = vst [vmem:[#allocation2 + $0xc8] sm:$0xff] %v287
    %573 = vst [vmem:[#allocation2 + $0xd0] sm:$0xff] %v328
    %574 = vst [vmem:[#allocation2 + $0xd8] sm:$0xff] %v369
    %575 = vst [vmem:[#allocation2 + $0xe0] sm:$0xff] %v410
    %576 = vst [vmem:[#allocation2 + $0xe8] sm:$0xff] %v451
    %577 = vst [vmem:[#allocation2 + $0xf0] sm:$0xff] %v492
    %578 = vst [vmem:[#allocation2 + $0xf8] sm:$0xff] %v533
    %579 = vst [vmem:[#allocation2 + $0x100] sm:$0xff] %v249
    %580 = vst [vmem:[#allocation2 + $0x108] sm:$0xff] %v290
    %581 = vst [vmem:[#allocation2 + $0x110] sm:$0xff] %v331
    %582 = vst [vmem:[#allocation2 + $0x118] sm:$0xff] %v372
    %583 = vst [vmem:[#allocation2 + $0x120] sm:$0xff] %v413
    %584 = vst [vmem:[#allocation2 + $0x128] sm:$0xff] %v454
    %585 = vst [vmem:[#allocation2 + $0x130] sm:$0xff] %v495
    %586 = vst [vmem:[#allocation2 + $0x138] sm:$0xff] %v536
    %587 = vst [vmem:[#allocation2 + $0x140] sm:$0xff] %v252
    %588 = vst [vmem:[#allocation2 + $0x148] sm:$0xff] %v293
    %589 = vst [vmem:[#allocation2 + $0x150] sm:$0xff] %v334
    %590 = vst [vmem:[#allocation2 + $0x158] sm:$0xff] %v375
    %591 = vst [vmem:[#allocation2 + $0x160] sm:$0xff] %v416
    %592 = vst [vmem:[#allocation2 + $0x168] sm:$0xff] %v457
    %593 = vst [vmem:[#allocation2 + $0x170] sm:$0xff] %v498
    %594 = vst [vmem:[#allocation2 + $0x178] sm:$0xff] %v539
    %595 = vst [vmem:[#allocation2 + $0x180] sm:$0xff] %v255
    %596 = vst [vmem:[#allocation2 + $0x188] sm:$0xff] %v296
    %597 = vst [vmem:[#allocation2 + $0x190] sm:$0xff] %v337
    %598 = vst [vmem:[#allocation2 + $0x198] sm:$0xff] %v378
    %599 = vst [vmem:[#allocation2 + $0x1a0] sm:$0xff] %v419
    %600 = vst [vmem:[#allocation2 + $0x1a8] sm:$0xff] %v460
    %601 = vst [vmem:[#allocation2 + $0x1b0] sm:$0xff] %v501
    %602 = vst [vmem:[#allocation2 + $0x1b8] sm:$0xff] %v542
    %603 = vst [vmem:[#allocation2 + $0x1c0] sm:$0xff] %v258
    %604 = vst [vmem:[#allocation2 + $0x1c8] sm:$0xff] %v299
    %605 = vst [vmem:[#allocation2 + $0x1d0] sm:$0xff] %v340
    %606 = vst [vmem:[#allocation2 + $0x1d8] sm:$0xff] %v381
    %607 = vst [vmem:[#allocation2 + $0x1e0] sm:$0xff] %v422
    %608 = vst [vmem:[#allocation2 + $0x1e8] sm:$0xff] %v463
    %609 = vst [vmem:[#allocation2 + $0x1f0] sm:$0xff] %v504
    %610 = vst [vmem:[#allocation2 + $0x1f8] sm:$0xff] %v545
    %v611 = vld [vmem:[#allocation6] sm:$0xff]
    %v612 = vld [vmem:[#allocation6 + $0x8] sm:$0xff]
    %v613 = vld [vmem:[#allocation6 + $0x10] sm:$0xff]
    %v614 = vld [vmem:[#allocation6 + $0x18] sm:$0xff]
    %v615 = vld [vmem:[#allocation6 + $0x20] sm:$0xff]
    %v616 = vld [vmem:[#allocation6 + $0x28] sm:$0xff]
    %v617 = vld [vmem:[#allocation6 + $0x30] sm:$0xff]
    %v618 = vld [vmem:[#allocation6 + $0x38] sm:$0xff]
    %v619 = vld [vmem:[#allocation6 + $0x40] sm:$0xff]
    %v620 = vld [vmem:[#allocation6 + $0x48] sm:$0xff]
    %v621 = vld [vmem:[#allocation6 + $0x50] sm:$0xff]
    %v622 = vld [vmem:[#allocation6 + $0x58] sm:$0xff]
    %v623 = vld [vmem:[#allocation6 + $0x60] sm:$0xff]
    %v624 = vld [vmem:[#allocation6 + $0x68] sm:$0xff]
    %v625 = vld [vmem:[#allocation6 + $0x70] sm:$0xff]
    %v626 = vld [vmem:[#allocation6 + $0x78] sm:$0xff]
    %v627 = vld [vmem:[#allocation6 + $0x80] sm:$0xff]
    %v628 = vld [vmem:[#allocation6 + $0x88] sm:$0xff]
    %v629 = vld [vmem:[#allocation6 + $0x90] sm:$0xff]
    %v630 = vld [vmem:[#allocation6 + $0x98] sm:$0xff]
    %v631 = vld [vmem:[#allocation6 + $0xa0] sm:$0xff]
    %v632 = vld [vmem:[#allocation6 + $0xa8] sm:$0xff]
    %v633 = vld [vmem:[#allocation6 + $0xb0] sm:$0xff]
    %v634 = vld [vmem:[#allocation6 + $0xb8] sm:$0xff]
    %v635 = vld [vmem:[#allocation6 + $0xc0] sm:$0xff]
    %v636 = vld [vmem:[#allocation6 + $0xc8] sm:$0xff]
    %v637 = vld [vmem:[#allocation6 + $0xd0] sm:$0xff]
    %v638 = vld [vmem:[#allocation6 + $0xd8] sm:$0xff]
    %v639 = vld [vmem:[#allocation6 + $0xe0] sm:$0xff]
    %v640 = vld [vmem:[#allocation6 + $0xe8] sm:$0xff]
    %v641 = vld [vmem:[#allocation6 + $0xf0] sm:$0xff]
    %v642 = vld [vmem:[#allocation6 + $0xf8] sm:$0xff]
    %v643 = vld [vmem:[#allocation6 + $0x100] sm:$0xff]
    %v644 = vld [vmem:[#allocation6 + $0x108] sm:$0xff]
    %v645 = vld [vmem:[#allocation6 + $0x110] sm:$0xff]
    %v646 = vld [vmem:[#allocation6 + $0x118] sm:$0xff]
    %v647 = vld [vmem:[#allocation6 + $0x120] sm:$0xff]
    %v648 = vld [vmem:[#allocation6 + $0x128] sm:$0xff]
    %v649 = vld [vmem:[#allocation6 + $0x130] sm:$0xff]
    %v650 = vld [vmem:[#allocation6 + $0x138] sm:$0xff]
    %v651 = vld [vmem:[#allocation6 + $0x140] sm:$0xff]
    %v652 = vld [vmem:[#allocation6 + $0x148] sm:$0xff]
    %v653 = vld [vmem:[#allocation6 + $0x150] sm:$0xff]
    %v654 = vld [vmem:[#allocation6 + $0x158] sm:$0xff]
    %v655 = vld [vmem:[#allocation6 + $0x160] sm:$0xff]
    %v656 = vld [vmem:[#allocation6 + $0x168] sm:$0xff]
    %v657 = vld [vmem:[#allocation6 + $0x170] sm:$0xff]
    %v658 = vld [vmem:[#allocation6 + $0x178] sm:$0xff]
    %v659 = vld [vmem:[#allocation6 + $0x180] sm:$0xff]
    %v660 = vld [vmem:[#allocation6 + $0x188] sm:$0xff]
    %v661 = vld [vmem:[#allocation6 + $0x190] sm:$0xff]
    %v662 = vld [vmem:[#allocation6 + $0x198] sm:$0xff]
    %v663 = vld [vmem:[#allocation6 + $0x1a0] sm:$0xff]
    %v664 = vld [vmem:[#allocation6 + $0x1a8] sm:$0xff]
    %v665 = vld [vmem:[#allocation6 + $0x1b0] sm:$0xff]
    %v666 = vld [vmem:[#allocation6 + $0x1b8] sm:$0xff]
    %v667 = vld [vmem:[#allocation6 + $0x1c0] sm:$0xff]
    %v668 = vld [vmem:[#allocation6 + $0x1c8] sm:$0xff]
    %v669 = vld [vmem:[#allocation6 + $0x1d0] sm:$0xff]
    %v670 = vld [vmem:[#allocation6 + $0x1d8] sm:$0xff]
    %v671 = vld [vmem:[#allocation6 + $0x1e0] sm:$0xff]
    %v672 = vld [vmem:[#allocation6 + $0x1e8] sm:$0xff]
    %v673 = vld [vmem:[#allocation6 + $0x1f0] sm:$0xff]
    %v674 = vld [vmem:[#allocation6 + $0x1f8] sm:$0xff]
    %v675 = vld [vmem:[#allocation2] sm:$0xff]
    %v676 = vld [vmem:[#allocation2 + $0x8] sm:$0xff]
    %v677 = vld [vmem:[#allocation2 + $0x10] sm:$0xff]
    %v678 = vld [vmem:[#allocation2 + $0x18] sm:$0xff]
    %679 = vmatpush.msra.mxu0 %v671
    %680 = vmatpush.msra.mxu0 %v667
    %681 = vmatpush.msra.mxu0 %v663
    %682 = vmatpush.msra.mxu0 %v659
    %683 = vmatpush.msra.mxu0 %v655
    %684 = vmatpush.msra.mxu0 %v651
    %685 = vmatpush.msra.mxu0 %v647
    %686 = vmatpush.msra.mxu0 %v643
    %687 = vmatpush.msra.mxu0 %v639
    %688 = vmatpush.msra.mxu0 %v635
    %689 = vmatpush.msra.mxu0 %v631
    %690 = vmatpush.msra.mxu0 %v627
    %691 = vmatpush.msra.mxu0 %v623
    %692 = vmatpush.msra.mxu0 %v619
    %693 = vmatpush.msra.mxu0 %v615
    %694 = vmatpush.msra.mxu0 %v611
    %695 = vmatmul.f32.gmra.mxu0 0.0
    %v696 = vpop.f32.mrf.mxu0
    %v697 = vadd.f32 %v675, %v696
    %698 = vdwg.mxu0
    %699 = vmatpush.msra.mxu0 %v672
    %700 = vmatpush.msra.mxu0 %v668
    %701 = vmatpush.msra.mxu0 %v664
    %702 = vmatpush.msra.mxu0 %v660
    %703 = vmatpush.msra.mxu0 %v656
    %704 = vmatpush.msra.mxu0 %v652
    %705 = vmatpush.msra.mxu0 %v648
    %706 = vmatpush.msra.mxu0 %v644
    %707 = vmatpush.msra.mxu0 %v640
    %708 = vmatpush.msra.mxu0 %v636
    %709 = vmatpush.msra.mxu0 %v632
    %710 = vmatpush.msra.mxu0 %v628
    %711 = vmatpush.msra.mxu0 %v624
    %712 = vmatpush.msra.mxu0 %v620
    %713 = vmatpush.msra.mxu0 %v616
    %714 = vmatpush.msra.mxu0 %v612
    %715 = vmatmul.f32.gmra.mxu0 0.0
    %v716 = vpop.f32.mrf.mxu0
    %v717 = vadd.f32 %v676, %v716
    %718 = vdwg.mxu0
    %719 = vmatpush.msra.mxu0 %v673
    %720 = vmatpush.msra.mxu0 %v669
    %721 = vmatpush.msra.mxu0 %v665
    %722 = vmatpush.msra.mxu0 %v661
    %723 = vmatpush.msra.mxu0 %v657
    %724 = vmatpush.msra.mxu0 %v653
    %725 = vmatpush.msra.mxu0 %v649
    %726 = vmatpush.msra.mxu0 %v645
    %727 = vmatpush.msra.mxu0 %v641
    %728 = vmatpush.msra.mxu0 %v637
    %729 = vmatpush.msra.mxu0 %v633
    %730 = vmatpush.msra.mxu0 %v629
    %731 = vmatpush.msra.mxu0 %v625
    %732 = vmatpush.msra.mxu0 %v621
    %733 = vmatpush.msra.mxu0 %v617
    %734 = vmatpush.msra.mxu0 %v613
    %735 = vmatmul.f32.gmra.mxu0 0.0
    %v736 = vpop.f32.mrf.mxu0
    %v737 = vadd.f32 %v677, %v736
    %738 = vdwg.mxu0
    %739 = vmatpush.msra.mxu0 %v674
    %740 = vmatpush.msra.mxu0 %v670
    %741 = vmatpush.msra.mxu0 %v666
    %742 = vmatpush.msra.mxu0 %v662
    %743 = vmatpush.msra.mxu0 %v658
    %744 = vmatpush.msra.mxu0 %v654
    %745 = vmatpush.msra.mxu0 %v650
    %746 = vmatpush.msra.mxu0 %v646
    %747 = vmatpush.msra.mxu0 %v642
    %748 = vmatpush.msra.mxu0 %v638
    %749 = vmatpush.msra.mxu0 %v634
    %750 = vmatpush.msra.mxu0 %v630
    %751 = vmatpush.msra.mxu0 %v626
    %752 = vmatpush.msra.mxu0 %v622
    %753 = vmatpush.msra.mxu0 %v618
    %754 = vmatpush.msra.mxu0 %v614
    %755 = vmatmul.f32.gmra.mxu0 0.0
    %v756 = vpop.f32.mrf.mxu0
    %v757 = vadd.f32 %v678, %v756
    %758 = vdwg.mxu0
    %v759 = vld [vmem:[#allocation8] sm:$0xff]
    %v760 = vld [vmem:[#allocation8 + $0x8] sm:$0xff]
    %v761 = vld [vmem:[#allocation8 + $0x10] sm:$0xff]
    %v762 = vld [vmem:[#allocation8 + $0x18] sm:$0xff]
    %v763 = vld [vmem:[#allocation8 + $0x20] sm:$0xff]
    %v764 = vld [vmem:[#allocation8 + $0x28] sm:$0xff]
    %v765 = vld [vmem:[#allocation8 + $0x30] sm:$0xff]
    %v766 = vld [vmem:[#allocation8 + $0x38] sm:$0xff]
    %v767 = vld [vmem:[#allocation8 + $0x40] sm:$0xff]
    %v768 = vld [vmem:[#allocation8 + $0x48] sm:$0xff]
    %v769 = vld [vmem:[#allocation8 + $0x50] sm:$0xff]
    %v770 = vld [vmem:[#allocation8 + $0x58] sm:$0xff]
    %v771 = vld [vmem:[#allocation8 + $0x60] sm:$0xff]
    %v772 = vld [vmem:[#allocation8 + $0x68] sm:$0xff]
    %v773 = vld [vmem:[#allocation8 + $0x70] sm:$0xff]
    %v774 = vld [vmem:[#allocation8 + $0x78] sm:$0xff]
    %v775 = vld [vmem:[#allocation8 + $0x80] sm:$0xff]
    %v776 = vld [vmem:[#allocation8 + $0x88] sm:$0xff]
    %v777 = vld [vmem:[#allocation8 + $0x90] sm:$0xff]
    %v778 = vld [vmem:[#allocation8 + $0x98] sm:$0xff]
    %v779 = vld [vmem:[#allocation8 + $0xa0] sm:$0xff]
    %v780 = vld [vmem:[#allocation8 + $0xa8] sm:$0xff]
    %v781 = vld [vmem:[#allocation8 + $0xb0] sm:$0xff]
    %v782 = vld [vmem:[#allocation8 + $0xb8] sm:$0xff]
    %v783 = vld [vmem:[#allocation8 + $0xc0] sm:$0xff]
    %v784 = vld [vmem:[#allocation8 + $0xc8] sm:$0xff]
    %v785 = vld [vmem:[#allocation8 + $0xd0] sm:$0xff]
    %v786 = vld [vmem:[#allocation8 + $0xd8] sm:$0xff]
    %v787 = vld [vmem:[#allocation8 + $0xe0] sm:$0xff]
    %v788 = vld [vmem:[#allocation8 + $0xe8] sm:$0xff]
    %v789 = vld [vmem:[#allocation8 + $0xf0] sm:$0xff]
    %v790 = vld [vmem:[#allocation8 + $0xf8] sm:$0xff]
    %v791 = vld [vmem:[#allocation8 + $0x100] sm:$0xff]
    %v792 = vld [vmem:[#allocation8 + $0x108] sm:$0xff]
    %v793 = vld [vmem:[#allocation8 + $0x110] sm:$0xff]
    %v794 = vld [vmem:[#allocation8 + $0x118] sm:$0xff]
    %v795 = vld [vmem:[#allocation8 + $0x120] sm:$0xff]
    %v796 = vld [vmem:[#allocation8 + $0x128] sm:$0xff]
    %v797 = vld [vmem:[#allocation8 + $0x130] sm:$0xff]
    %v798 = vld [vmem:[#allocation8 + $0x138] sm:$0xff]
    %v799 = vld [vmem:[#allocation8 + $0x140] sm:$0xff]
    %v800 = vld [vmem:[#allocation8 + $0x148] sm:$0xff]
    %v801 = vld [vmem:[#allocation8 + $0x150] sm:$0xff]
    %v802 = vld [vmem:[#allocation8 + $0x158] sm:$0xff]
    %v803 = vld [vmem:[#allocation8 + $0x160] sm:$0xff]
    %v804 = vld [vmem:[#allocation8 + $0x168] sm:$0xff]
    %v805 = vld [vmem:[#allocation8 + $0x170] sm:$0xff]
    %v806 = vld [vmem:[#allocation8 + $0x178] sm:$0xff]
    %v807 = vld [vmem:[#allocation8 + $0x180] sm:$0xff]
    %v808 = vld [vmem:[#allocation8 + $0x188] sm:$0xff]
    %v809 = vld [vmem:[#allocation8 + $0x190] sm:$0xff]
    %v810 = vld [vmem:[#allocation8 + $0x198] sm:$0xff]
    %v811 = vld [vmem:[#allocation8 + $0x1a0] sm:$0xff]
    %v812 = vld [vmem:[#allocation8 + $0x1a8] sm:$0xff]
    %v813 = vld [vmem:[#allocation8 + $0x1b0] sm:$0xff]
    %v814 = vld [vmem:[#allocation8 + $0x1b8] sm:$0xff]
    %v815 = vld [vmem:[#allocation8 + $0x1c0] sm:$0xff]
    %v816 = vld [vmem:[#allocation8 + $0x1c8] sm:$0xff]
    %v817 = vld [vmem:[#allocation8 + $0x1d0] sm:$0xff]
    %v818 = vld [vmem:[#allocation8 + $0x1d8] sm:$0xff]
    %v819 = vld [vmem:[#allocation8 + $0x1e0] sm:$0xff]
    %v820 = vld [vmem:[#allocation8 + $0x1e8] sm:$0xff]
    %v821 = vld [vmem:[#allocation8 + $0x1f0] sm:$0xff]
    %v822 = vld [vmem:[#allocation8 + $0x1f8] sm:$0xff]
    %v823 = vld [vmem:[#allocation2 + $0x1e0] sm:$0xff]
    %v824 = vld [vmem:[#allocation2 + $0x1e8] sm:$0xff]
    %v825 = vld [vmem:[#allocation2 + $0x1f0] sm:$0xff]
    %v826 = vld [vmem:[#allocation2 + $0x1f8] sm:$0xff]
    %827 = vmatpush.msra.mxu0 %v819
    %828 = vmatpush.msra.mxu0 %v815
    %829 = vmatpush.msra.mxu0 %v811
    %830 = vmatpush.msra.mxu0 %v807
    %831 = vmatpush.msra.mxu0 %v803
    %832 = vmatpush.msra.mxu0 %v799
    %833 = vmatpush.msra.mxu0 %v795
    %834 = vmatpush.msra.mxu0 %v791
    %835 = vmatpush.msra.mxu0 %v787
    %836 = vmatpush.msra.mxu0 %v783
    %837 = vmatpush.msra.mxu0 %v779
    %838 = vmatpush.msra.mxu0 %v775
    %839 = vmatpush.msra.mxu0 %v771
    %840 = vmatpush.msra.mxu0 %v767
    %841 = vmatpush.msra.mxu0 %v763
    %842 = vmatpush.msra.mxu0 %v759
    %843 = vmatmul.f32.gmra.mxu0 0.0
    %v844 = vpop.f32.mrf.mxu0
    %v845 = vadd.f32 %v823, %v844
    %846 = vdwg.mxu0
    %847 = vmatpush.msra.mxu0 %v820
    %848 = vmatpush.msra.mxu0 %v816
    %849 = vmatpush.msra.mxu0 %v812
    %850 = vmatpush.msra.mxu0 %v808
    %851 = vmatpush.msra.mxu0 %v804
    %852 = vmatpush.msra.mxu0 %v800
    %853 = vmatpush.msra.mxu0 %v796
    %854 = vmatpush.msra.mxu0 %v792
    %855 = vmatpush.msra.mxu0 %v788
    %856 = vmatpush.msra.mxu0 %v784
    %857 = vmatpush.msra.mxu0 %v780
    %858 = vmatpush.msra.mxu0 %v776
    %859 = vmatpush.msra.mxu0 %v772
    %860 = vmatpush.msra.mxu0 %v768
    %861 = vmatpush.msra.mxu0 %v764
    %862 = vmatpush.msra.mxu0 %v760
    %863 = vmatmul.f32.gmra.mxu0 0.0
    %v864 = vpop.f32.mrf.mxu0
    %v865 = vadd.f32 %v824, %v864
    %866 = vdwg.mxu0
    %867 = vmatpush.msra.mxu0 %v821
    %868 = vmatpush.msra.mxu0 %v817
    %869 = vmatpush.msra.mxu0 %v813
    %870 = vmatpush.msra.mxu0 %v809
    %871 = vmatpush.msra.mxu0 %v805
    %872 = vmatpush.msra.mxu0 %v801
    %873 = vmatpush.msra.mxu0 %v797
    %874 = vmatpush.msra.mxu0 %v793
    %875 = vmatpush.msra.mxu0 %v789
    %876 = vmatpush.msra.mxu0 %v785
    %877 = vmatpush.msra.mxu0 %v781
    %878 = vmatpush.msra.mxu0 %v777
    %879 = vmatpush.msra.mxu0 %v773
    %880 = vmatpush.msra.mxu0 %v769
    %881 = vmatpush.msra.mxu0 %v765
    %882 = vmatpush.msra.mxu0 %v761
    %883 = vmatmul.f32.gmra.mxu0 0.0
    %v884 = vpop.f32.mrf.mxu0
    %v885 = vadd.f32 %v825, %v884
    %886 = vdwg.mxu0
    %887 = vmatpush.msra.mxu0 %v822
    %888 = vmatpush.msra.mxu0 %v818
    %889 = vmatpush.msra.mxu0 %v814
    %890 = vmatpush.msra.mxu0 %v810
    %891 = vmatpush.msra.mxu0 %v806
    %892 = vmatpush.msra.mxu0 %v802
    %893 = vmatpush.msra.mxu0 %v798
    %894 = vmatpush.msra.mxu0 %v794
    %895 = vmatpush.msra.mxu0 %v790
    %896 = vmatpush.msra.mxu0 %v786
    %897 = vmatpush.msra.mxu0 %v782
    %898 = vmatpush.msra.mxu0 %v778
    %899 = vmatpush.msra.mxu0 %v774
    %900 = vmatpush.msra.mxu0 %v770
    %901 = vmatpush.msra.mxu0 %v766
    %902 = vmatpush.msra.mxu0 %v762
    %903 = vmatmul.f32.gmra.mxu0 0.0
    %v904 = vpop.f32.mrf.mxu0
    %v905 = vadd.f32 %v826, %v904
    %906 = vdwg.mxu0
    %v907 = vxor.u32 %v697, 2147483648
    %v908 = vxor.u32 %v717, 2147483648
    %v909 = vmul.f32 %v907, 1.442695
    %v910 = vpow.pop %v909
    %v911 = vmul.f32 %v908, 1.442695
    %v912 = vpow.pop %v911
    %v913 = vadd.f32 %v910, 1.0
    %v914 = vadd.f32 %v912, 1.0
    %v915 = vrcp.pop %v913
    %v916 = vmul.f32 %v913, %v915
    %v917 = vsub.f32 1.0, %v916
    %v918 = vmul.f32 %v915, %v917
    %v919 = vadd.f32 %v915, %v918
    %vm920 = vweird.f32 %v913
    %vm921 = vweird.f32 %v915
    %vm922 = vmor %vm920, %vm921
    %v923 = vsel %vm922, %v915, %v919
    %v924 = vand.u32 2147483647, %v913
    %vm925 = vcmp.eq.f32.partialorder %v924, 8.507059e+37
    %v926 = vand.u32 %v913, 2147483648
    %v927 = vor.u32 1.1754944e-38, %v926
    %v928 = vsel %vm925, %v927, %v923
    %v929 = vmul.f32 1.0, %v928
    %v930 = vrcp.pop %v914
    %v931 = vmul.f32 %v914, %v930
    %v932 = vsub.f32 1.0, %v931
    %v933 = vmul.f32 %v930, %v932
    %v934 = vadd.f32 %v930, %v933
    %vm935 = vweird.f32 %v914
    %vm936 = vweird.f32 %v930
    %vm937 = vmor %vm935, %vm936
    %v938 = vsel %vm937, %v930, %v934
    %v939 = vand.u32 2147483647, %v914
    %vm940 = vcmp.eq.f32.partialorder %v939, 8.507059e+37
    %v941 = vand.u32 %v914, 2147483648
    %v942 = vor.u32 1.1754944e-38, %v941
    %v943 = vsel %vm940, %v942, %v938
    %v944 = vmul.f32 1.0, %v943
    %v945 = vtanh.pop %v737
    %v946 = vxor.u32 %v757, 2147483648
    %v947 = vmul.f32 %v946, 1.442695
    %v948 = vpow.pop %v947
    %v949 = vadd.f32 %v948, 1.0
    %v950 = vrcp.pop %v949
    %v951 = vmul.f32 %v949, %v950
    %v952 = vsub.f32 1.0, %v951
    %v953 = vmul.f32 %v950, %v952
    %v954 = vadd.f32 %v950, %v953
    %vm955 = vweird.f32 %v949
    %vm956 = vweird.f32 %v950
    %vm957 = vmor %vm955, %vm956
    %v958 = vsel %vm957, %v950, %v954
    %v959 = vand.u32 2147483647, %v949
    %vm960 = vcmp.eq.f32.partialorder %v959, 8.507059e+37
    %v961 = vand.u32 %v949, 2147483648
    %v962 = vor.u32 1.1754944e-38, %v961
    %v963 = vsel %vm960, %v962, %v958
    %v964 = vmul.f32 1.0, %v963
    %v965 = vmul.f32 %v944, 0.0
    %v966 = vmul.f32 %v929, %v945
    %v967 = vadd.f32 %v965, %v966
    %v968 = vtanh.pop %v967
    %v969 = vmul.f32 %v964, %v968
    %v970 = vxor.u32 %v845, 2147483648
    %v971 = vxor.u32 %v865, 2147483648
    %v972 = vmul.f32 %v970, 1.442695
    %v973 = vpow.pop %v972
    %v974 = vmul.f32 %v971, 1.442695
    %v975 = vpow.pop %v974
    %v976 = vadd.f32 %v973, 1.0
    %v977 = vadd.f32 %v975, 1.0
    %v978 = vrcp.pop %v976
    %v979 = vmul.f32 %v976, %v978
    %v980 = vsub.f32 1.0, %v979
    %v981 = vmul.f32 %v978, %v980
    %v982 = vadd.f32 %v978, %v981
    %vm983 = vweird.f32 %v976
    %vm984 = vweird.f32 %v978
    %vm985 = vmor %vm983, %vm984
    %v986 = vsel %vm985, %v978, %v982
    %v987 = vand.u32 2147483647, %v976
    %vm988 = vcmp.eq.f32.partialorder %v987, 8.507059e+37
    %v989 = vand.u32 %v976, 2147483648
    %v990 = vor.u32 1.1754944e-38, %v989
    %v991 = vsel %vm988, %v990, %v986
    %v992 = vmul.f32 1.0, %v991
    %v993 = vrcp.pop %v977
    %v994 = vmul.f32 %v977, %v993
    %v995 = vsub.f32 1.0, %v994
    %v996 = vmul.f32 %v993, %v995
    %v997 = vadd.f32 %v993, %v996
    %vm998 = vweird.f32 %v977
    %vm999 = vweird.f32 %v993
    %vm1000 = vmor %vm998, %vm999
    %v1001 = vsel %vm1000, %v993, %v997
    %v1002 = vand.u32 2147483647, %v977
    %vm1003 = vcmp.eq.f32.partialorder %v1002, 8.507059e+37
    %v1004 = vand.u32 %v977, 2147483648
    %v1005 = vor.u32 1.1754944e-38, %v1004
    %v1006 = vsel %vm1003, %v1005, %v1001
    %v1007 = vmul.f32 1.0, %v1006
    %v1008 = vtanh.pop %v885
    %v1009 = vxor.u32 %v905, 2147483648
    %v1010 = vmul.f32 %v1009, 1.442695
    %v1011 = vpow.pop %v1010
    %v1012 = vadd.f32 %v1011, 1.0
    %v1013 = vrcp.pop %v1012
    %v1014 = vmul.f32 %v1012, %v1013
    %v1015 = vsub.f32 1.0, %v1014
    %v1016 = vmul.f32 %v1013, %v1015
    %v1017 = vadd.f32 %v1013, %v1016
    %vm1018 = vweird.f32 %v1012
    %vm1019 = vweird.f32 %v1013
    %vm1020 = vmor %vm1018, %vm1019
    %v1021 = vsel %vm1020, %v1013, %v1017
    %v1022 = vand.u32 2147483647, %v1012
    %vm1023 = vcmp.eq.f32.partialorder %v1022, 8.507059e+37
    %v1024 = vand.u32 %v1012, 2147483648
    %v1025 = vor.u32 1.1754944e-38, %v1024
    %v1026 = vsel %vm1023, %v1025, %v1021
    %v1027 = vmul.f32 1.0, %v1026
    %v1028 = vmul.f32 %v1007, 0.0
    %v1029 = vmul.f32 %v992, %v1008
    %v1030 = vadd.f32 %v1028, %v1029
    %v1031 = vtanh.pop %v1030
    %v1032 = vmul.f32 %v1027, %v1031
    %1033 = vst [vmem:[#allocation15] sm:$0xff] %v969
    %1034 = vst [vmem:[#allocation15 + $0x78] sm:$0xff] %v1032
    %v1035 = vld [vmem:[#allocation6] sm:$0xff]
    %v1036 = vld [vmem:[#allocation6 + $0x8] sm:$0xff]
    %v1037 = vld [vmem:[#allocation6 + $0x10] sm:$0xff]
    %v1038 = vld [vmem:[#allocation6 + $0x18] sm:$0xff]
    %v1039 = vld [vmem:[#allocation6 + $0x20] sm:$0xff]
    %v1040 = vld [vmem:[#allocation6 + $0x28] sm:$0xff]
    %v1041 = vld [vmem:[#allocation6 + $0x30] sm:$0xff]
    %v1042 = vld [vmem:[#allocation6 + $0x38] sm:$0xff]
    %v1043 = vld [vmem:[#allocation6 + $0x40] sm:$0xff]
    %v1044 = vld [vmem:[#allocation6 + $0x48] sm:$0xff]
    %v1045 = vld [vmem:[#allocation6 + $0x50] sm:$0xff]
    %v1046 = vld [vmem:[#allocation6 + $0x58] sm:$0xff]
    %v1047 = vld [vmem:[#allocation6 + $0x60] sm:$0xff]
    %v1048 = vld [vmem:[#allocation6 + $0x68] sm:$0xff]
    %v1049 = vld [vmem:[#allocation6 + $0x70] sm:$0xff]
    %v1050 = vld [vmem:[#allocation6 + $0x78] sm:$0xff]
    %v1051 = vld [vmem:[#allocation6 + $0x80] sm:$0xff]
    %v1052 = vld [vmem:[#allocation6 + $0x88] sm:$0xff]
    %v1053 = vld [vmem:[#allocation6 + $0x90] sm:$0xff]
    %v1054 = vld [vmem:[#allocation6 + $0x98] sm:$0xff]
    %v1055 = vld [vmem:[#allocation6 + $0xa0] sm:$0xff]
    %v1056 = vld [vmem:[#allocation6 + $0xa8] sm:$0xff]
    %v1057 = vld [vmem:[#allocation6 + $0xb0] sm:$0xff]
    %v1058 = vld [vmem:[#allocation6 + $0xb8] sm:$0xff]
    %v1059 = vld [vmem:[#allocation6 + $0xc0] sm:$0xff]
    %v1060 = vld [vmem:[#allocation6 + $0xc8] sm:$0xff]
    %v1061 = vld [vmem:[#allocation6 + $0xd0] sm:$0xff]
    %v1062 = vld [vmem:[#allocation6 + $0xd8] sm:$0xff]
    %v1063 = vld [vmem:[#allocation6 + $0xe0] sm:$0xff]
    %v1064 = vld [vmem:[#allocation6 + $0xe8] sm:$0xff]
    %v1065 = vld [vmem:[#allocation6 + $0xf0] sm:$0xff]
    %v1066 = vld [vmem:[#allocation6 + $0xf8] sm:$0xff]
    %v1067 = vld [vmem:[#allocation6 + $0x100] sm:$0xff]
    %v1068 = vld [vmem:[#allocation6 + $0x108] sm:$0xff]
    %v1069 = vld [vmem:[#allocation6 + $0x110] sm:$0xff]
    %v1070 = vld [vmem:[#allocation6 + $0x118] sm:$0xff]
    %v1071 = vld [vmem:[#allocation6 + $0x120] sm:$0xff]
    %v1072 = vld [vmem:[#allocation6 + $0x128] sm:$0xff]
    %v1073 = vld [vmem:[#allocation6 + $0x130] sm:$0xff]
    %v1074 = vld [vmem:[#allocation6 + $0x138] sm:$0xff]
    %v1075 = vld [vmem:[#allocation6 + $0x140] sm:$0xff]
    %v1076 = vld [vmem:[#allocation6 + $0x148] sm:$0xff]
    %v1077 = vld [vmem:[#allocation6 + $0x150] sm:$0xff]
    %v1078 = vld [vmem:[#allocation6 + $0x158] sm:$0xff]
    %v1079 = vld [vmem:[#allocation6 + $0x160] sm:$0xff]
    %v1080 = vld [vmem:[#allocation6 + $0x168] sm:$0xff]
    %v1081 = vld [vmem:[#allocation6 + $0x170] sm:$0xff]
    %v1082 = vld [vmem:[#allocation6 + $0x178] sm:$0xff]
    %v1083 = vld [vmem:[#allocation6 + $0x180] sm:$0xff]
    %v1084 = vld [vmem:[#allocation6 + $0x188] sm:$0xff]
    %v1085 = vld [vmem:[#allocation6 + $0x190] sm:$0xff]
    %v1086 = vld [vmem:[#allocation6 + $0x198] sm:$0xff]
    %v1087 = vld [vmem:[#allocation6 + $0x1a0] sm:$0xff]
    %v1088 = vld [vmem:[#allocation6 + $0x1a8] sm:$0xff]
    %v1089 = vld [vmem:[#allocation6 + $0x1b0] sm:$0xff]
    %v1090 = vld [vmem:[#allocation6 + $0x1b8] sm:$0xff]
    %v1091 = vld [vmem:[#allocation6 + $0x1c0] sm:$0xff]
    %v1092 = vld [vmem:[#allocation6 + $0x1c8] sm:$0xff]
    %v1093 = vld [vmem:[#allocation6 + $0x1d0] sm:$0xff]
    %v1094 = vld [vmem:[#allocation6 + $0x1d8] sm:$0xff]
    %v1095 = vld [vmem:[#allocation6 + $0x1e0] sm:$0xff]
    %v1096 = vld [vmem:[#allocation6 + $0x1e8] sm:$0xff]
    %v1097 = vld [vmem:[#allocation6 + $0x1f0] sm:$0xff]
    %v1098 = vld [vmem:[#allocation6 + $0x1f8] sm:$0xff]
    %v1099 = vld [vmem:[#allocation2 + $0x40] sm:$0xff]
    %v1100 = vld [vmem:[#allocation2 + $0x48] sm:$0xff]
    %v1101 = vld [vmem:[#allocation2 + $0x50] sm:$0xff]
    %v1102 = vld [vmem:[#allocation2 + $0x58] sm:$0xff]
    %1103 = vmatpush.msra.mxu0 %v1095
    %1104 = vmatpush.msra.mxu0 %v1091
    %1105 = vmatpush.msra.mxu0 %v1087
    %1106 = vmatpush.msra.mxu0 %v1083
    %1107 = vmatpush.msra.mxu0 %v1079
    %1108 = vmatpush.msra.mxu0 %v1075
    %1109 = vmatpush.msra.mxu0 %v1071
    %1110 = vmatpush.msra.mxu0 %v1067
    %1111 = vmatpush.msra.mxu0 %v1063
    %1112 = vmatpush.msra.mxu0 %v1059
    %1113 = vmatpush.msra.mxu0 %v1055
    %1114 = vmatpush.msra.mxu0 %v1051
    %1115 = vmatpush.msra.mxu0 %v1047
    %1116 = vmatpush.msra.mxu0 %v1043
    %1117 = vmatpush.msra.mxu0 %v1039
    %1118 = vmatpush.msra.mxu0 %v1035
    %1119 = vmatmul.f32.gmra.mxu0 %v969
    %v1120 = vpop.f32.mrf.mxu0
    %v1121 = vadd.f32 %v1099, %v1120
    %1122 = vdwg.mxu0
    %1123 = vmatpush.msra.mxu0 %v1096
    %1124 = vmatpush.msra.mxu0 %v1092
    %1125 = vmatpush.msra.mxu0 %v1088
    %1126 = vmatpush.msra.mxu0 %v1084
    %1127 = vmatpush.msra.mxu0 %v1080
    %1128 = vmatpush.msra.mxu0 %v1076
    %1129 = vmatpush.msra.mxu0 %v1072
    %1130 = vmatpush.msra.mxu0 %v1068
    %1131 = vmatpush.msra.mxu0 %v1064
    %1132 = vmatpush.msra.mxu0 %v1060
    %1133 = vmatpush.msra.mxu0 %v1056
    %1134 = vmatpush.msra.mxu0 %v1052
    %1135 = vmatpush.msra.mxu0 %v1048
    %1136 = vmatpush.msra.mxu0 %v1044
    %1137 = vmatpush.msra.mxu0 %v1040
    %1138 = vmatpush.msra.mxu0 %v1036
    %1139 = vmatmul.f32.gmra.mxu0 %v969
    %v1140 = vpop.f32.mrf.mxu0
    %v1141 = vadd.f32 %v1100, %v1140
    %1142 = vdwg.mxu0
    %1143 = vmatpush.msra.mxu0 %v1097
    %1144 = vmatpush.msra.mxu0 %v1093
    %1145 = vmatpush.msra.mxu0 %v1089
    %1146 = vmatpush.msra.mxu0 %v1085
    %1147 = vmatpush.msra.mxu0 %v1081
    %1148 = vmatpush.msra.mxu0 %v1077
    %1149 = vmatpush.msra.mxu0 %v1073
    %1150 = vmatpush.msra.mxu0 %v1069
    %1151 = vmatpush.msra.mxu0 %v1065
    %1152 = vmatpush.msra.mxu0 %v1061
    %1153 = vmatpush.msra.mxu0 %v1057
    %1154 = vmatpush.msra.mxu0 %v1053
    %1155 = vmatpush.msra.mxu0 %v1049
    %1156 = vmatpush.msra.mxu0 %v1045
    %1157 = vmatpush.msra.mxu0 %v1041
    %1158 = vmatpush.msra.mxu0 %v1037
    %1159 = vmatmul.f32.gmra.mxu0 %v969
    %v1160 = vpop.f32.mrf.mxu0
    %v1161 = vadd.f32 %v1101, %v1160
    %1162 = vdwg.mxu0
    %1163 = vmatpush.msra.mxu0 %v1098
    %1164 = vmatpush.msra.mxu0 %v1094
    %1165 = vmatpush.msra.mxu0 %v1090
    %1166 = vmatpush.msra.mxu0 %v1086
    %1167 = vmatpush.msra.mxu0 %v1082
    %1168 = vmatpush.msra.mxu0 %v1078
    %1169 = vmatpush.msra.mxu0 %v1074
    %1170 = vmatpush.msra.mxu0 %v1070
    %1171 = vmatpush.msra.mxu0 %v1066
    %1172 = vmatpush.msra.mxu0 %v1062
    %1173 = vmatpush.msra.mxu0 %v1058
    %1174 = vmatpush.msra.mxu0 %v1054
    %1175 = vmatpush.msra.mxu0 %v1050
    %1176 = vmatpush.msra.mxu0 %v1046
    %1177 = vmatpush.msra.mxu0 %v1042
    %1178 = vmatpush.msra.mxu0 %v1038
    %1179 = vmatmul.f32.gmra.mxu0 %v969
    %v1180 = vpop.f32.mrf.mxu0
    %v1181 = vadd.f32 %v1102, %v1180
    %1182 = vdwg.mxu0
    %v1183 = vld [vmem:[#allocation8] sm:$0xff]
    %v1184 = vld [vmem:[#allocation8 + $0x8] sm:$0xff]
    %v1185 = vld [vmem:[#allocation8 + $0x10] sm:$0xff]
    %v1186 = vld [vmem:[#allocation8 + $0x18] sm:$0xff]
    %v1187 = vld [vmem:[#allocation8 + $0x20] sm:$0xff]
    %v1188 = vld [vmem:[#allocation8 + $0x28] sm:$0xff]
    %v1189 = vld [vmem:[#allocation8 + $0x30] sm:$0xff]
    %v1190 = vld [vmem:[#allocation8 + $0x38] sm:$0xff]
    %v1191 = vld [vmem:[#allocation8 + $0x40] sm:$0xff]
    %v1192 = vld [vmem:[#allocation8 + $0x48] sm:$0xff]
    %v1193 = vld [vmem:[#allocation8 + $0x50] sm:$0xff]
    %v1194 = vld [vmem:[#allocation8 + $0x58] sm:$0xff]
    %v1195 = vld [vmem:[#allocation8 + $0x60] sm:$0xff]
    %v1196 = vld [vmem:[#allocation8 + $0x68] sm:$0xff]
    %v1197 = vld [vmem:[#allocation8 + $0x70] sm:$0xff]
    %v1198 = vld [vmem:[#allocation8 + $0x78] sm:$0xff]
    %v1199 = vld [vmem:[#allocation8 + $0x80] sm:$0xff]
    %v1200 = vld [vmem:[#allocation8 + $0x88] sm:$0xff]
    %v1201 = vld [vmem:[#allocation8 + $0x90] sm:$0xff]
    %v1202 = vld [vmem:[#allocation8 + $0x98] sm:$0xff]
    %v1203 = vld [vmem:[#allocation8 + $0xa0] sm:$0xff]
    %v1204 = vld [vmem:[#allocation8 + $0xa8] sm:$0xff]
    %v1205 = vld [vmem:[#allocation8 + $0xb0] sm:$0xff]
    %v1206 = vld [vmem:[#allocation8 + $0xb8] sm:$0xff]
    %v1207 = vld [vmem:[#allocation8 + $0xc0] sm:$0xff]
    %v1208 = vld [vmem:[#allocation8 + $0xc8] sm:$0xff]
    %v1209 = vld [vmem:[#allocation8 + $0xd0] sm:$0xff]
    %v1210 = vld [vmem:[#allocation8 + $0xd8] sm:$0xff]
    %v1211 = vld [vmem:[#allocation8 + $0xe0] sm:$0xff]
    %v1212 = vld [vmem:[#allocation8 + $0xe8] sm:$0xff]
    %v1213 = vld [vmem:[#allocation8 + $0xf0] sm:$0xff]
    %v1214 = vld [vmem:[#allocation8 + $0xf8] sm:$0xff]
    %v1215 = vld [vmem:[#allocation8 + $0x100] sm:$0xff]
    %v1216 = vld [vmem:[#allocation8 + $0x108] sm:$0xff]
    %v1217 = vld [vmem:[#allocation8 + $0x110] sm:$0xff]
    %v1218 = vld [vmem:[#allocation8 + $0x118] sm:$0xff]
    %v1219 = vld [vmem:[#allocation8 + $0x120] sm:$0xff]
    %v1220 = vld [vmem:[#allocation8 + $0x128] sm:$0xff]
    %v1221 = vld [vmem:[#allocation8 + $0x130] sm:$0xff]
    %v1222 = vld [vmem:[#allocation8 + $0x138] sm:$0xff]
    %v1223 = vld [vmem:[#allocation8 + $0x140] sm:$0xff]
    %v1224 = vld [vmem:[#allocation8 + $0x148] sm:$0xff]
    %v1225 = vld [vmem:[#allocation8 + $0x150] sm:$0xff]
    %v1226 = vld [vmem:[#allocation8 + $0x158] sm:$0xff]
    %v1227 = vld [vmem:[#allocation8 + $0x160] sm:$0xff]
    %v1228 = vld [vmem:[#allocation8 + $0x168] sm:$0xff]
    %v1229 = vld [vmem:[#allocation8 + $0x170] sm:$0xff]
    %v1230 = vld [vmem:[#allocation8 + $0x178] sm:$0xff]
    %v1231 = vld [vmem:[#allocation8 + $0x180] sm:$0xff]
    %v1232 = vld [vmem:[#allocation8 + $0x188] sm:$0xff]
    %v1233 = vld [vmem:[#allocation8 + $0x190] sm:$0xff]
    %v1234 = vld [vmem:[#allocation8 + $0x198] sm:$0xff]
    %v1235 = vld [vmem:[#allocation8 + $0x1a0] sm:$0xff]
    %v1236 = vld [vmem:[#allocation8 + $0x1a8] sm:$0xff]
    %v1237 = vld [vmem:[#allocation8 + $0x1b0] sm:$0xff]
    %v1238 = vld [vmem:[#allocation8 + $0x1b8] sm:$0xff]
    %v1239 = vld [vmem:[#allocation8 + $0x1c0] sm:$0xff]
    %v1240 = vld [vmem:[#allocation8 + $0x1c8] sm:$0xff]
    %v1241 = vld [vmem:[#allocation8 + $0x1d0] sm:$0xff]
    %v1242 = vld [vmem:[#allocation8 + $0x1d8] sm:$0xff]
    %v1243 = vld [vmem:[#allocation8 + $0x1e0] sm:$0xff]
    %v1244 = vld [vmem:[#allocation8 + $0x1e8] sm:$0xff]
    %v1245 = vld [vmem:[#allocation8 + $0x1f0] sm:$0xff]
    %v1246 = vld [vmem:[#allocation8 + $0x1f8] sm:$0xff]
    %v1247 = vld [vmem:[#allocation2 + $0x1a0] sm:$0xff]
    %v1248 = vld [vmem:[#allocation2 + $0x1a8] sm:$0xff]
    %v1249 = vld [vmem:[#allocation2 + $0x1b0] sm:$0xff]
    %v1250 = vld [vmem:[#allocation2 + $0x1b8] sm:$0xff]
    %1251 = vmatpush.msra.mxu0 %v1243
    %1252 = vmatpush.msra.mxu0 %v1239
    %1253 = vmatpush.msra.mxu0 %v1235
    %1254 = vmatpush.msra.mxu0 %v1231
    %1255 = vmatpush.msra.mxu0 %v1227
    %1256 = vmatpush.msra.mxu0 %v1223
    %1257 = vmatpush.msra.mxu0 %v1219
    %1258 = vmatpush.msra.mxu0 %v1215
    %1259 = vmatpush.msra.mxu0 %v1211
    %1260 = vmatpush.msra.mxu0 %v1207
    %1261 = vmatpush.msra.mxu0 %v1203
    %1262 = vmatpush.msra.mxu0 %v1199
    %1263 = vmatpush.msra.mxu0 %v1195
    %1264 = vmatpush.msra.mxu0 %v1191
    %1265 = vmatpush.msra.mxu0 %v1187
    %1266 = vmatpush.msra.mxu0 %v1183
    %1267 = vmatmul.f32.gmra.mxu0 %v1032
    %v1268 = vpop.f32.mrf.mxu0
    %v1269 = vadd.f32 %v1247, %v1268
    %1270 = vdwg.mxu0
    %1271 = vmatpush.msra.mxu0 %v1244
    %1272 = vmatpush.msra.mxu0 %v1240
    %1273 = vmatpush.msra.mxu0 %v1236
    %1274 = vmatpush.msra.mxu0 %v1232
    %1275 = vmatpush.msra.mxu0 %v1228
    %1276 = vmatpush.msra.mxu0 %v1224
    %1277 = vmatpush.msra.mxu0 %v1220
    %1278 = vmatpush.msra.mxu0 %v1216
    %1279 = vmatpush.msra.mxu0 %v1212
    %1280 = vmatpush.msra.mxu0 %v1208
    %1281 = vmatpush.msra.mxu0 %v1204
    %1282 = vmatpush.msra.mxu0 %v1200
    %1283 = vmatpush.msra.mxu0 %v1196
    %1284 = vmatpush.msra.mxu0 %v1192
    %1285 = vmatpush.msra.mxu0 %v1188
    %1286 = vmatpush.msra.mxu0 %v1184
    %1287 = vmatmul.f32.gmra.mxu0 %v1032
    %v1288 = vpop.f32.mrf.mxu0
    %v1289 = vadd.f32 %v1248, %v1288
    %1290 = vdwg.mxu0
    %1291 = vmatpush.msra.mxu0 %v1245
    %1292 = vmatpush.msra.mxu0 %v1241
    %1293 = vmatpush.msra.mxu0 %v1237
    %1294 = vmatpush.msra.mxu0 %v1233
    %1295 = vmatpush.msra.mxu0 %v1229
    %1296 = vmatpush.msra.mxu0 %v1225
    %1297 = vmatpush.msra.mxu0 %v1221
    %1298 = vmatpush.msra.mxu0 %v1217
    %1299 = vmatpush.msra.mxu0 %v1213
    %1300 = vmatpush.msra.mxu0 %v1209
    %1301 = vmatpush.msra.mxu0 %v1205
    %1302 = vmatpush.msra.mxu0 %v1201
    %1303 = vmatpush.msra.mxu0 %v1197
    %1304 = vmatpush.msra.mxu0 %v1193
    %1305 = vmatpush.msra.mxu0 %v1189
    %1306 = vmatpush.msra.mxu0 %v1185
    %1307 = vmatmul.f32.gmra.mxu0 %v1032
    %v1308 = vpop.f32.mrf.mxu0
    %v1309 = vadd.f32 %v1249, %v1308
    %1310 = vdwg.mxu0
    %1311 = vmatpush.msra.mxu0 %v1246
    %1312 = vmatpush.msra.mxu0 %v1242
    %1313 = vmatpush.msra.mxu0 %v1238
    %1314 = vmatpush.msra.mxu0 %v1234
    %1315 = vmatpush.msra.mxu0 %v1230
    %1316 = vmatpush.msra.mxu0 %v1226
    %1317 = vmatpush.msra.mxu0 %v1222
    %1318 = vmatpush.msra.mxu0 %v1218
    %1319 = vmatpush.msra.mxu0 %v1214
    %1320 = vmatpush.msra.mxu0 %v1210
    %1321 = vmatpush.msra.mxu0 %v1206
    %1322 = vmatpush.msra.mxu0 %v1202
    %1323 = vmatpush.msra.mxu0 %v1198
    %1324 = vmatpush.msra.mxu0 %v1194
    %1325 = vmatpush.msra.mxu0 %v1190
    %1326 = vmatpush.msra.mxu0 %v1186
    %1327 = vmatmul.f32.gmra.mxu0 %v1032
    %v1328 = vpop.f32.mrf.mxu0
    %v1329 = vadd.f32 %v1250, %v1328
    %1330 = vdwg.mxu0
    %v1331 = vxor.u32 %v1121, 2147483648
    %v1332 = vxor.u32 %v1141, 2147483648
    %v1333 = vmul.f32 %v1331, 1.442695
    %v1334 = vpow.pop %v1333
    %v1335 = vmul.f32 %v1332, 1.442695
    %v1336 = vpow.pop %v1335
    %v1337 = vadd.f32 %v1334, 1.0
    %v1338 = vadd.f32 %v1336, 1.0
    %v1339 = vrcp.pop %v1337
    %v1340 = vmul.f32 %v1337, %v1339
    %v1341 = vsub.f32 1.0, %v1340
    %v1342 = vmul.f32 %v1339, %v1341
    %v1343 = vadd.f32 %v1339, %v1342
    %vm1344 = vweird.f32 %v1337
    %vm1345 = vweird.f32 %v1339
    %vm1346 = vmor %vm1344, %vm1345
    %v1347 = vsel %vm1346, %v1339, %v1343
    %v1348 = vand.u32 2147483647, %v1337
    %vm1349 = vcmp.eq.f32.partialorder %v1348, 8.507059e+37
    %v1350 = vand.u32 %v1337, 2147483648
    %v1351 = vor.u32 1.1754944e-38, %v1350
    %v1352 = vsel %vm1349, %v1351, %v1347
    %v1353 = vmul.f32 1.0, %v1352
    %v1354 = vrcp.pop %v1338
    %v1355 = vmul.f32 %v1338, %v1354
    %v1356 = vsub.f32 1.0, %v1355
    %v1357 = vmul.f32 %v1354, %v1356
    %v1358 = vadd.f32 %v1354, %v1357
    %vm1359 = vweird.f32 %v1338
    %vm1360 = vweird.f32 %v1354
    %vm1361 = vmor %vm1359, %vm1360
    %v1362 = vsel %vm1361, %v1354, %v1358
    %v1363 = vand.u32 2147483647, %v1338
    %vm1364 = vcmp.eq.f32.partialorder %v1363, 8.507059e+37
    %v1365 = vand.u32 %v1338, 2147483648
    %v1366 = vor.u32 1.1754944e-38, %v1365
    %v1367 = vsel %vm1364, %v1366, %v1362
    %v1368 = vmul.f32 1.0, %v1367
    %v1369 = vtanh.pop %v1161
    %v1370 = vxor.u32 %v1181, 2147483648
    %v1371 = vmul.f32 %v1370, 1.442695
    %v1372 = vpow.pop %v1371
    %v1373 = vadd.f32 %v1372, 1.0
    %v1374 = vrcp.pop %v1373
    %v1375 = vmul.f32 %v1373, %v1374
    %v1376 = vsub.f32 1.0, %v1375
    %v1377 = vmul.f32 %v1374, %v1376
    %v1378 = vadd.f32 %v1374, %v1377
    %vm1379 = vweird.f32 %v1373
    %vm1380 = vweird.f32 %v1374
    %vm1381 = vmor %vm1379, %vm1380
    %v1382 = vsel %vm1381, %v1374, %v1378
    %v1383 = vand.u32 2147483647, %v1373
    %vm1384 = vcmp.eq.f32.partialorder %v1383, 8.507059e+37
    %v1385 = vand.u32 %v1373, 2147483648
    %v1386 = vor.u32 1.1754944e-38, %v1385
    %v1387 = vsel %vm1384, %v1386, %v1382
    %v1388 = vmul.f32 1.0, %v1387
    %v1389 = vmul.f32 %v1368, %v967
    %v1390 = vmul.f32 %v1353, %v1369
    %v1391 = vadd.f32 %v1389, %v1390
    %v1392 = vtanh.pop %v1391
    %v1393 = vmul.f32 %v1388, %v1392
    %v1394 = vxor.u32 %v1269, 2147483648
    %v1395 = vxor.u32 %v1289, 2147483648
    %v1396 = vmul.f32 %v1394, 1.442695
    %v1397 = vpow.pop %v1396
    %v1398 = vmul.f32 %v1395, 1.442695
    %v1399 = vpow.pop %v1398
    %v1400 = vadd.f32 %v1397, 1.0
    %v1401 = vadd.f32 %v1399, 1.0
    %v1402 = vrcp.pop %v1400
    %v1403 = vmul.f32 %v1400, %v1402
    %v1404 = vsub.f32 1.0, %v1403
    %v1405 = vmul.f32 %v1402, %v1404
    %v1406 = vadd.f32 %v1402, %v1405
    %vm1407 = vweird.f32 %v1400
    %vm1408 = vweird.f32 %v1402
    %vm1409 = vmor %vm1407, %vm1408
    %v1410 = vsel %vm1409, %v1402, %v1406
    %v1411 = vand.u32 2147483647, %v1400
    %vm1412 = vcmp.eq.f32.partialorder %v1411, 8.507059e+37
    %v1413 = vand.u32 %v1400, 2147483648
    %v1414 = vor.u32 1.1754944e-38, %v1413
    %v1415 = vsel %vm1412, %v1414, %v1410
    %v1416 = vmul.f32 1.0, %v1415
    %v1417 = vrcp.pop %v1401
    %v1418 = vmul.f32 %v1401, %v1417
    %v1419 = vsub.f32 1.0, %v1418
    %v1420 = vmul.f32 %v1417, %v1419
    %v1421 = vadd.f32 %v1417, %v1420
    %vm1422 = vweird.f32 %v1401
    %vm1423 = vweird.f32 %v1417
    %vm1424 = vmor %vm1422, %vm1423
    %v1425 = vsel %vm1424, %v1417, %v1421
    %v1426 = vand.u32 2147483647, %v1401
    %vm1427 = vcmp.eq.f32.partialorder %v1426, 8.507059e+37
    %v1428 = vand.u32 %v1401, 2147483648
    %v1429 = vor.u32 1.1754944e-38, %v1428
    %v1430 = vsel %vm1427, %v1429, %v1425
    %v1431 = vmul.f32 1.0, %v1430
    %v1432 = vtanh.pop %v1309
    %v1433 = vxor.u32 %v1329, 2147483648
    %v1434 = vmul.f32 %v1433, 1.442695
    %v1435 = vpow.pop %v1434
    %v1436 = vadd.f32 %v1435, 1.0
    %v1437 = vrcp.pop %v1436
    %v1438 = vmul.f32 %v1436, %v1437
    %v1439 = vsub.f32 1.0, %v1438
    %v1440 = vmul.f32 %v1437, %v1439
    %v1441 = vadd.f32 %v1437, %v1440
    %vm1442 = vweird.f32 %v1436
    %vm1443 = vweird.f32 %v1437
    %vm1444 = vmor %vm1442, %vm1443
    %v1445 = vsel %vm1444, %v1437, %v1441
    %v1446 = vand.u32 2147483647, %v1436
    %vm1447 = vcmp.eq.f32.partialorder %v1446, 8.507059e+37
    %v1448 = vand.u32 %v1436, 2147483648
    %v1449 = vor.u32 1.1754944e-38, %v1448
    %v1450 = vsel %vm1447, %v1449, %v1445
    %v1451 = vmul.f32 1.0, %v1450
    %v1452 = vmul.f32 %v1431, %v1030
    %v1453 = vmul.f32 %v1416, %v1432
    %v1454 = vadd.f32 %v1452, %v1453
    %v1455 = vtanh.pop %v1454
    %v1456 = vmul.f32 %v1451, %v1455
    %1457 = vst [vmem:[#allocation15 + $0x10] sm:$0xff] %v1393
    %1458 = vst [vmem:[#allocation15 + $0x68] sm:$0xff] %v1456
    %v1459 = vld [vmem:[#allocation6] sm:$0xff]
    %v1460 = vld [vmem:[#allocation6 + $0x8] sm:$0xff]
    %v1461 = vld [vmem:[#allocation6 + $0x10] sm:$0xff]
    %v1462 = vld [vmem:[#allocation6 + $0x18] sm:$0xff]
    %v1463 = vld [vmem:[#allocation6 + $0x20] sm:$0xff]
    %v1464 = vld [vmem:[#allocation6 + $0x28] sm:$0xff]
    %v1465 = vld [vmem:[#allocation6 + $0x30] sm:$0xff]
    %v1466 = vld [vmem:[#allocation6 + $0x38] sm:$0xff]
    %v1467 = vld [vmem:[#allocation6 + $0x40] sm:$0xff]
    %v1468 = vld [vmem:[#allocation6 + $0x48] sm:$0xff]
    %v1469 = vld [vmem:[#allocation6 + $0x50] sm:$0xff]
    %v1470 = vld [vmem:[#allocation6 + $0x58] sm:$0xff]
    %v1471 = vld [vmem:[#allocation6 + $0x60] sm:$0xff]
    %v1472 = vld [vmem:[#allocation6 + $0x68] sm:$0xff]
    %v1473 = vld [vmem:[#allocation6 + $0x70] sm:$0xff]
    %v1474 = vld [vmem:[#allocation6 + $0x78] sm:$0xff]
    %v1475 = vld [vmem:[#allocation6 + $0x80] sm:$0xff]
    %v1476 = vld [vmem:[#allocation6 + $0x88] sm:$0xff]
    %v1477 = vld [vmem:[#allocation6 + $0x90] sm:$0xff]
    %v1478 = vld [vmem:[#allocation6 + $0x98] sm:$0xff]
    %v1479 = vld [vmem:[#allocation6 + $0xa0] sm:$0xff]
    %v1480 = vld [vmem:[#allocation6 + $0xa8] sm:$0xff]
    %v1481 = vld [vmem:[#allocation6 + $0xb0] sm:$0xff]
    %v1482 = vld [vmem:[#allocation6 + $0xb8] sm:$0xff]
    %v1483 = vld [vmem:[#allocation6 + $0xc0] sm:$0xff]
    %v1484 = vld [vmem:[#allocation6 + $0xc8] sm:$0xff]
    %v1485 = vld [vmem:[#allocation6 + $0xd0] sm:$0xff]
    %v1486 = vld [vmem:[#allocation6 + $0xd8] sm:$0xff]
    %v1487 = vld [vmem:[#allocation6 + $0xe0] sm:$0xff]
    %v1488 = vld [vmem:[#allocation6 + $0xe8] sm:$0xff]
    %v1489 = vld [vmem:[#allocation6 + $0xf0] sm:$0xff]
    %v1490 = vld [vmem:[#allocation6 + $0xf8] sm:$0xff]
    %v1491 = vld [vmem:[#allocation6 + $0x100] sm:$0xff]
    %v1492 = vld [vmem:[#allocation6 + $0x108] sm:$0xff]
    %v1493 = vld [vmem:[#allocation6 + $0x110] sm:$0xff]
    %v1494 = vld [vmem:[#allocation6 + $0x118] sm:$0xff]
    %v1495 = vld [vmem:[#allocation6 + $0x120] sm:$0xff]
    %v1496 = vld [vmem:[#allocation6 + $0x128] sm:$0xff]
    %v1497 = vld [vmem:[#allocation6 + $0x130] sm:$0xff]
    %v1498 = vld [vmem:[#allocation6 + $0x138] sm:$0xff]
    %v1499 = vld [vmem:[#allocation6 + $0x140] sm:$0xff]
    %v1500 = vld [vmem:[#allocation6 + $0x148] sm:$0xff]
    %v1501 = vld [vmem:[#allocation6 + $0x150] sm:$0xff]
    %v1502 = vld [vmem:[#allocation6 + $0x158] sm:$0xff]
    %v1503 = vld [vmem:[#allocation6 + $0x160] sm:$0xff]
    %v1504 = vld [vmem:[#allocation6 + $0x168] sm:$0xff]
    %v1505 = vld [vmem:[#allocation6 + $0x170] sm:$0xff]
    %v1506 = vld [vmem:[#allocation6 + $0x178] sm:$0xff]
    %v1507 = vld [vmem:[#allocation6 + $0x180] sm:$0xff]
    %v1508 = vld [vmem:[#allocation6 + $0x188] sm:$0xff]
    %v1509 = vld [vmem:[#allocation6 + $0x190] sm:$0xff]
    %v1510 = vld [vmem:[#allocation6 + $0x198] sm:$0xff]
    %v1511 = vld [vmem:[#allocation6 + $0x1a0] sm:$0xff]
    %v1512 = vld [vmem:[#allocation6 + $0x1a8] sm:$0xff]
    %v1513 = vld [vmem:[#allocation6 + $0x1b0] sm:$0xff]
    %v1514 = vld [vmem:[#allocation6 + $0x1b8] sm:$0xff]
    %v1515 = vld [vmem:[#allocation6 + $0x1c0] sm:$0xff]
    %v1516 = vld [vmem:[#allocation6 + $0x1c8] sm:$0xff]
    %v1517 = vld [vmem:[#allocation6 + $0x1d0] sm:$0xff]
    %v1518 = vld [vmem:[#allocation6 + $0x1d8] sm:$0xff]
    %v1519 = vld [vmem:[#allocation6 + $0x1e0] sm:$0xff]
    %v1520 = vld [vmem:[#allocation6 + $0x1e8] sm:$0xff]
    %v1521 = vld [vmem:[#allocation6 + $0x1f0] sm:$0xff]
    %v1522 = vld [vmem:[#allocation6 + $0x1f8] sm:$0xff]
    %v1523 = vld [vmem:[#allocation2 + $0x80] sm:$0xff]
    %v1524 = vld [vmem:[#allocation2 + $0x88] sm:$0xff]
    %v1525 = vld [vmem:[#allocation2 + $0x90] sm:$0xff]
    %v1526 = vld [vmem:[#allocation2 + $0x98] sm:$0xff]
    %1527 = vmatpush.msra.mxu0 %v1519
    %1528 = vmatpush.msra.mxu0 %v1515
    %1529 = vmatpush.msra.mxu0 %v1511
    %1530 = vmatpush.msra.mxu0 %v1507
    %1531 = vmatpush.msra.mxu0 %v1503
    %1532 = vmatpush.msra.mxu0 %v1499
    %1533 = vmatpush.msra.mxu0 %v1495
    %1534 = vmatpush.msra.mxu0 %v1491
    %1535 = vmatpush.msra.mxu0 %v1487
    %1536 = vmatpush.msra.mxu0 %v1483
    %1537 = vmatpush.msra.mxu0 %v1479
    %1538 = vmatpush.msra.mxu0 %v1475
    %1539 = vmatpush.msra.mxu0 %v1471
    %1540 = vmatpush.msra.mxu0 %v1467
    %1541 = vmatpush.msra.mxu0 %v1463
    %1542 = vmatpush.msra.mxu0 %v1459
    %1543 = vmatmul.f32.gmra.mxu0 %v1393
    %v1544 = vpop.f32.mrf.mxu0
    %v1545 = vadd.f32 %v1523, %v1544
    %1546 = vdwg.mxu0
    %1547 = vmatpush.msra.mxu0 %v1520
    %1548 = vmatpush.msra.mxu0 %v1516
    %1549 = vmatpush.msra.mxu0 %v1512
    %1550 = vmatpush.msra.mxu0 %v1508
    %1551 = vmatpush.msra.mxu0 %v1504
    %1552 = vmatpush.msra.mxu0 %v1500
    %1553 = vmatpush.msra.mxu0 %v1496
    %1554 = vmatpush.msra.mxu0 %v1492
    %1555 = vmatpush.msra.mxu0 %v1488
    %1556 = vmatpush.msra.mxu0 %v1484
    %1557 = vmatpush.msra.mxu0 %v1480
    %1558 = vmatpush.msra.mxu0 %v1476
    %1559 = vmatpush.msra.mxu0 %v1472
    %1560 = vmatpush.msra.mxu0 %v1468
    %1561 = vmatpush.msra.mxu0 %v1464
    %1562 = vmatpush.msra.mxu0 %v1460
    %1563 = vmatmul.f32.gmra.mxu0 %v1393
    %v1564 = vpop.f32.mrf.mxu0
    %v1565 = vadd.f32 %v1524, %v1564
    %1566 = vdwg.mxu0
    %1567 = vmatpush.msra.mxu0 %v1521
    %1568 = vmatpush.msra.mxu0 %v1517
    %1569 = vmatpush.msra.mxu0 %v1513
    %1570 = vmatpush.msra.mxu0 %v1509
    %1571 = vmatpush.msra.mxu0 %v1505
    %1572 = vmatpush.msra.mxu0 %v1501
    %1573 = vmatpush.msra.mxu0 %v1497
    %1574 = vmatpush.msra.mxu0 %v1493
    %1575 = vmatpush.msra.mxu0 %v1489
    %1576 = vmatpush.msra.mxu0 %v1485
    %1577 = vmatpush.msra.mxu0 %v1481
    %1578 = vmatpush.msra.mxu0 %v1477
    %1579 = vmatpush.msra.mxu0 %v1473
    %1580 = vmatpush.msra.mxu0 %v1469
    %1581 = vmatpush.msra.mxu0 %v1465
    %1582 = vmatpush.msra.mxu0 %v1461
    %1583 = vmatmul.f32.gmra.mxu0 %v1393
    %v1584 = vpop.f32.mrf.mxu0
    %v1585 = vadd.f32 %v1525, %v1584
    %1586 = vdwg.mxu0
    %1587 = vmatpush.msra.mxu0 %v1522
    %1588 = vmatpush.msra.mxu0 %v1518
    %1589 = vmatpush.msra.mxu0 %v1514
    %1590 = vmatpush.msra.mxu0 %v1510
    %1591 = vmatpush.msra.mxu0 %v1506
    %1592 = vmatpush.msra.mxu0 %v1502
    %1593 = vmatpush.msra.mxu0 %v1498
    %1594 = vmatpush.msra.mxu0 %v1494
    %1595 = vmatpush.msra.mxu0 %v1490
    %1596 = vmatpush.msra.mxu0 %v1486
    %1597 = vmatpush.msra.mxu0 %v1482
    %1598 = vmatpush.msra.mxu0 %v1478
    %1599 = vmatpush.msra.mxu0 %v1474
    %1600 = vmatpush.msra.mxu0 %v1470
    %1601 = vmatpush.msra.mxu0 %v1466
    %1602 = vmatpush.msra.mxu0 %v1462
    %1603 = vmatmul.f32.gmra.mxu0 %v1393
    %v1604 = vpop.f32.mrf.mxu0
    %v1605 = vadd.f32 %v1526, %v1604
    %1606 = vdwg.mxu0
    %v1607 = vld [vmem:[#allocation8] sm:$0xff]
    %v1608 = vld [vmem:[#allocation8 + $0x8] sm:$0xff]
    %v1609 = vld [vmem:[#allocation8 + $0x10] sm:$0xff]
    %v1610 = vld [vmem:[#allocation8 + $0x18] sm:$0xff]
    %v1611 = vld [vmem:[#allocation8 + $0x20] sm:$0xff]
    %v1612 = vld [vmem:[#allocation8 + $0x28] sm:$0xff]
    %v1613 = vld [vmem:[#allocation8 + $0x30] sm:$0xff]
    %v1614 = vld [vmem:[#allocation8 + $0x38] sm:$0xff]
    %v1615 = vld [vmem:[#allocation8 + $0x40] sm:$0xff]
    %v1616 = vld [vmem:[#allocation8 + $0x48] sm:$0xff]
    %v1617 = vld [vmem:[#allocation8 + $0x50] sm:$0xff]
    %v1618 = vld [vmem:[#allocation8 + $0x58] sm:$0xff]
    %v1619 = vld [vmem:[#allocation8 + $0x60] sm:$0xff]
    %v1620 = vld [vmem:[#allocation8 + $0x68] sm:$0xff]
    %v1621 = vld [vmem:[#allocation8 + $0x70] sm:$0xff]
    %v1622 = vld [vmem:[#allocation8 + $0x78] sm:$0xff]
    %v1623 = vld [vmem:[#allocation8 + $0x80] sm:$0xff]
    %v1624 = vld [vmem:[#allocation8 + $0x88] sm:$0xff]
    %v1625 = vld [vmem:[#allocation8 + $0x90] sm:$0xff]
    %v1626 = vld [vmem:[#allocation8 + $0x98] sm:$0xff]
    %v1627 = vld [vmem:[#allocation8 + $0xa0] sm:$0xff]
    %v1628 = vld [vmem:[#allocation8 + $0xa8] sm:$0xff]
    %v1629 = vld [vmem:[#allocation8 + $0xb0] sm:$0xff]
    %v1630 = vld [vmem:[#allocation8 + $0xb8] sm:$0xff]
    %v1631 = vld [vmem:[#allocation8 + $0xc0] sm:$0xff]
    %v1632 = vld [vmem:[#allocation8 + $0xc8] sm:$0xff]
    %v1633 = vld [vmem:[#allocation8 + $0xd0] sm:$0xff]
    %v1634 = vld [vmem:[#allocation8 + $0xd8] sm:$0xff]
    %v1635 = vld [vmem:[#allocation8 + $0xe0] sm:$0xff]
    %v1636 = vld [vmem:[#allocation8 + $0xe8] sm:$0xff]
    %v1637 = vld [vmem:[#allocation8 + $0xf0] sm:$0xff]
    %v1638 = vld [vmem:[#allocation8 + $0xf8] sm:$0xff]
    %v1639 = vld [vmem:[#allocation8 + $0x100] sm:$0xff]
    %v1640 = vld [vmem:[#allocation8 + $0x108] sm:$0xff]
    %v1641 = vld [vmem:[#allocation8 + $0x110] sm:$0xff]
    %v1642 = vld [vmem:[#allocation8 + $0x118] sm:$0xff]
    %v1643 = vld [vmem:[#allocation8 + $0x120] sm:$0xff]
    %v1644 = vld [vmem:[#allocation8 + $0x128] sm:$0xff]
    %v1645 = vld [vmem:[#allocation8 + $0x130] sm:$0xff]
    %v1646 = vld [vmem:[#allocation8 + $0x138] sm:$0xff]
    %v1647 = vld [vmem:[#allocation8 + $0x140] sm:$0xff]
    %v1648 = vld [vmem:[#allocation8 + $0x148] sm:$0xff]
    %v1649 = vld [vmem:[#allocation8 + $0x150] sm:$0xff]
    %v1650 = vld [vmem:[#allocation8 + $0x158] sm:$0xff]
    %v1651 = vld [vmem:[#allocation8 + $0x160] sm:$0xff]
    %v1652 = vld [vmem:[#allocation8 + $0x168] sm:$0xff]
    %v1653 = vld [vmem:[#allocation8 + $0x170] sm:$0xff]
    %v1654 = vld [vmem:[#allocation8 + $0x178] sm:$0xff]
    %v1655 = vld [vmem:[#allocation8 + $0x180] sm:$0xff]
    %v1656 = vld [vmem:[#allocation8 + $0x188] sm:$0xff]
    %v1657 = vld [vmem:[#allocation8 + $0x190] sm:$0xff]
    %v1658 = vld [vmem:[#allocation8 + $0x198] sm:$0xff]
    %v1659 = vld [vmem:[#allocation8 + $0x1a0] sm:$0xff]
    %v1660 = vld [vmem:[#allocation8 + $0x1a8] sm:$0xff]
    %v1661 = vld [vmem:[#allocation8 + $0x1b0] sm:$0xff]
    %v1662 = vld [vmem:[#allocation8 + $0x1b8] sm:$0xff]
    %v1663 = vld [vmem:[#allocation8 + $0x1c0] sm:$0xff]
    %v1664 = vld [vmem:[#allocation8 + $0x1c8] sm:$0xff]
    %v1665 = vld [vmem:[#allocation8 + $0x1d0] sm:$0xff]
    %v1666 = vld [vmem:[#allocation8 + $0x1d8] sm:$0xff]
    %v1667 = vld [vmem:[#allocation8 + $0x1e0] sm:$0xff]
    %v1668 = vld [vmem:[#allocation8 + $0x1e8] sm:$0xff]
    %v1669 = vld [vmem:[#allocation8 + $0x1f0] sm:$0xff]
    %v1670 = vld [vmem:[#allocation8 + $0x1f8] sm:$0xff]
    %v1671 = vld [vmem:[#allocation2 + $0x160] sm:$0xff]
    %v1672 = vld [vmem:[#allocation2 + $0x168] sm:$0xff]
    %v1673 = vld [vmem:[#allocation2 + $0x170] sm:$0xff]
    %v1674 = vld [vmem:[#allocation2 + $0x178] sm:$0xff]
    %1675 = vmatpush.msra.mxu0 %v1667
    %1676 = vmatpush.msra.mxu0 %v1663
    %1677 = vmatpush.msra.mxu0 %v1659
    %1678 = vmatpush.msra.mxu0 %v1655
    %1679 = vmatpush.msra.mxu0 %v1651
    %1680 = vmatpush.msra.mxu0 %v1647
    %1681 = vmatpush.msra.mxu0 %v1643
    %1682 = vmatpush.msra.mxu0 %v1639
    %1683 = vmatpush.msra.mxu0 %v1635
    %1684 = vmatpush.msra.mxu0 %v1631
    %1685 = vmatpush.msra.mxu0 %v1627
    %1686 = vmatpush.msra.mxu0 %v1623
    %1687 = vmatpush.msra.mxu0 %v1619
    %1688 = vmatpush.msra.mxu0 %v1615
    %1689 = vmatpush.msra.mxu0 %v1611
    %1690 = vmatpush.msra.mxu0 %v1607
    %1691 = vmatmul.f32.gmra.mxu0 %v1456
    %v1692 = vpop.f32.mrf.mxu0
    %v1693 = vadd.f32 %v1671, %v1692
    %1694 = vdwg.mxu0
    %1695 = vmatpush.msra.mxu0 %v1668
    %1696 = vmatpush.msra.mxu0 %v1664
    %1697 = vmatpush.msra.mxu0 %v1660
    %1698 = vmatpush.msra.mxu0 %v1656
    %1699 = vmatpush.msra.mxu0 %v1652
    %1700 = vmatpush.msra.mxu0 %v1648
    %1701 = vmatpush.msra.mxu0 %v1644
    %1702 = vmatpush.msra.mxu0 %v1640
    %1703 = vmatpush.msra.mxu0 %v1636
    %1704 = vmatpush.msra.mxu0 %v1632
    %1705 = vmatpush.msra.mxu0 %v1628
    %1706 = vmatpush.msra.mxu0 %v1624
    %1707 = vmatpush.msra.mxu0 %v1620
    %1708 = vmatpush.msra.mxu0 %v1616
    %1709 = vmatpush.msra.mxu0 %v1612
    %1710 = vmatpush.msra.mxu0 %v1608
    %1711 = vmatmul.f32.gmra.mxu0 %v1456
    %v1712 = vpop.f32.mrf.mxu0
    %v1713 = vadd.f32 %v1672, %v1712
    %1714 = vdwg.mxu0
    %1715 = vmatpush.msra.mxu0 %v1669
    %1716 = vmatpush.msra.mxu0 %v1665
    %1717 = vmatpush.msra.mxu0 %v1661
    %1718 = vmatpush.msra.mxu0 %v1657
    %1719 = vmatpush.msra.mxu0 %v1653
    %1720 = vmatpush.msra.mxu0 %v1649
    %1721 = vmatpush.msra.mxu0 %v1645
    %1722 = vmatpush.msra.mxu0 %v1641
    %1723 = vmatpush.msra.mxu0 %v1637
    %1724 = vmatpush.msra.mxu0 %v1633
    %1725 = vmatpush.msra.mxu0 %v1629
    %1726 = vmatpush.msra.mxu0 %v1625
    %1727 = vmatpush.msra.mxu0 %v1621
    %1728 = vmatpush.msra.mxu0 %v1617
    %1729 = vmatpush.msra.mxu0 %v1613
    %1730 = vmatpush.msra.mxu0 %v1609
    %1731 = vmatmul.f32.gmra.mxu0 %v1456
    %v1732 = vpop.f32.mrf.mxu0
    %v1733 = vadd.f32 %v1673, %v1732
    %1734 = vdwg.mxu0
    %1735 = vmatpush.msra.mxu0 %v1670
    %1736 = vmatpush.msra.mxu0 %v1666
    %1737 = vmatpush.msra.mxu0 %v1662
    %1738 = vmatpush.msra.mxu0 %v1658
    %1739 = vmatpush.msra.mxu0 %v1654
    %1740 = vmatpush.msra.mxu0 %v1650
    %1741 = vmatpush.msra.mxu0 %v1646
    %1742 = vmatpush.msra.mxu0 %v1642
    %1743 = vmatpush.msra.mxu0 %v1638
    %1744 = vmatpush.msra.mxu0 %v1634
    %1745 = vmatpush.msra.mxu0 %v1630
    %1746 = vmatpush.msra.mxu0 %v1626
    %1747 = vmatpush.msra.mxu0 %v1622
    %1748 = vmatpush.msra.mxu0 %v1618
    %1749 = vmatpush.msra.mxu0 %v1614
    %1750 = vmatpush.msra.mxu0 %v1610
    %1751 = vmatmul.f32.gmra.mxu0 %v1456
    %v1752 = vpop.f32.mrf.mxu0
    %v1753 = vadd.f32 %v1674, %v1752
    %1754 = vdwg.mxu0
    %v1755 = vxor.u32 %v1545, 2147483648
    %v1756 = vxor.u32 %v1565, 2147483648
    %v1757 = vmul.f32 %v1755, 1.442695
    %v1758 = vpow.pop %v1757
    %v1759 = vmul.f32 %v1756, 1.442695
    %v1760 = vpow.pop %v1759
    %v1761 = vadd.f32 %v1758, 1.0
    %v1762 = vadd.f32 %v1760, 1.0
    %v1763 = vrcp.pop %v1761
    %v1764 = vmul.f32 %v1761, %v1763
    %v1765 = vsub.f32 1.0, %v1764
    %v1766 = vmul.f32 %v1763, %v1765
    %v1767 = vadd.f32 %v1763, %v1766
    %vm1768 = vweird.f32 %v1761
    %vm1769 = vweird.f32 %v1763
    %vm1770 = vmor %vm1768, %vm1769
    %v1771 = vsel %vm1770, %v1763, %v1767
    %v1772 = vand.u32 2147483647, %v1761
    %vm1773 = vcmp.eq.f32.partialorder %v1772, 8.507059e+37
    %v1774 = vand.u32 %v1761, 2147483648
    %v1775 = vor.u32 1.1754944e-38, %v1774
    %v1776 = vsel %vm1773, %v1775, %v1771
    %v1777 = vmul.f32 1.0, %v1776
    %v1778 = vrcp.pop %v1762
    %v1779 = vmul.f32 %v1762, %v1778
    %v1780 = vsub.f32 1.0, %v1779
    %v1781 = vmul.f32 %v1778, %v1780
    %v1782 = vadd.f32 %v1778, %v1781
    %vm1783 = vweird.f32 %v1762
    %vm1784 = vweird.f32 %v1778
    %vm1785 = vmor %vm1783, %vm1784
    %v1786 = vsel %vm1785, %v1778, %v1782
    %v1787 = vand.u32 2147483647, %v1762
    %vm1788 = vcmp.eq.f32.partialorder %v1787, 8.507059e+37
    %v1789 = vand.u32 %v1762, 2147483648
    %v1790 = vor.u32 1.1754944e-38, %v1789
    %v1791 = vsel %vm1788, %v1790, %v1786
    %v1792 = vmul.f32 1.0, %v1791
    %v1793 = vtanh.pop %v1585
    %v1794 = vxor.u32 %v1605, 2147483648
    %v1795 = vmul.f32 %v1794, 1.442695
    %v1796 = vpow.pop %v1795
    %v1797 = vadd.f32 %v1796, 1.0
    %v1798 = vrcp.pop %v1797
    %v1799 = vmul.f32 %v1797, %v1798
    %v1800 = vsub.f32 1.0, %v1799
    %v1801 = vmul.f32 %v1798, %v1800
    %v1802 = vadd.f32 %v1798, %v1801
    %vm1803 = vweird.f32 %v1797
    %vm1804 = vweird.f32 %v1798
    %vm1805 = vmor %vm1803, %vm1804
    %v1806 = vsel %vm1805, %v1798, %v1802
    %v1807 = vand.u32 2147483647, %v1797
    %vm1808 = vcmp.eq.f32.partialorder %v1807, 8.507059e+37
    %v1809 = vand.u32 %v1797, 2147483648
    %v1810 = vor.u32 1.1754944e-38, %v1809
    %v1811 = vsel %vm1808, %v1810, %v1806
    %v1812 = vmul.f32 1.0, %v1811
    %v1813 = vmul.f32 %v1792, %v1391
    %v1814 = vmul.f32 %v1777, %v1793
    %v1815 = vadd.f32 %v1813, %v1814
    %v1816 = vtanh.pop %v1815
    %v1817 = vmul.f32 %v1812, %v1816
    %v1818 = vxor.u32 %v1693, 2147483648
    %v1819 = vxor.u32 %v1713, 2147483648
    %v1820 = vmul.f32 %v1818, 1.442695
    %v1821 = vpow.pop %v1820
    %v1822 = vmul.f32 %v1819, 1.442695
    %v1823 = vpow.pop %v1822
    %v1824 = vadd.f32 %v1821, 1.0
    %v1825 = vadd.f32 %v1823, 1.0
    %v1826 = vrcp.pop %v1824
    %v1827 = vmul.f32 %v1824, %v1826
    %v1828 = vsub.f32 1.0, %v1827
    %v1829 = vmul.f32 %v1826, %v1828
    %v1830 = vadd.f32 %v1826, %v1829
    %vm1831 = vweird.f32 %v1824
    %vm1832 = vweird.f32 %v1826
    %vm1833 = vmor %vm1831, %vm1832
    %v1834 = vsel %vm1833, %v1826, %v1830
    %v1835 = vand.u32 2147483647, %v1824
    %vm1836 = vcmp.eq.f32.partialorder %v1835, 8.507059e+37
    %v1837 = vand.u32 %v1824, 2147483648
    %v1838 = vor.u32 1.1754944e-38, %v1837
    %v1839 = vsel %vm1836, %v1838, %v1834
    %v1840 = vmul.f32 1.0, %v1839
    %v1841 = vrcp.pop %v1825
    %v1842 = vmul.f32 %v1825, %v1841
    %v1843 = vsub.f32 1.0, %v1842
    %v1844 = vmul.f32 %v1841, %v1843
    %v1845 = vadd.f32 %v1841, %v1844
    %vm1846 = vweird.f32 %v1825
    %vm1847 = vweird.f32 %v1841
    %vm1848 = vmor %vm1846, %vm1847
    %v1849 = vsel %vm1848, %v1841, %v1845
    %v1850 = vand.u32 2147483647, %v1825
    %vm1851 = vcmp.eq.f32.partialorder %v1850, 8.507059e+37
    %v1852 = vand.u32 %v1825, 2147483648
    %v1853 = vor.u32 1.1754944e-38, %v1852
    %v1854 = vsel %vm1851, %v1853, %v1849
    %v1855 = vmul.f32 1.0, %v1854
    %v1856 = vtanh.pop %v1733
    %v1857 = vxor.u32 %v1753, 2147483648
    %v1858 = vmul.f32 %v1857, 1.442695
    %v1859 = vpow.pop %v1858
    %v1860 = vadd.f32 %v1859, 1.0
    %v1861 = vrcp.pop %v1860
    %v1862 = vmul.f32 %v1860, %v1861
    %v1863 = vsub.f32 1.0, %v1862
    %v1864 = vmul.f32 %v1861, %v1863
    %v1865 = vadd.f32 %v1861, %v1864
    %vm1866 = vweird.f32 %v1860
    %vm1867 = vweird.f32 %v1861
    %vm1868 = vmor %vm1866, %vm1867
    %v1869 = vsel %vm1868, %v1861, %v1865
    %v1870 = vand.u32 2147483647, %v1860
    %vm1871 = vcmp.eq.f32.partialorder %v1870, 8.507059e+37
    %v1872 = vand.u32 %v1860, 2147483648
    %v1873 = vor.u32 1.1754944e-38, %v1872
    %v1874 = vsel %vm1871, %v1873, %v1869
    %v1875 = vmul.f32 1.0, %v1874
    %v1876 = vmul.f32 %v1855, %v1454
    %v1877 = vmul.f32 %v1840, %v1856
    %v1878 = vadd.f32 %v1876, %v1877
    %v1879 = vtanh.pop %v1878
    %v1880 = vmul.f32 %v1875, %v1879
    %1881 = vst [vmem:[#allocation15 + $0x20] sm:$0xff] %v1817
    %1882 = vst [vmem:[#allocation15 + $0x58] sm:$0xff] %v1880
    %v1883 = vld [vmem:[#allocation6] sm:$0xff]
    %v1884 = vld [vmem:[#allocation6 + $0x8] sm:$0xff]
    %v1885 = vld [vmem:[#allocation6 + $0x10] sm:$0xff]
    %v1886 = vld [vmem:[#allocation6 + $0x18] sm:$0xff]
    %v1887 = vld [vmem:[#allocation6 + $0x20] sm:$0xff]
    %v1888 = vld [vmem:[#allocation6 + $0x28] sm:$0xff]
    %v1889 = vld [vmem:[#allocation6 + $0x30] sm:$0xff]
    %v1890 = vld [vmem:[#allocation6 + $0x38] sm:$0xff]
    %v1891 = vld [vmem:[#allocation6 + $0x40] sm:$0xff]
    %v1892 = vld [vmem:[#allocation6 + $0x48] sm:$0xff]
    %v1893 = vld [vmem:[#allocation6 + $0x50] sm:$0xff]
    %v1894 = vld [vmem:[#allocation6 + $0x58] sm:$0xff]
    %v1895 = vld [vmem:[#allocation6 + $0x60] sm:$0xff]
    %v1896 = vld [vmem:[#allocation6 + $0x68] sm:$0xff]
    %v1897 = vld [vmem:[#allocation6 + $0x70] sm:$0xff]
    %v1898 = vld [vmem:[#allocation6 + $0x78] sm:$0xff]
    %v1899 = vld [vmem:[#allocation6 + $0x80] sm:$0xff]
    %v1900 = vld [vmem:[#allocation6 + $0x88] sm:$0xff]
    %v1901 = vld [vmem:[#allocation6 + $0x90] sm:$0xff]
    %v1902 = vld [vmem:[#allocation6 + $0x98] sm:$0xff]
    %v1903 = vld [vmem:[#allocation6 + $0xa0] sm:$0xff]
    %v1904 = vld [vmem:[#allocation6 + $0xa8] sm:$0xff]
    %v1905 = vld [vmem:[#allocation6 + $0xb0] sm:$0xff]
    %v1906 = vld [vmem:[#allocation6 + $0xb8] sm:$0xff]
    %v1907 = vld [vmem:[#allocation6 + $0xc0] sm:$0xff]
    %v1908 = vld [vmem:[#allocation6 + $0xc8] sm:$0xff]
    %v1909 = vld [vmem:[#allocation6 + $0xd0] sm:$0xff]
    %v1910 = vld [vmem:[#allocation6 + $0xd8] sm:$0xff]
    %v1911 = vld [vmem:[#allocation6 + $0xe0] sm:$0xff]
    %v1912 = vld [vmem:[#allocation6 + $0xe8] sm:$0xff]
    %v1913 = vld [vmem:[#allocation6 + $0xf0] sm:$0xff]
    %v1914 = vld [vmem:[#allocation6 + $0xf8] sm:$0xff]
    %v1915 = vld [vmem:[#allocation6 + $0x100] sm:$0xff]
    %v1916 = vld [vmem:[#allocation6 + $0x108] sm:$0xff]
    %v1917 = vld [vmem:[#allocation6 + $0x110] sm:$0xff]
    %v1918 = vld [vmem:[#allocation6 + $0x118] sm:$0xff]
    %v1919 = vld [vmem:[#allocation6 + $0x120] sm:$0xff]
    %v1920 = vld [vmem:[#allocation6 + $0x128] sm:$0xff]
    %v1921 = vld [vmem:[#allocation6 + $0x130] sm:$0xff]
    %v1922 = vld [vmem:[#allocation6 + $0x138] sm:$0xff]
    %v1923 = vld [vmem:[#allocation6 + $0x140] sm:$0xff]
    %v1924 = vld [vmem:[#allocation6 + $0x148] sm:$0xff]
    %v1925 = vld [vmem:[#allocation6 + $0x150] sm:$0xff]
    %v1926 = vld [vmem:[#allocation6 + $0x158] sm:$0xff]
    %v1927 = vld [vmem:[#allocation6 + $0x160] sm:$0xff]
    %v1928 = vld [vmem:[#allocation6 + $0x168] sm:$0xff]
    %v1929 = vld [vmem:[#allocation6 + $0x170] sm:$0xff]
    %v1930 = vld [vmem:[#allocation6 + $0x178] sm:$0xff]
    %v1931 = vld [vmem:[#allocation6 + $0x180] sm:$0xff]
    %v1932 = vld [vmem:[#allocation6 + $0x188] sm:$0xff]
    %v1933 = vld [vmem:[#allocation6 + $0x190] sm:$0xff]
    %v1934 = vld [vmem:[#allocation6 + $0x198] sm:$0xff]
    %v1935 = vld [vmem:[#allocation6 + $0x1a0] sm:$0xff]
    %v1936 = vld [vmem:[#allocation6 + $0x1a8] sm:$0xff]
    %v1937 = vld [vmem:[#allocation6 + $0x1b0] sm:$0xff]
    %v1938 = vld [vmem:[#allocation6 + $0x1b8] sm:$0xff]
    %v1939 = vld [vmem:[#allocation6 + $0x1c0] sm:$0xff]
    %v1940 = vld [vmem:[#allocation6 + $0x1c8] sm:$0xff]
    %v1941 = vld [vmem:[#allocation6 + $0x1d0] sm:$0xff]
    %v1942 = vld [vmem:[#allocation6 + $0x1d8] sm:$0xff]
    %v1943 = vld [vmem:[#allocation6 + $0x1e0] sm:$0xff]
    %v1944 = vld [vmem:[#allocation6 + $0x1e8] sm:$0xff]
    %v1945 = vld [vmem:[#allocation6 + $0x1f0] sm:$0xff]
    %v1946 = vld [vmem:[#allocation6 + $0x1f8] sm:$0xff]
    %v1947 = vld [vmem:[#allocation2 + $0xc0] sm:$0xff]
    %v1948 = vld [vmem:[#allocation2 + $0xc8] sm:$0xff]
    %v1949 = vld [vmem:[#allocation2 + $0xd0] sm:$0xff]
    %v1950 = vld [vmem:[#allocation2 + $0xd8] sm:$0xff]
    %1951 = vmatpush.msra.mxu0 %v1943
    %1952 = vmatpush.msra.mxu0 %v1939
    %1953 = vmatpush.msra.mxu0 %v1935
    %1954 = vmatpush.msra.mxu0 %v1931
    %1955 = vmatpush.msra.mxu0 %v1927
    %1956 = vmatpush.msra.mxu0 %v1923
    %1957 = vmatpush.msra.mxu0 %v1919
    %1958 = vmatpush.msra.mxu0 %v1915
    %1959 = vmatpush.msra.mxu0 %v1911
    %1960 = vmatpush.msra.mxu0 %v1907
    %1961 = vmatpush.msra.mxu0 %v1903
    %1962 = vmatpush.msra.mxu0 %v1899
    %1963 = vmatpush.msra.mxu0 %v1895
    %1964 = vmatpush.msra.mxu0 %v1891
    %1965 = vmatpush.msra.mxu0 %v1887
    %1966 = vmatpush.msra.mxu0 %v1883
    %1967 = vmatmul.f32.gmra.mxu0 %v1817
    %v1968 = vpop.f32.mrf.mxu0
    %v1969 = vadd.f32 %v1947, %v1968
    %1970 = vdwg.mxu0
    %1971 = vmatpush.msra.mxu0 %v1944
    %1972 = vmatpush.msra.mxu0 %v1940
    %1973 = vmatpush.msra.mxu0 %v1936
    %1974 = vmatpush.msra.mxu0 %v1932
    %1975 = vmatpush.msra.mxu0 %v1928
    %1976 = vmatpush.msra.mxu0 %v1924
    %1977 = vmatpush.msra.mxu0 %v1920
    %1978 = vmatpush.msra.mxu0 %v1916
    %1979 = vmatpush.msra.mxu0 %v1912
    %1980 = vmatpush.msra.mxu0 %v1908
    %1981 = vmatpush.msra.mxu0 %v1904
    %1982 = vmatpush.msra.mxu0 %v1900
    %1983 = vmatpush.msra.mxu0 %v1896
    %1984 = vmatpush.msra.mxu0 %v1892
    %1985 = vmatpush.msra.mxu0 %v1888
    %1986 = vmatpush.msra.mxu0 %v1884
    %1987 = vmatmul.f32.gmra.mxu0 %v1817
    %v1988 = vpop.f32.mrf.mxu0
    %v1989 = vadd.f32 %v1948, %v1988
    %1990 = vdwg.mxu0
    %1991 = vmatpush.msra.mxu0 %v1945
    %1992 = vmatpush.msra.mxu0 %v1941
    %1993 = vmatpush.msra.mxu0 %v1937
    %1994 = vmatpush.msra.mxu0 %v1933
    %1995 = vmatpush.msra.mxu0 %v1929
    %1996 = vmatpush.msra.mxu0 %v1925
    %1997 = vmatpush.msra.mxu0 %v1921
    %1998 = vmatpush.msra.mxu0 %v1917
    %1999 = vmatpush.msra.mxu0 %v1913
    %2000 = vmatpush.msra.mxu0 %v1909
    %2001 = vmatpush.msra.mxu0 %v1905
    %2002 = vmatpush.msra.mxu0 %v1901
    %2003 = vmatpush.msra.mxu0 %v1897
    %2004 = vmatpush.msra.mxu0 %v1893
    %2005 = vmatpush.msra.mxu0 %v1889
    %2006 = vmatpush.msra.mxu0 %v1885
    %2007 = vmatmul.f32.gmra.mxu0 %v1817
    %v2008 = vpop.f32.mrf.mxu0
    %v2009 = vadd.f32 %v1949, %v2008
    %2010 = vdwg.mxu0
    %2011 = vmatpush.msra.mxu0 %v1946
    %2012 = vmatpush.msra.mxu0 %v1942
    %2013 = vmatpush.msra.mxu0 %v1938
    %2014 = vmatpush.msra.mxu0 %v1934
    %2015 = vmatpush.msra.mxu0 %v1930
    %2016 = vmatpush.msra.mxu0 %v1926
    %2017 = vmatpush.msra.mxu0 %v1922
    %2018 = vmatpush.msra.mxu0 %v1918
    %2019 = vmatpush.msra.mxu0 %v1914
    %2020 = vmatpush.msra.mxu0 %v1910
    %2021 = vmatpush.msra.mxu0 %v1906
    %2022 = vmatpush.msra.mxu0 %v1902
    %2023 = vmatpush.msra.mxu0 %v1898
    %2024 = vmatpush.msra.mxu0 %v1894
    %2025 = vmatpush.msra.mxu0 %v1890
    %2026 = vmatpush.msra.mxu0 %v1886
    %2027 = vmatmul.f32.gmra.mxu0 %v1817
    %v2028 = vpop.f32.mrf.mxu0
    %v2029 = vadd.f32 %v1950, %v2028
    %2030 = vdwg.mxu0
    %v2031 = vld [vmem:[#allocation8] sm:$0xff]
    %v2032 = vld [vmem:[#allocation8 + $0x8] sm:$0xff]
    %v2033 = vld [vmem:[#allocation8 + $0x10] sm:$0xff]
    %v2034 = vld [vmem:[#allocation8 + $0x18] sm:$0xff]
    %v2035 = vld [vmem:[#allocation8 + $0x20] sm:$0xff]
    %v2036 = vld [vmem:[#allocation8 + $0x28] sm:$0xff]
    %v2037 = vld [vmem:[#allocation8 + $0x30] sm:$0xff]
    %v2038 = vld [vmem:[#allocation8 + $0x38] sm:$0xff]
    %v2039 = vld [vmem:[#allocation8 + $0x40] sm:$0xff]
    %v2040 = vld [vmem:[#allocation8 + $0x48] sm:$0xff]
    %v2041 = vld [vmem:[#allocation8 + $0x50] sm:$0xff]
    %v2042 = vld [vmem:[#allocation8 + $0x58] sm:$0xff]
    %v2043 = vld [vmem:[#allocation8 + $0x60] sm:$0xff]
    %v2044 = vld [vmem:[#allocation8 + $0x68] sm:$0xff]
    %v2045 = vld [vmem:[#allocation8 + $0x70] sm:$0xff]
    %v2046 = vld [vmem:[#allocation8 + $0x78] sm:$0xff]
    %v2047 = vld [vmem:[#allocation8 + $0x80] sm:$0xff]
    %v2048 = vld [vmem:[#allocation8 + $0x88] sm:$0xff]
    %v2049 = vld [vmem:[#allocation8 + $0x90] sm:$0xff]
    %v2050 = vld [vmem:[#allocation8 + $0x98] sm:$0xff]
    %v2051 = vld [vmem:[#allocation8 + $0xa0] sm:$0xff]
    %v2052 = vld [vmem:[#allocation8 + $0xa8] sm:$0xff]
    %v2053 = vld [vmem:[#allocation8 + $0xb0] sm:$0xff]
    %v2054 = vld [vmem:[#allocation8 + $0xb8] sm:$0xff]
    %v2055 = vld [vmem:[#allocation8 + $0xc0] sm:$0xff]
    %v2056 = vld [vmem:[#allocation8 + $0xc8] sm:$0xff]
    %v2057 = vld [vmem:[#allocation8 + $0xd0] sm:$0xff]
    %v2058 = vld [vmem:[#allocation8 + $0xd8] sm:$0xff]
    %v2059 = vld [vmem:[#allocation8 + $0xe0] sm:$0xff]
    %v2060 = vld [vmem:[#allocation8 + $0xe8] sm:$0xff]
    %v2061 = vld [vmem:[#allocation8 + $0xf0] sm:$0xff]
    %v2062 = vld [vmem:[#allocation8 + $0xf8] sm:$0xff]
    %v2063 = vld [vmem:[#allocation8 + $0x100] sm:$0xff]
    %v2064 = vld [vmem:[#allocation8 + $0x108] sm:$0xff]
    %v2065 = vld [vmem:[#allocation8 + $0x110] sm:$0xff]
    %v2066 = vld [vmem:[#allocation8 + $0x118] sm:$0xff]
    %v2067 = vld [vmem:[#allocation8 + $0x120] sm:$0xff]
    %v2068 = vld [vmem:[#allocation8 + $0x128] sm:$0xff]
    %v2069 = vld [vmem:[#allocation8 + $0x130] sm:$0xff]
    %v2070 = vld [vmem:[#allocation8 + $0x138] sm:$0xff]
    %v2071 = vld [vmem:[#allocation8 + $0x140] sm:$0xff]
    %v2072 = vld [vmem:[#allocation8 + $0x148] sm:$0xff]
    %v2073 = vld [vmem:[#allocation8 + $0x150] sm:$0xff]
    %v2074 = vld [vmem:[#allocation8 + $0x158] sm:$0xff]
    %v2075 = vld [vmem:[#allocation8 + $0x160] sm:$0xff]
    %v2076 = vld [vmem:[#allocation8 + $0x168] sm:$0xff]
    %v2077 = vld [vmem:[#allocation8 + $0x170] sm:$0xff]
    %v2078 = vld [vmem:[#allocation8 + $0x178] sm:$0xff]
    %v2079 = vld [vmem:[#allocation8 + $0x180] sm:$0xff]
    %v2080 = vld [vmem:[#allocation8 + $0x188] sm:$0xff]
    %v2081 = vld [vmem:[#allocation8 + $0x190] sm:$0xff]
    %v2082 = vld [vmem:[#allocation8 + $0x198] sm:$0xff]
    %v2083 = vld [vmem:[#allocation8 + $0x1a0] sm:$0xff]
    %v2084 = vld [vmem:[#allocation8 + $0x1a8] sm:$0xff]
    %v2085 = vld [vmem:[#allocation8 + $0x1b0] sm:$0xff]
    %v2086 = vld [vmem:[#allocation8 + $0x1b8] sm:$0xff]
    %v2087 = vld [vmem:[#allocation8 + $0x1c0] sm:$0xff]
    %v2088 = vld [vmem:[#allocation8 + $0x1c8] sm:$0xff]
    %v2089 = vld [vmem:[#allocation8 + $0x1d0] sm:$0xff]
    %v2090 = vld [vmem:[#allocation8 + $0x1d8] sm:$0xff]
    %v2091 = vld [vmem:[#allocation8 + $0x1e0] sm:$0xff]
    %v2092 = vld [vmem:[#allocation8 + $0x1e8] sm:$0xff]
    %v2093 = vld [vmem:[#allocation8 + $0x1f0] sm:$0xff]
    %v2094 = vld [vmem:[#allocation8 + $0x1f8] sm:$0xff]
    %v2095 = vld [vmem:[#allocation2 + $0x120] sm:$0xff]
    %v2096 = vld [vmem:[#allocation2 + $0x128] sm:$0xff]
    %v2097 = vld [vmem:[#allocation2 + $0x130] sm:$0xff]
    %v2098 = vld [vmem:[#allocation2 + $0x138] sm:$0xff]
    %2099 = vmatpush.msra.mxu0 %v2091
    %2100 = vmatpush.msra.mxu0 %v2087
    %2101 = vmatpush.msra.mxu0 %v2083
    %2102 = vmatpush.msra.mxu0 %v2079
    %2103 = vmatpush.msra.mxu0 %v2075
    %2104 = vmatpush.msra.mxu0 %v2071
    %2105 = vmatpush.msra.mxu0 %v2067
    %2106 = vmatpush.msra.mxu0 %v2063
    %2107 = vmatpush.msra.mxu0 %v2059
    %2108 = vmatpush.msra.mxu0 %v2055
    %2109 = vmatpush.msra.mxu0 %v2051
    %2110 = vmatpush.msra.mxu0 %v2047
    %2111 = vmatpush.msra.mxu0 %v2043
    %2112 = vmatpush.msra.mxu0 %v2039
    %2113 = vmatpush.msra.mxu0 %v2035
    %2114 = vmatpush.msra.mxu0 %v2031
    %2115 = vmatmul.f32.gmra.mxu0 %v1880
    %v2116 = vpop.f32.mrf.mxu0
    %v2117 = vadd.f32 %v2095, %v2116
    %2118 = vdwg.mxu0
    %2119 = vmatpush.msra.mxu0 %v2092
    %2120 = vmatpush.msra.mxu0 %v2088
    %2121 = vmatpush.msra.mxu0 %v2084
    %2122 = vmatpush.msra.mxu0 %v2080
    %2123 = vmatpush.msra.mxu0 %v2076
    %2124 = vmatpush.msra.mxu0 %v2072
    %2125 = vmatpush.msra.mxu0 %v2068
    %2126 = vmatpush.msra.mxu0 %v2064
    %2127 = vmatpush.msra.mxu0 %v2060
    %2128 = vmatpush.msra.mxu0 %v2056
    %2129 = vmatpush.msra.mxu0 %v2052
    %2130 = vmatpush.msra.mxu0 %v2048
    %2131 = vmatpush.msra.mxu0 %v2044
    %2132 = vmatpush.msra.mxu0 %v2040
    %2133 = vmatpush.msra.mxu0 %v2036
    %2134 = vmatpush.msra.mxu0 %v2032
    %2135 = vmatmul.f32.gmra.mxu0 %v1880
    %v2136 = vpop.f32.mrf.mxu0
    %v2137 = vadd.f32 %v2096, %v2136
    %2138 = vdwg.mxu0
    %2139 = vmatpush.msra.mxu0 %v2093
    %2140 = vmatpush.msra.mxu0 %v2089
    %2141 = vmatpush.msra.mxu0 %v2085
    %2142 = vmatpush.msra.mxu0 %v2081
    %2143 = vmatpush.msra.mxu0 %v2077
    %2144 = vmatpush.msra.mxu0 %v2073
    %2145 = vmatpush.msra.mxu0 %v2069
    %2146 = vmatpush.msra.mxu0 %v2065
    %2147 = vmatpush.msra.mxu0 %v2061
    %2148 = vmatpush.msra.mxu0 %v2057
    %2149 = vmatpush.msra.mxu0 %v2053
    %2150 = vmatpush.msra.mxu0 %v2049
    %2151 = vmatpush.msra.mxu0 %v2045
    %2152 = vmatpush.msra.mxu0 %v2041
    %2153 = vmatpush.msra.mxu0 %v2037
    %2154 = vmatpush.msra.mxu0 %v2033
    %2155 = vmatmul.f32.gmra.mxu0 %v1880
    %v2156 = vpop.f32.mrf.mxu0
    %v2157 = vadd.f32 %v2097, %v2156
    %2158 = vdwg.mxu0
    %2159 = vmatpush.msra.mxu0 %v2094
    %2160 = vmatpush.msra.mxu0 %v2090
    %2161 = vmatpush.msra.mxu0 %v2086
    %2162 = vmatpush.msra.mxu0 %v2082
    %2163 = vmatpush.msra.mxu0 %v2078
    %2164 = vmatpush.msra.mxu0 %v2074
    %2165 = vmatpush.msra.mxu0 %v2070
    %2166 = vmatpush.msra.mxu0 %v2066
    %2167 = vmatpush.msra.mxu0 %v2062
    %2168 = vmatpush.msra.mxu0 %v2058
    %2169 = vmatpush.msra.mxu0 %v2054
    %2170 = vmatpush.msra.mxu0 %v2050
    %2171 = vmatpush.msra.mxu0 %v2046
    %2172 = vmatpush.msra.mxu0 %v2042
    %2173 = vmatpush.msra.mxu0 %v2038
    %2174 = vmatpush.msra.mxu0 %v2034
    %2175 = vmatmul.f32.gmra.mxu0 %v1880
    %v2176 = vpop.f32.mrf.mxu0
    %v2177 = vadd.f32 %v2098, %v2176
    %2178 = vdwg.mxu0
    %v2179 = vxor.u32 %v1969, 2147483648
    %v2180 = vxor.u32 %v1989, 2147483648
    %v2181 = vmul.f32 %v2179, 1.442695
    %v2182 = vpow.pop %v2181
    %v2183 = vmul.f32 %v2180, 1.442695
    %v2184 = vpow.pop %v2183
    %v2185 = vadd.f32 %v2182, 1.0
    %v2186 = vadd.f32 %v2184, 1.0
    %v2187 = vrcp.pop %v2185
    %v2188 = vmul.f32 %v2185, %v2187
    %v2189 = vsub.f32 1.0, %v2188
    %v2190 = vmul.f32 %v2187, %v2189
    %v2191 = vadd.f32 %v2187, %v2190
    %vm2192 = vweird.f32 %v2185
    %vm2193 = vweird.f32 %v2187
    %vm2194 = vmor %vm2192, %vm2193
    %v2195 = vsel %vm2194, %v2187, %v2191
    %v2196 = vand.u32 2147483647, %v2185
    %vm2197 = vcmp.eq.f32.partialorder %v2196, 8.507059e+37
    %v2198 = vand.u32 %v2185, 2147483648
    %v2199 = vor.u32 1.1754944e-38, %v2198
    %v2200 = vsel %vm2197, %v2199, %v2195
    %v2201 = vmul.f32 1.0, %v2200
    %v2202 = vrcp.pop %v2186
    %v2203 = vmul.f32 %v2186, %v2202
    %v2204 = vsub.f32 1.0, %v2203
    %v2205 = vmul.f32 %v2202, %v2204
    %v2206 = vadd.f32 %v2202, %v2205
    %vm2207 = vweird.f32 %v2186
    %vm2208 = vweird.f32 %v2202
    %vm2209 = vmor %vm2207, %vm2208
    %v2210 = vsel %vm2209, %v2202, %v2206
    %v2211 = vand.u32 2147483647, %v2186
    %vm2212 = vcmp.eq.f32.partialorder %v2211, 8.507059e+37
    %v2213 = vand.u32 %v2186, 2147483648
    %v2214 = vor.u32 1.1754944e-38, %v2213
    %v2215 = vsel %vm2212, %v2214, %v2210
    %v2216 = vmul.f32 1.0, %v2215
    %v2217 = vtanh.pop %v2009
    %v2218 = vxor.u32 %v2029, 2147483648
    %v2219 = vmul.f32 %v2218, 1.442695
    %v2220 = vpow.pop %v2219
    %v2221 = vadd.f32 %v2220, 1.0
    %v2222 = vrcp.pop %v2221
    %v2223 = vmul.f32 %v2221, %v2222
    %v2224 = vsub.f32 1.0, %v2223
    %v2225 = vmul.f32 %v2222, %v2224
    %v2226 = vadd.f32 %v2222, %v2225
    %vm2227 = vweird.f32 %v2221
    %vm2228 = vweird.f32 %v2222
    %vm2229 = vmor %vm2227, %vm2228
    %v2230 = vsel %vm2229, %v2222, %v2226
    %v2231 = vand.u32 2147483647, %v2221
    %vm2232 = vcmp.eq.f32.partialorder %v2231, 8.507059e+37
    %v2233 = vand.u32 %v2221, 2147483648
    %v2234 = vor.u32 1.1754944e-38, %v2233
    %v2235 = vsel %vm2232, %v2234, %v2230
    %v2236 = vmul.f32 1.0, %v2235
    %v2237 = vmul.f32 %v2216, %v1815
    %v2238 = vmul.f32 %v2201, %v2217
    %v2239 = vadd.f32 %v2237, %v2238
    %v2240 = vtanh.pop %v2239
    %v2241 = vmul.f32 %v2236, %v2240
    %v2242 = vxor.u32 %v2117, 2147483648
    %v2243 = vxor.u32 %v2137, 2147483648
    %v2244 = vmul.f32 %v2242, 1.442695
    %v2245 = vpow.pop %v2244
    %v2246 = vmul.f32 %v2243, 1.442695
    %v2247 = vpow.pop %v2246
    %v2248 = vadd.f32 %v2245, 1.0
    %v2249 = vadd.f32 %v2247, 1.0
    %v2250 = vrcp.pop %v2248
    %v2251 = vmul.f32 %v2248, %v2250
    %v2252 = vsub.f32 1.0, %v2251
    %v2253 = vmul.f32 %v2250, %v2252
    %v2254 = vadd.f32 %v2250, %v2253
    %vm2255 = vweird.f32 %v2248
    %vm2256 = vweird.f32 %v2250
    %vm2257 = vmor %vm2255, %vm2256
    %v2258 = vsel %vm2257, %v2250, %v2254
    %v2259 = vand.u32 2147483647, %v2248
    %vm2260 = vcmp.eq.f32.partialorder %v2259, 8.507059e+37
    %v2261 = vand.u32 %v2248, 2147483648
    %v2262 = vor.u32 1.1754944e-38, %v2261
    %v2263 = vsel %vm2260, %v2262, %v2258
    %v2264 = vmul.f32 1.0, %v2263
    %v2265 = vrcp.pop %v2249
    %v2266 = vmul.f32 %v2249, %v2265
    %v2267 = vsub.f32 1.0, %v2266
    %v2268 = vmul.f32 %v2265, %v2267
    %v2269 = vadd.f32 %v2265, %v2268
    %vm2270 = vweird.f32 %v2249
    %vm2271 = vweird.f32 %v2265
    %vm2272 = vmor %vm2270, %vm2271
    %v2273 = vsel %vm2272, %v2265, %v2269
    %v2274 = vand.u32 2147483647, %v2249
    %vm2275 = vcmp.eq.f32.partialorder %v2274, 8.507059e+37
    %v2276 = vand.u32 %v2249, 2147483648
    %v2277 = vor.u32 1.1754944e-38, %v2276
    %v2278 = vsel %vm2275, %v2277, %v2273
    %v2279 = vmul.f32 1.0, %v2278
    %v2280 = vtanh.pop %v2157
    %v2281 = vxor.u32 %v2177, 2147483648
    %v2282 = vmul.f32 %v2281, 1.442695
    %v2283 = vpow.pop %v2282
    %v2284 = vadd.f32 %v2283, 1.0
    %v2285 = vrcp.pop %v2284
    %v2286 = vmul.f32 %v2284, %v2285
    %v2287 = vsub.f32 1.0, %v2286
    %v2288 = vmul.f32 %v2285, %v2287
    %v2289 = vadd.f32 %v2285, %v2288
    %vm2290 = vweird.f32 %v2284
    %vm2291 = vweird.f32 %v2285
    %vm2292 = vmor %vm2290, %vm2291
    %v2293 = vsel %vm2292, %v2285, %v2289
    %v2294 = vand.u32 2147483647, %v2284
    %vm2295 = vcmp.eq.f32.partialorder %v2294, 8.507059e+37
    %v2296 = vand.u32 %v2284, 2147483648
    %v2297 = vor.u32 1.1754944e-38, %v2296
    %v2298 = vsel %vm2295, %v2297, %v2293
    %v2299 = vmul.f32 1.0, %v2298
    %v2300 = vmul.f32 %v2279, %v1878
    %v2301 = vmul.f32 %v2264, %v2280
    %v2302 = vadd.f32 %v2300, %v2301
    %v2303 = vtanh.pop %v2302
    %v2304 = vmul.f32 %v2299, %v2303
    %2305 = vst [vmem:[#allocation15 + $0x30] sm:$0xff] %v2241
    %2306 = vst [vmem:[#allocation15 + $0x48] sm:$0xff] %v2304
    %v2307 = vld [vmem:[#allocation6] sm:$0xff]
    %v2308 = vld [vmem:[#allocation6 + $0x8] sm:$0xff]
    %v2309 = vld [vmem:[#allocation6 + $0x10] sm:$0xff]
    %v2310 = vld [vmem:[#allocation6 + $0x18] sm:$0xff]
    %v2311 = vld [vmem:[#allocation6 + $0x20] sm:$0xff]
    %v2312 = vld [vmem:[#allocation6 + $0x28] sm:$0xff]
    %v2313 = vld [vmem:[#allocation6 + $0x30] sm:$0xff]
    %v2314 = vld [vmem:[#allocation6 + $0x38] sm:$0xff]
    %v2315 = vld [vmem:[#allocation6 + $0x40] sm:$0xff]
    %v2316 = vld [vmem:[#allocation6 + $0x48] sm:$0xff]
    %v2317 = vld [vmem:[#allocation6 + $0x50] sm:$0xff]
    %v2318 = vld [vmem:[#allocation6 + $0x58] sm:$0xff]
    %v2319 = vld [vmem:[#allocation6 + $0x60] sm:$0xff]
    %v2320 = vld [vmem:[#allocation6 + $0x68] sm:$0xff]
    %v2321 = vld [vmem:[#allocation6 + $0x70] sm:$0xff]
    %v2322 = vld [vmem:[#allocation6 + $0x78] sm:$0xff]
    %v2323 = vld [vmem:[#allocation6 + $0x80] sm:$0xff]
    %v2324 = vld [vmem:[#allocation6 + $0x88] sm:$0xff]
    %v2325 = vld [vmem:[#allocation6 + $0x90] sm:$0xff]
    %v2326 = vld [vmem:[#allocation6 + $0x98] sm:$0xff]
    %v2327 = vld [vmem:[#allocation6 + $0xa0] sm:$0xff]
    %v2328 = vld [vmem:[#allocation6 + $0xa8] sm:$0xff]
    %v2329 = vld [vmem:[#allocation6 + $0xb0] sm:$0xff]
    %v2330 = vld [vmem:[#allocation6 + $0xb8] sm:$0xff]
    %v2331 = vld [vmem:[#allocation6 + $0xc0] sm:$0xff]
    %v2332 = vld [vmem:[#allocation6 + $0xc8] sm:$0xff]
    %v2333 = vld [vmem:[#allocation6 + $0xd0] sm:$0xff]
    %v2334 = vld [vmem:[#allocation6 + $0xd8] sm:$0xff]
    %v2335 = vld [vmem:[#allocation6 + $0xe0] sm:$0xff]
    %v2336 = vld [vmem:[#allocation6 + $0xe8] sm:$0xff]
    %v2337 = vld [vmem:[#allocation6 + $0xf0] sm:$0xff]
    %v2338 = vld [vmem:[#allocation6 + $0xf8] sm:$0xff]
    %v2339 = vld [vmem:[#allocation6 + $0x100] sm:$0xff]
    %v2340 = vld [vmem:[#allocation6 + $0x108] sm:$0xff]
    %v2341 = vld [vmem:[#allocation6 + $0x110] sm:$0xff]
    %v2342 = vld [vmem:[#allocation6 + $0x118] sm:$0xff]
    %v2343 = vld [vmem:[#allocation6 + $0x120] sm:$0xff]
    %v2344 = vld [vmem:[#allocation6 + $0x128] sm:$0xff]
    %v2345 = vld [vmem:[#allocation6 + $0x130] sm:$0xff]
    %v2346 = vld [vmem:[#allocation6 + $0x138] sm:$0xff]
    %v2347 = vld [vmem:[#allocation6 + $0x140] sm:$0xff]
    %v2348 = vld [vmem:[#allocation6 + $0x148] sm:$0xff]
    %v2349 = vld [vmem:[#allocation6 + $0x150] sm:$0xff]
    %v2350 = vld [vmem:[#allocation6 + $0x158] sm:$0xff]
    %v2351 = vld [vmem:[#allocation6 + $0x160] sm:$0xff]
    %v2352 = vld [vmem:[#allocation6 + $0x168] sm:$0xff]
    %v2353 = vld [vmem:[#allocation6 + $0x170] sm:$0xff]
    %v2354 = vld [vmem:[#allocation6 + $0x178] sm:$0xff]
    %v2355 = vld [vmem:[#allocation6 + $0x180] sm:$0xff]
    %v2356 = vld [vmem:[#allocation6 + $0x188] sm:$0xff]
    %v2357 = vld [vmem:[#allocation6 + $0x190] sm:$0xff]
    %v2358 = vld [vmem:[#allocation6 + $0x198] sm:$0xff]
    %v2359 = vld [vmem:[#allocation6 + $0x1a0] sm:$0xff]
    %v2360 = vld [vmem:[#allocation6 + $0x1a8] sm:$0xff]
    %v2361 = vld [vmem:[#allocation6 + $0x1b0] sm:$0xff]
    %v2362 = vld [vmem:[#allocation6 + $0x1b8] sm:$0xff]
    %v2363 = vld [vmem:[#allocation6 + $0x1c0] sm:$0xff]
    %v2364 = vld [vmem:[#allocation6 + $0x1c8] sm:$0xff]
    %v2365 = vld [vmem:[#allocation6 + $0x1d0] sm:$0xff]
    %v2366 = vld [vmem:[#allocation6 + $0x1d8] sm:$0xff]
    %v2367 = vld [vmem:[#allocation6 + $0x1e0] sm:$0xff]
    %v2368 = vld [vmem:[#allocation6 + $0x1e8] sm:$0xff]
    %v2369 = vld [vmem:[#allocation6 + $0x1f0] sm:$0xff]
    %v2370 = vld [vmem:[#allocation6 + $0x1f8] sm:$0xff]
    %v2371 = vld [vmem:[#allocation2 + $0x100] sm:$0xff]
    %v2372 = vld [vmem:[#allocation2 + $0x108] sm:$0xff]
    %v2373 = vld [vmem:[#allocation2 + $0x110] sm:$0xff]
    %v2374 = vld [vmem:[#allocation2 + $0x118] sm:$0xff]
    %2375 = vmatpush.msra.mxu0 %v2367
    %2376 = vmatpush.msra.mxu0 %v2363
    %2377 = vmatpush.msra.mxu0 %v2359
    %2378 = vmatpush.msra.mxu0 %v2355
    %2379 = vmatpush.msra.mxu0 %v2351
    %2380 = vmatpush.msra.mxu0 %v2347
    %2381 = vmatpush.msra.mxu0 %v2343
    %2382 = vmatpush.msra.mxu0 %v2339
    %2383 = vmatpush.msra.mxu0 %v2335
    %2384 = vmatpush.msra.mxu0 %v2331
    %2385 = vmatpush.msra.mxu0 %v2327
    %2386 = vmatpush.msra.mxu0 %v2323
    %2387 = vmatpush.msra.mxu0 %v2319
    %2388 = vmatpush.msra.mxu0 %v2315
    %2389 = vmatpush.msra.mxu0 %v2311
    %2390 = vmatpush.msra.mxu0 %v2307
    %2391 = vmatmul.f32.gmra.mxu0 %v2241
    %v2392 = vpop.f32.mrf.mxu0
    %v2393 = vadd.f32 %v2371, %v2392
    %2394 = vdwg.mxu0
    %2395 = vmatpush.msra.mxu0 %v2368
    %2396 = vmatpush.msra.mxu0 %v2364
    %2397 = vmatpush.msra.mxu0 %v2360
    %2398 = vmatpush.msra.mxu0 %v2356
    %2399 = vmatpush.msra.mxu0 %v2352
    %2400 = vmatpush.msra.mxu0 %v2348
    %2401 = vmatpush.msra.mxu0 %v2344
    %2402 = vmatpush.msra.mxu0 %v2340
    %2403 = vmatpush.msra.mxu0 %v2336
    %2404 = vmatpush.msra.mxu0 %v2332
    %2405 = vmatpush.msra.mxu0 %v2328
    %2406 = vmatpush.msra.mxu0 %v2324
    %2407 = vmatpush.msra.mxu0 %v2320
    %2408 = vmatpush.msra.mxu0 %v2316
    %2409 = vmatpush.msra.mxu0 %v2312
    %2410 = vmatpush.msra.mxu0 %v2308
    %2411 = vmatmul.f32.gmra.mxu0 %v2241
    %v2412 = vpop.f32.mrf.mxu0
    %v2413 = vadd.f32 %v2372, %v2412
    %2414 = vdwg.mxu0
    %2415 = vmatpush.msra.mxu0 %v2369
    %2416 = vmatpush.msra.mxu0 %v2365
    %2417 = vmatpush.msra.mxu0 %v2361
    %2418 = vmatpush.msra.mxu0 %v2357
    %2419 = vmatpush.msra.mxu0 %v2353
    %2420 = vmatpush.msra.mxu0 %v2349
    %2421 = vmatpush.msra.mxu0 %v2345
    %2422 = vmatpush.msra.mxu0 %v2341
    %2423 = vmatpush.msra.mxu0 %v2337
    %2424 = vmatpush.msra.mxu0 %v2333
    %2425 = vmatpush.msra.mxu0 %v2329
    %2426 = vmatpush.msra.mxu0 %v2325
    %2427 = vmatpush.msra.mxu0 %v2321
    %2428 = vmatpush.msra.mxu0 %v2317
    %2429 = vmatpush.msra.mxu0 %v2313
    %2430 = vmatpush.msra.mxu0 %v2309
    %2431 = vmatmul.f32.gmra.mxu0 %v2241
    %v2432 = vpop.f32.mrf.mxu0
    %v2433 = vadd.f32 %v2373, %v2432
    %2434 = vdwg.mxu0
    %2435 = vmatpush.msra.mxu0 %v2370
    %2436 = vmatpush.msra.mxu0 %v2366
    %2437 = vmatpush.msra.mxu0 %v2362
    %2438 = vmatpush.msra.mxu0 %v2358
    %2439 = vmatpush.msra.mxu0 %v2354
    %2440 = vmatpush.msra.mxu0 %v2350
    %2441 = vmatpush.msra.mxu0 %v2346
    %2442 = vmatpush.msra.mxu0 %v2342
    %2443 = vmatpush.msra.mxu0 %v2338
    %2444 = vmatpush.msra.mxu0 %v2334
    %2445 = vmatpush.msra.mxu0 %v2330
    %2446 = vmatpush.msra.mxu0 %v2326
    %2447 = vmatpush.msra.mxu0 %v2322
    %2448 = vmatpush.msra.mxu0 %v2318
    %2449 = vmatpush.msra.mxu0 %v2314
    %2450 = vmatpush.msra.mxu0 %v2310
    %2451 = vmatmul.f32.gmra.mxu0 %v2241
    %v2452 = vpop.f32.mrf.mxu0
    %v2453 = vadd.f32 %v2374, %v2452
    %2454 = vdwg.mxu0
    %v2455 = vld [vmem:[#allocation8] sm:$0xff]
    %v2456 = vld [vmem:[#allocation8 + $0x8] sm:$0xff]
    %v2457 = vld [vmem:[#allocation8 + $0x10] sm:$0xff]
    %v2458 = vld [vmem:[#allocation8 + $0x18] sm:$0xff]
    %v2459 = vld [vmem:[#allocation8 + $0x20] sm:$0xff]
    %v2460 = vld [vmem:[#allocation8 + $0x28] sm:$0xff]
    %v2461 = vld [vmem:[#allocation8 + $0x30] sm:$0xff]
    %v2462 = vld [vmem:[#allocation8 + $0x38] sm:$0xff]
    %v2463 = vld [vmem:[#allocation8 + $0x40] sm:$0xff]
    %v2464 = vld [vmem:[#allocation8 + $0x48] sm:$0xff]
    %v2465 = vld [vmem:[#allocation8 + $0x50] sm:$0xff]
    %v2466 = vld [vmem:[#allocation8 + $0x58] sm:$0xff]
    %v2467 = vld [vmem:[#allocation8 + $0x60] sm:$0xff]
    %v2468 = vld [vmem:[#allocation8 + $0x68] sm:$0xff]
    %v2469 = vld [vmem:[#allocation8 + $0x70] sm:$0xff]
    %v2470 = vld [vmem:[#allocation8 + $0x78] sm:$0xff]
    %v2471 = vld [vmem:[#allocation8 + $0x80] sm:$0xff]
    %v2472 = vld [vmem:[#allocation8 + $0x88] sm:$0xff]
    %v2473 = vld [vmem:[#allocation8 + $0x90] sm:$0xff]
    %v2474 = vld [vmem:[#allocation8 + $0x98] sm:$0xff]
    %v2475 = vld [vmem:[#allocation8 + $0xa0] sm:$0xff]
    %v2476 = vld [vmem:[#allocation8 + $0xa8] sm:$0xff]
    %v2477 = vld [vmem:[#allocation8 + $0xb0] sm:$0xff]
    %v2478 = vld [vmem:[#allocation8 + $0xb8] sm:$0xff]
    %v2479 = vld [vmem:[#allocation8 + $0xc0] sm:$0xff]
    %v2480 = vld [vmem:[#allocation8 + $0xc8] sm:$0xff]
    %v2481 = vld [vmem:[#allocation8 + $0xd0] sm:$0xff]
    %v2482 = vld [vmem:[#allocation8 + $0xd8] sm:$0xff]
    %v2483 = vld [vmem:[#allocation8 + $0xe0] sm:$0xff]
    %v2484 = vld [vmem:[#allocation8 + $0xe8] sm:$0xff]
    %v2485 = vld [vmem:[#allocation8 + $0xf0] sm:$0xff]
    %v2486 = vld [vmem:[#allocation8 + $0xf8] sm:$0xff]
    %v2487 = vld [vmem:[#allocation8 + $0x100] sm:$0xff]
    %v2488 = vld [vmem:[#allocation8 + $0x108] sm:$0xff]
    %v2489 = vld [vmem:[#allocation8 + $0x110] sm:$0xff]
    %v2490 = vld [vmem:[#allocation8 + $0x118] sm:$0xff]
    %v2491 = vld [vmem:[#allocation8 + $0x120] sm:$0xff]
    %v2492 = vld [vmem:[#allocation8 + $0x128] sm:$0xff]
    %v2493 = vld [vmem:[#allocation8 + $0x130] sm:$0xff]
    %v2494 = vld [vmem:[#allocation8 + $0x138] sm:$0xff]
    %v2495 = vld [vmem:[#allocation8 + $0x140] sm:$0xff]
    %v2496 = vld [vmem:[#allocation8 + $0x148] sm:$0xff]
    %v2497 = vld [vmem:[#allocation8 + $0x150] sm:$0xff]
    %v2498 = vld [vmem:[#allocation8 + $0x158] sm:$0xff]
    %v2499 = vld [vmem:[#allocation8 + $0x160] sm:$0xff]
    %v2500 = vld [vmem:[#allocation8 + $0x168] sm:$0xff]
    %v2501 = vld [vmem:[#allocation8 + $0x170] sm:$0xff]
    %v2502 = vld [vmem:[#allocation8 + $0x178] sm:$0xff]
    %v2503 = vld [vmem:[#allocation8 + $0x180] sm:$0xff]
    %v2504 = vld [vmem:[#allocation8 + $0x188] sm:$0xff]
    %v2505 = vld [vmem:[#allocation8 + $0x190] sm:$0xff]
    %v2506 = vld [vmem:[#allocation8 + $0x198] sm:$0xff]
    %v2507 = vld [vmem:[#allocation8 + $0x1a0] sm:$0xff]
    %v2508 = vld [vmem:[#allocation8 + $0x1a8] sm:$0xff]
    %v2509 = vld [vmem:[#allocation8 + $0x1b0] sm:$0xff]
    %v2510 = vld [vmem:[#allocation8 + $0x1b8] sm:$0xff]
    %v2511 = vld [vmem:[#allocation8 + $0x1c0] sm:$0xff]
    %v2512 = vld [vmem:[#allocation8 + $0x1c8] sm:$0xff]
    %v2513 = vld [vmem:[#allocation8 + $0x1d0] sm:$0xff]
    %v2514 = vld [vmem:[#allocation8 + $0x1d8] sm:$0xff]
    %v2515 = vld [vmem:[#allocation8 + $0x1e0] sm:$0xff]
    %v2516 = vld [vmem:[#allocation8 + $0x1e8] sm:$0xff]
    %v2517 = vld [vmem:[#allocation8 + $0x1f0] sm:$0xff]
    %v2518 = vld [vmem:[#allocation8 + $0x1f8] sm:$0xff]
    %v2519 = vld [vmem:[#allocation2 + $0xe0] sm:$0xff]
    %v2520 = vld [vmem:[#allocation2 + $0xe8] sm:$0xff]
    %v2521 = vld [vmem:[#allocation2 + $0xf0] sm:$0xff]
    %v2522 = vld [vmem:[#allocation2 + $0xf8] sm:$0xff]
    %2523 = vmatpush.msra.mxu0 %v2515
    %2524 = vmatpush.msra.mxu0 %v2511
    %2525 = vmatpush.msra.mxu0 %v2507
    %2526 = vmatpush.msra.mxu0 %v2503
    %2527 = vmatpush.msra.mxu0 %v2499
    %2528 = vmatpush.msra.mxu0 %v2495
    %2529 = vmatpush.msra.mxu0 %v2491
    %2530 = vmatpush.msra.mxu0 %v2487
    %2531 = vmatpush.msra.mxu0 %v2483
    %2532 = vmatpush.msra.mxu0 %v2479
    %2533 = vmatpush.msra.mxu0 %v2475
    %2534 = vmatpush.msra.mxu0 %v2471
    %2535 = vmatpush.msra.mxu0 %v2467
    %2536 = vmatpush.msra.mxu0 %v2463
    %2537 = vmatpush.msra.mxu0 %v2459
    %2538 = vmatpush.msra.mxu0 %v2455
    %2539 = vmatmul.f32.gmra.mxu0 %v2304
    %v2540 = vpop.f32.mrf.mxu0
    %v2541 = vadd.f32 %v2519, %v2540
    %2542 = vdwg.mxu0
    %2543 = vmatpush.msra.mxu0 %v2516
    %2544 = vmatpush.msra.mxu0 %v2512
    %2545 = vmatpush.msra.mxu0 %v2508
    %2546 = vmatpush.msra.mxu0 %v2504
    %2547 = vmatpush.msra.mxu0 %v2500
    %2548 = vmatpush.msra.mxu0 %v2496
    %2549 = vmatpush.msra.mxu0 %v2492
    %2550 = vmatpush.msra.mxu0 %v2488
    %2551 = vmatpush.msra.mxu0 %v2484
    %2552 = vmatpush.msra.mxu0 %v2480
    %2553 = vmatpush.msra.mxu0 %v2476
    %2554 = vmatpush.msra.mxu0 %v2472
    %2555 = vmatpush.msra.mxu0 %v2468
    %2556 = vmatpush.msra.mxu0 %v2464
    %2557 = vmatpush.msra.mxu0 %v2460
    %2558 = vmatpush.msra.mxu0 %v2456
    %2559 = vmatmul.f32.gmra.mxu0 %v2304
    %v2560 = vpop.f32.mrf.mxu0
    %v2561 = vadd.f32 %v2520, %v2560
    %2562 = vdwg.mxu0
    %2563 = vmatpush.msra.mxu0 %v2517
    %2564 = vmatpush.msra.mxu0 %v2513
    %2565 = vmatpush.msra.mxu0 %v2509
    %2566 = vmatpush.msra.mxu0 %v2505
    %2567 = vmatpush.msra.mxu0 %v2501
    %2568 = vmatpush.msra.mxu0 %v2497
    %2569 = vmatpush.msra.mxu0 %v2493
    %2570 = vmatpush.msra.mxu0 %v2489
    %2571 = vmatpush.msra.mxu0 %v2485
    %2572 = vmatpush.msra.mxu0 %v2481
    %2573 = vmatpush.msra.mxu0 %v2477
    %2574 = vmatpush.msra.mxu0 %v2473
    %2575 = vmatpush.msra.mxu0 %v2469
    %2576 = vmatpush.msra.mxu0 %v2465
    %2577 = vmatpush.msra.mxu0 %v2461
    %2578 = vmatpush.msra.mxu0 %v2457
    %2579 = vmatmul.f32.gmra.mxu0 %v2304
    %v2580 = vpop.f32.mrf.mxu0
    %v2581 = vadd.f32 %v2521, %v2580
    %2582 = vdwg.mxu0
    %2583 = vmatpush.msra.mxu0 %v2518
    %2584 = vmatpush.msra.mxu0 %v2514
    %2585 = vmatpush.msra.mxu0 %v2510
    %2586 = vmatpush.msra.mxu0 %v2506
    %2587 = vmatpush.msra.mxu0 %v2502
    %2588 = vmatpush.msra.mxu0 %v2498
    %2589 = vmatpush.msra.mxu0 %v2494
    %2590 = vmatpush.msra.mxu0 %v2490
    %2591 = vmatpush.msra.mxu0 %v2486
    %2592 = vmatpush.msra.mxu0 %v2482
    %2593 = vmatpush.msra.mxu0 %v2478
    %2594 = vmatpush.msra.mxu0 %v2474
    %2595 = vmatpush.msra.mxu0 %v2470
    %2596 = vmatpush.msra.mxu0 %v2466
    %2597 = vmatpush.msra.mxu0 %v2462
    %2598 = vmatpush.msra.mxu0 %v2458
    %2599 = vmatmul.f32.gmra.mxu0 %v2304
    %v2600 = vpop.f32.mrf.mxu0
    %v2601 = vadd.f32 %v2522, %v2600
    %2602 = vdwg.mxu0
    %v2603 = vxor.u32 %v2393, 2147483648
    %v2604 = vxor.u32 %v2413, 2147483648
    %v2605 = vmul.f32 %v2603, 1.442695
    %v2606 = vpow.pop %v2605
    %v2607 = vmul.f32 %v2604, 1.442695
    %v2608 = vpow.pop %v2607
    %v2609 = vadd.f32 %v2606, 1.0
    %v2610 = vadd.f32 %v2608, 1.0
    %v2611 = vrcp.pop %v2609
    %v2612 = vmul.f32 %v2609, %v2611
    %v2613 = vsub.f32 1.0, %v2612
    %v2614 = vmul.f32 %v2611, %v2613
    %v2615 = vadd.f32 %v2611, %v2614
    %vm2616 = vweird.f32 %v2609
    %vm2617 = vweird.f32 %v2611
    %vm2618 = vmor %vm2616, %vm2617
    %v2619 = vsel %vm2618, %v2611, %v2615
    %v2620 = vand.u32 2147483647, %v2609
    %vm2621 = vcmp.eq.f32.partialorder %v2620, 8.507059e+37
    %v2622 = vand.u32 %v2609, 2147483648
    %v2623 = vor.u32 1.1754944e-38, %v2622
    %v2624 = vsel %vm2621, %v2623, %v2619
    %v2625 = vmul.f32 1.0, %v2624
    %v2626 = vrcp.pop %v2610
    %v2627 = vmul.f32 %v2610, %v2626
    %v2628 = vsub.f32 1.0, %v2627
    %v2629 = vmul.f32 %v2626, %v2628
    %v2630 = vadd.f32 %v2626, %v2629
    %vm2631 = vweird.f32 %v2610
    %vm2632 = vweird.f32 %v2626
    %vm2633 = vmor %vm2631, %vm2632
    %v2634 = vsel %vm2633, %v2626, %v2630
    %v2635 = vand.u32 2147483647, %v2610
    %vm2636 = vcmp.eq.f32.partialorder %v2635, 8.507059e+37
    %v2637 = vand.u32 %v2610, 2147483648
    %v2638 = vor.u32 1.1754944e-38, %v2637
    %v2639 = vsel %vm2636, %v2638, %v2634
    %v2640 = vmul.f32 1.0, %v2639
    %v2641 = vtanh.pop %v2433
    %v2642 = vxor.u32 %v2453, 2147483648
    %v2643 = vmul.f32 %v2642, 1.442695
    %v2644 = vpow.pop %v2643
    %v2645 = vadd.f32 %v2644, 1.0
    %v2646 = vrcp.pop %v2645
    %v2647 = vmul.f32 %v2645, %v2646
    %v2648 = vsub.f32 1.0, %v2647
    %v2649 = vmul.f32 %v2646, %v2648
    %v2650 = vadd.f32 %v2646, %v2649
    %vm2651 = vweird.f32 %v2645
    %vm2652 = vweird.f32 %v2646
    %vm2653 = vmor %vm2651, %vm2652
    %v2654 = vsel %vm2653, %v2646, %v2650
    %v2655 = vand.u32 2147483647, %v2645
    %vm2656 = vcmp.eq.f32.partialorder %v2655, 8.507059e+37
    %v2657 = vand.u32 %v2645, 2147483648
    %v2658 = vor.u32 1.1754944e-38, %v2657
    %v2659 = vsel %vm2656, %v2658, %v2654
    %v2660 = vmul.f32 1.0, %v2659
    %v2661 = vmul.f32 %v2640, %v2239
    %v2662 = vmul.f32 %v2625, %v2641
    %v2663 = vadd.f32 %v2661, %v2662
    %v2664 = vtanh.pop %v2663
    %v2665 = vmul.f32 %v2660, %v2664
    %v2666 = vxor.u32 %v2541, 2147483648
    %v2667 = vxor.u32 %v2561, 2147483648
    %v2668 = vmul.f32 %v2666, 1.442695
    %v2669 = vpow.pop %v2668
    %v2670 = vmul.f32 %v2667, 1.442695
    %v2671 = vpow.pop %v2670
    %v2672 = vadd.f32 %v2669, 1.0
    %v2673 = vadd.f32 %v2671, 1.0
    %v2674 = vrcp.pop %v2672
    %v2675 = vmul.f32 %v2672, %v2674
    %v2676 = vsub.f32 1.0, %v2675
    %v2677 = vmul.f32 %v2674, %v2676
    %v2678 = vadd.f32 %v2674, %v2677
    %vm2679 = vweird.f32 %v2672
    %vm2680 = vweird.f32 %v2674
    %vm2681 = vmor %vm2679, %vm2680
    %v2682 = vsel %vm2681, %v2674, %v2678
    %v2683 = vand.u32 2147483647, %v2672
    %vm2684 = vcmp.eq.f32.partialorder %v2683, 8.507059e+37
    %v2685 = vand.u32 %v2672, 2147483648
    %v2686 = vor.u32 1.1754944e-38, %v2685
    %v2687 = vsel %vm2684, %v2686, %v2682
    %v2688 = vmul.f32 1.0, %v2687
    %v2689 = vrcp.pop %v2673
    %v2690 = vmul.f32 %v2673, %v2689
    %v2691 = vsub.f32 1.0, %v2690
    %v2692 = vmul.f32 %v2689, %v2691
    %v2693 = vadd.f32 %v2689, %v2692
    %vm2694 = vweird.f32 %v2673
    %vm2695 = vweird.f32 %v2689
    %vm2696 = vmor %vm2694, %vm2695
    %v2697 = vsel %vm2696, %v2689, %v2693
    %v2698 = vand.u32 2147483647, %v2673
    %vm2699 = vcmp.eq.f32.partialorder %v2698, 8.507059e+37
    %v2700 = vand.u32 %v2673, 2147483648
    %v2701 = vor.u32 1.1754944e-38, %v2700
    %v2702 = vsel %vm2699, %v2701, %v2697
    %v2703 = vmul.f32 1.0, %v2702
    %v2704 = vtanh.pop %v2581
    %v2705 = vxor.u32 %v2601, 2147483648
    %v2706 = vmul.f32 %v2705, 1.442695
    %v2707 = vpow.pop %v2706
    %v2708 = vadd.f32 %v2707, 1.0
    %v2709 = vrcp.pop %v2708
    %v2710 = vmul.f32 %v2708, %v2709
    %v2711 = vsub.f32 1.0, %v2710
    %v2712 = vmul.f32 %v2709, %v2711
    %v2713 = vadd.f32 %v2709, %v2712
    %vm2714 = vweird.f32 %v2708
    %vm2715 = vweird.f32 %v2709
    %vm2716 = vmor %vm2714, %vm2715
    %v2717 = vsel %vm2716, %v2709, %v2713
    %v2718 = vand.u32 2147483647, %v2708
    %vm2719 = vcmp.eq.f32.partialorder %v2718, 8.507059e+37
    %v2720 = vand.u32 %v2708, 2147483648
    %v2721 = vor.u32 1.1754944e-38, %v2720
    %v2722 = vsel %vm2719, %v2721, %v2717
    %v2723 = vmul.f32 1.0, %v2722
    %v2724 = vmul.f32 %v2703, %v2302
    %v2725 = vmul.f32 %v2688, %v2704
    %v2726 = vadd.f32 %v2724, %v2725
    %v2727 = vtanh.pop %v2726
    %v2728 = vmul.f32 %v2723, %v2727
    %2729 = vst [vmem:[#allocation15 + $0x40] sm:$0xff] %v2665
    %2730 = vst [vmem:[#allocation15 + $0x38] sm:$0xff] %v2728
    %v2731 = vld [vmem:[#allocation6] sm:$0xff]
    %v2732 = vld [vmem:[#allocation6 + $0x8] sm:$0xff]
    %v2733 = vld [vmem:[#allocation6 + $0x10] sm:$0xff]
    %v2734 = vld [vmem:[#allocation6 + $0x18] sm:$0xff]
    %v2735 = vld [vmem:[#allocation6 + $0x20] sm:$0xff]
    %v2736 = vld [vmem:[#allocation6 + $0x28] sm:$0xff]
    %v2737 = vld [vmem:[#allocation6 + $0x30] sm:$0xff]
    %v2738 = vld [vmem:[#allocation6 + $0x38] sm:$0xff]
    %v2739 = vld [vmem:[#allocation6 + $0x40] sm:$0xff]
    %v2740 = vld [vmem:[#allocation6 + $0x48] sm:$0xff]
    %v2741 = vld [vmem:[#allocation6 + $0x50] sm:$0xff]
    %v2742 = vld [vmem:[#allocation6 + $0x58] sm:$0xff]
    %v2743 = vld [vmem:[#allocation6 + $0x60] sm:$0xff]
    %v2744 = vld [vmem:[#allocation6 + $0x68] sm:$0xff]
    %v2745 = vld [vmem:[#allocation6 + $0x70] sm:$0xff]
    %v2746 = vld [vmem:[#allocation6 + $0x78] sm:$0xff]
    %v2747 = vld [vmem:[#allocation6 + $0x80] sm:$0xff]
    %v2748 = vld [vmem:[#allocation6 + $0x88] sm:$0xff]
    %v2749 = vld [vmem:[#allocation6 + $0x90] sm:$0xff]
    %v2750 = vld [vmem:[#allocation6 + $0x98] sm:$0xff]
    %v2751 = vld [vmem:[#allocation6 + $0xa0] sm:$0xff]
    %v2752 = vld [vmem:[#allocation6 + $0xa8] sm:$0xff]
    %v2753 = vld [vmem:[#allocation6 + $0xb0] sm:$0xff]
    %v2754 = vld [vmem:[#allocation6 + $0xb8] sm:$0xff]
    %v2755 = vld [vmem:[#allocation6 + $0xc0] sm:$0xff]
    %v2756 = vld [vmem:[#allocation6 + $0xc8] sm:$0xff]
    %v2757 = vld [vmem:[#allocation6 + $0xd0] sm:$0xff]
    %v2758 = vld [vmem:[#allocation6 + $0xd8] sm:$0xff]
    %v2759 = vld [vmem:[#allocation6 + $0xe0] sm:$0xff]
    %v2760 = vld [vmem:[#allocation6 + $0xe8] sm:$0xff]
    %v2761 = vld [vmem:[#allocation6 + $0xf0] sm:$0xff]
    %v2762 = vld [vmem:[#allocation6 + $0xf8] sm:$0xff]
    %v2763 = vld [vmem:[#allocation6 + $0x100] sm:$0xff]
    %v2764 = vld [vmem:[#allocation6 + $0x108] sm:$0xff]
    %v2765 = vld [vmem:[#allocation6 + $0x110] sm:$0xff]
    %v2766 = vld [vmem:[#allocation6 + $0x118] sm:$0xff]
    %v2767 = vld [vmem:[#allocation6 + $0x120] sm:$0xff]
    %v2768 = vld [vmem:[#allocation6 + $0x128] sm:$0xff]
    %v2769 = vld [vmem:[#allocation6 + $0x130] sm:$0xff]
    %v2770 = vld [vmem:[#allocation6 + $0x138] sm:$0xff]
    %v2771 = vld [vmem:[#allocation6 + $0x140] sm:$0xff]
    %v2772 = vld [vmem:[#allocation6 + $0x148] sm:$0xff]
    %v2773 = vld [vmem:[#allocation6 + $0x150] sm:$0xff]
    %v2774 = vld [vmem:[#allocation6 + $0x158] sm:$0xff]
    %v2775 = vld [vmem:[#allocation6 + $0x160] sm:$0xff]
    %v2776 = vld [vmem:[#allocation6 + $0x168] sm:$0xff]
    %v2777 = vld [vmem:[#allocation6 + $0x170] sm:$0xff]
    %v2778 = vld [vmem:[#allocation6 + $0x178] sm:$0xff]
    %v2779 = vld [vmem:[#allocation6 + $0x180] sm:$0xff]
    %v2780 = vld [vmem:[#allocation6 + $0x188] sm:$0xff]
    %v2781 = vld [vmem:[#allocation6 + $0x190] sm:$0xff]
    %v2782 = vld [vmem:[#allocation6 + $0x198] sm:$0xff]
    %v2783 = vld [vmem:[#allocation6 + $0x1a0] sm:$0xff]
    %v2784 = vld [vmem:[#allocation6 + $0x1a8] sm:$0xff]
    %v2785 = vld [vmem:[#allocation6 + $0x1b0] sm:$0xff]
    %v2786 = vld [vmem:[#allocation6 + $0x1b8] sm:$0xff]
    %v2787 = vld [vmem:[#allocation6 + $0x1c0] sm:$0xff]
    %v2788 = vld [vmem:[#allocation6 + $0x1c8] sm:$0xff]
    %v2789 = vld [vmem:[#allocation6 + $0x1d0] sm:$0xff]
    %v2790 = vld [vmem:[#allocation6 + $0x1d8] sm:$0xff]
    %v2791 = vld [vmem:[#allocation6 + $0x1e0] sm:$0xff]
    %v2792 = vld [vmem:[#allocation6 + $0x1e8] sm:$0xff]
    %v2793 = vld [vmem:[#allocation6 + $0x1f0] sm:$0xff]
    %v2794 = vld [vmem:[#allocation6 + $0x1f8] sm:$0xff]
    %v2795 = vld [vmem:[#allocation2 + $0x140] sm:$0xff]
    %v2796 = vld [vmem:[#allocation2 + $0x148] sm:$0xff]
    %v2797 = vld [vmem:[#allocation2 + $0x150] sm:$0xff]
    %v2798 = vld [vmem:[#allocation2 + $0x158] sm:$0xff]
    %2799 = vmatpush.msra.mxu0 %v2791
    %2800 = vmatpush.msra.mxu0 %v2787
    %2801 = vmatpush.msra.mxu0 %v2783
    %2802 = vmatpush.msra.mxu0 %v2779
    %2803 = vmatpush.msra.mxu0 %v2775
    %2804 = vmatpush.msra.mxu0 %v2771
    %2805 = vmatpush.msra.mxu0 %v2767
    %2806 = vmatpush.msra.mxu0 %v2763
    %2807 = vmatpush.msra.mxu0 %v2759
    %2808 = vmatpush.msra.mxu0 %v2755
    %2809 = vmatpush.msra.mxu0 %v2751
    %2810 = vmatpush.msra.mxu0 %v2747
    %2811 = vmatpush.msra.mxu0 %v2743
    %2812 = vmatpush.msra.mxu0 %v2739
    %2813 = vmatpush.msra.mxu0 %v2735
    %2814 = vmatpush.msra.mxu0 %v2731
    %2815 = vmatmul.f32.gmra.mxu0 %v2665
    %v2816 = vpop.f32.mrf.mxu0
    %v2817 = vadd.f32 %v2795, %v2816
    %2818 = vdwg.mxu0
    %2819 = vmatpush.msra.mxu0 %v2792
    %2820 = vmatpush.msra.mxu0 %v2788
    %2821 = vmatpush.msra.mxu0 %v2784
    %2822 = vmatpush.msra.mxu0 %v2780
    %2823 = vmatpush.msra.mxu0 %v2776
    %2824 = vmatpush.msra.mxu0 %v2772
    %2825 = vmatpush.msra.mxu0 %v2768
    %2826 = vmatpush.msra.mxu0 %v2764
    %2827 = vmatpush.msra.mxu0 %v2760
    %2828 = vmatpush.msra.mxu0 %v2756
    %2829 = vmatpush.msra.mxu0 %v2752
    %2830 = vmatpush.msra.mxu0 %v2748
    %2831 = vmatpush.msra.mxu0 %v2744
    %2832 = vmatpush.msra.mxu0 %v2740
    %2833 = vmatpush.msra.mxu0 %v2736
    %2834 = vmatpush.msra.mxu0 %v2732
    %2835 = vmatmul.f32.gmra.mxu0 %v2665
    %v2836 = vpop.f32.mrf.mxu0
    %v2837 = vadd.f32 %v2796, %v2836
    %2838 = vdwg.mxu0
    %2839 = vmatpush.msra.mxu0 %v2793
    %2840 = vmatpush.msra.mxu0 %v2789
    %2841 = vmatpush.msra.mxu0 %v2785
    %2842 = vmatpush.msra.mxu0 %v2781
    %2843 = vmatpush.msra.mxu0 %v2777
    %2844 = vmatpush.msra.mxu0 %v2773
    %2845 = vmatpush.msra.mxu0 %v2769
    %2846 = vmatpush.msra.mxu0 %v2765
    %2847 = vmatpush.msra.mxu0 %v2761
    %2848 = vmatpush.msra.mxu0 %v2757
    %2849 = vmatpush.msra.mxu0 %v2753
    %2850 = vmatpush.msra.mxu0 %v2749
    %2851 = vmatpush.msra.mxu0 %v2745
    %2852 = vmatpush.msra.mxu0 %v2741
    %2853 = vmatpush.msra.mxu0 %v2737
    %2854 = vmatpush.msra.mxu0 %v2733
    %2855 = vmatmul.f32.gmra.mxu0 %v2665
    %v2856 = vpop.f32.mrf.mxu0
    %v2857 = vadd.f32 %v2797, %v2856
    %2858 = vdwg.mxu0
    %2859 = vmatpush.msra.mxu0 %v2794
    %2860 = vmatpush.msra.mxu0 %v2790
    %2861 = vmatpush.msra.mxu0 %v2786
    %2862 = vmatpush.msra.mxu0 %v2782
    %2863 = vmatpush.msra.mxu0 %v2778
    %2864 = vmatpush.msra.mxu0 %v2774
    %2865 = vmatpush.msra.mxu0 %v2770
    %2866 = vmatpush.msra.mxu0 %v2766
    %2867 = vmatpush.msra.mxu0 %v2762
    %2868 = vmatpush.msra.mxu0 %v2758
    %2869 = vmatpush.msra.mxu0 %v2754
    %2870 = vmatpush.msra.mxu0 %v2750
    %2871 = vmatpush.msra.mxu0 %v2746
    %2872 = vmatpush.msra.mxu0 %v2742
    %2873 = vmatpush.msra.mxu0 %v2738
    %2874 = vmatpush.msra.mxu0 %v2734
    %2875 = vmatmul.f32.gmra.mxu0 %v2665
    %v2876 = vpop.f32.mrf.mxu0
    %v2877 = vadd.f32 %v2798, %v2876
    %2878 = vdwg.mxu0
    %v2879 = vld [vmem:[#allocation8] sm:$0xff]
    %v2880 = vld [vmem:[#allocation8 + $0x8] sm:$0xff]
    %v2881 = vld [vmem:[#allocation8 + $0x10] sm:$0xff]
    %v2882 = vld [vmem:[#allocation8 + $0x18] sm:$0xff]
    %v2883 = vld [vmem:[#allocation8 + $0x20] sm:$0xff]
    %v2884 = vld [vmem:[#allocation8 + $0x28] sm:$0xff]
    %v2885 = vld [vmem:[#allocation8 + $0x30] sm:$0xff]
    %v2886 = vld [vmem:[#allocation8 + $0x38] sm:$0xff]
    %v2887 = vld [vmem:[#allocation8 + $0x40] sm:$0xff]
    %v2888 = vld [vmem:[#allocation8 + $0x48] sm:$0xff]
    %v2889 = vld [vmem:[#allocation8 + $0x50] sm:$0xff]
    %v2890 = vld [vmem:[#allocation8 + $0x58] sm:$0xff]
    %v2891 = vld [vmem:[#allocation8 + $0x60] sm:$0xff]
    %v2892 = vld [vmem:[#allocation8 + $0x68] sm:$0xff]
    %v2893 = vld [vmem:[#allocation8 + $0x70] sm:$0xff]
    %v2894 = vld [vmem:[#allocation8 + $0x78] sm:$0xff]
    %v2895 = vld [vmem:[#allocation8 + $0x80] sm:$0xff]
    %v2896 = vld [vmem:[#allocation8 + $0x88] sm:$0xff]
    %v2897 = vld [vmem:[#allocation8 + $0x90] sm:$0xff]
    %v2898 = vld [vmem:[#allocation8 + $0x98] sm:$0xff]
    %v2899 = vld [vmem:[#allocation8 + $0xa0] sm:$0xff]
    %v2900 = vld [vmem:[#allocation8 + $0xa8] sm:$0xff]
    %v2901 = vld [vmem:[#allocation8 + $0xb0] sm:$0xff]
    %v2902 = vld [vmem:[#allocation8 + $0xb8] sm:$0xff]
    %v2903 = vld [vmem:[#allocation8 + $0xc0] sm:$0xff]
    %v2904 = vld [vmem:[#allocation8 + $0xc8] sm:$0xff]
    %v2905 = vld [vmem:[#allocation8 + $0xd0] sm:$0xff]
    %v2906 = vld [vmem:[#allocation8 + $0xd8] sm:$0xff]
    %v2907 = vld [vmem:[#allocation8 + $0xe0] sm:$0xff]
    %v2908 = vld [vmem:[#allocation8 + $0xe8] sm:$0xff]
    %v2909 = vld [vmem:[#allocation8 + $0xf0] sm:$0xff]
    %v2910 = vld [vmem:[#allocation8 + $0xf8] sm:$0xff]
    %v2911 = vld [vmem:[#allocation8 + $0x100] sm:$0xff]
    %v2912 = vld [vmem:[#allocation8 + $0x108] sm:$0xff]
    %v2913 = vld [vmem:[#allocation8 + $0x110] sm:$0xff]
    %v2914 = vld [vmem:[#allocation8 + $0x118] sm:$0xff]
    %v2915 = vld [vmem:[#allocation8 + $0x120] sm:$0xff]
    %v2916 = vld [vmem:[#allocation8 + $0x128] sm:$0xff]
    %v2917 = vld [vmem:[#allocation8 + $0x130] sm:$0xff]
    %v2918 = vld [vmem:[#allocation8 + $0x138] sm:$0xff]
    %v2919 = vld [vmem:[#allocation8 + $0x140] sm:$0xff]
    %v2920 = vld [vmem:[#allocation8 + $0x148] sm:$0xff]
    %v2921 = vld [vmem:[#allocation8 + $0x150] sm:$0xff]
    %v2922 = vld [vmem:[#allocation8 + $0x158] sm:$0xff]
    %v2923 = vld [vmem:[#allocation8 + $0x160] sm:$0xff]
    %v2924 = vld [vmem:[#allocation8 + $0x168] sm:$0xff]
    %v2925 = vld [vmem:[#allocation8 + $0x170] sm:$0xff]
    %v2926 = vld [vmem:[#allocation8 + $0x178] sm:$0xff]
    %v2927 = vld [vmem:[#allocation8 + $0x180] sm:$0xff]
    %v2928 = vld [vmem:[#allocation8 + $0x188] sm:$0xff]
    %v2929 = vld [vmem:[#allocation8 + $0x190] sm:$0xff]
    %v2930 = vld [vmem:[#allocation8 + $0x198] sm:$0xff]
    %v2931 = vld [vmem:[#allocation8 + $0x1a0] sm:$0xff]
    %v2932 = vld [vmem:[#allocation8 + $0x1a8] sm:$0xff]
    %v2933 = vld [vmem:[#allocation8 + $0x1b0] sm:$0xff]
    %v2934 = vld [vmem:[#allocation8 + $0x1b8] sm:$0xff]
    %v2935 = vld [vmem:[#allocation8 + $0x1c0] sm:$0xff]
    %v2936 = vld [vmem:[#allocation8 + $0x1c8] sm:$0xff]
    %v2937 = vld [vmem:[#allocation8 + $0x1d0] sm:$0xff]
    %v2938 = vld [vmem:[#allocation8 + $0x1d8] sm:$0xff]
    %v2939 = vld [vmem:[#allocation8 + $0x1e0] sm:$0xff]
    %v2940 = vld [vmem:[#allocation8 + $0x1e8] sm:$0xff]
    %v2941 = vld [vmem:[#allocation8 + $0x1f0] sm:$0xff]
    %v2942 = vld [vmem:[#allocation8 + $0x1f8] sm:$0xff]
    %v2943 = vld [vmem:[#allocation2 + $0xa0] sm:$0xff]
    %v2944 = vld [vmem:[#allocation2 + $0xa8] sm:$0xff]
    %v2945 = vld [vmem:[#allocation2 + $0xb0] sm:$0xff]
    %v2946 = vld [vmem:[#allocation2 + $0xb8] sm:$0xff]
    %2947 = vmatpush.msra.mxu0 %v2939
    %2948 = vmatpush.msra.mxu0 %v2935
    %2949 = vmatpush.msra.mxu0 %v2931
    %2950 = vmatpush.msra.mxu0 %v2927
    %2951 = vmatpush.msra.mxu0 %v2923
    %2952 = vmatpush.msra.mxu0 %v2919
    %2953 = vmatpush.msra.mxu0 %v2915
    %2954 = vmatpush.msra.mxu0 %v2911
    %2955 = vmatpush.msra.mxu0 %v2907
    %2956 = vmatpush.msra.mxu0 %v2903
    %2957 = vmatpush.msra.mxu0 %v2899
    %2958 = vmatpush.msra.mxu0 %v2895
    %2959 = vmatpush.msra.mxu0 %v2891
    %2960 = vmatpush.msra.mxu0 %v2887
    %2961 = vmatpush.msra.mxu0 %v2883
    %2962 = vmatpush.msra.mxu0 %v2879
    %2963 = vmatmul.f32.gmra.mxu0 %v2728
    %v2964 = vpop.f32.mrf.mxu0
    %v2965 = vadd.f32 %v2943, %v2964
    %2966 = vdwg.mxu0
    %2967 = vmatpush.msra.mxu0 %v2940
    %2968 = vmatpush.msra.mxu0 %v2936
    %2969 = vmatpush.msra.mxu0 %v2932
    %2970 = vmatpush.msra.mxu0 %v2928
    %2971 = vmatpush.msra.mxu0 %v2924
    %2972 = vmatpush.msra.mxu0 %v2920
    %2973 = vmatpush.msra.mxu0 %v2916
    %2974 = vmatpush.msra.mxu0 %v2912
    %2975 = vmatpush.msra.mxu0 %v2908
    %2976 = vmatpush.msra.mxu0 %v2904
    %2977 = vmatpush.msra.mxu0 %v2900
    %2978 = vmatpush.msra.mxu0 %v2896
    %2979 = vmatpush.msra.mxu0 %v2892
    %2980 = vmatpush.msra.mxu0 %v2888
    %2981 = vmatpush.msra.mxu0 %v2884
    %2982 = vmatpush.msra.mxu0 %v2880
    %2983 = vmatmul.f32.gmra.mxu0 %v2728
    %v2984 = vpop.f32.mrf.mxu0
    %v2985 = vadd.f32 %v2944, %v2984
    %2986 = vdwg.mxu0
    %2987 = vmatpush.msra.mxu0 %v2941
    %2988 = vmatpush.msra.mxu0 %v2937
    %2989 = vmatpush.msra.mxu0 %v2933
    %2990 = vmatpush.msra.mxu0 %v2929
    %2991 = vmatpush.msra.mxu0 %v2925
    %2992 = vmatpush.msra.mxu0 %v2921
    %2993 = vmatpush.msra.mxu0 %v2917
    %2994 = vmatpush.msra.mxu0 %v2913
    %2995 = vmatpush.msra.mxu0 %v2909
    %2996 = vmatpush.msra.mxu0 %v2905
    %2997 = vmatpush.msra.mxu0 %v2901
    %2998 = vmatpush.msra.mxu0 %v2897
    %2999 = vmatpush.msra.mxu0 %v2893
    %3000 = vmatpush.msra.mxu0 %v2889
    %3001 = vmatpush.msra.mxu0 %v2885
    %3002 = vmatpush.msra.mxu0 %v2881
    %3003 = vmatmul.f32.gmra.mxu0 %v2728
    %v3004 = vpop.f32.mrf.mxu0
    %v3005 = vadd.f32 %v2945, %v3004
    %3006 = vdwg.mxu0
    %3007 = vmatpush.msra.mxu0 %v2942
    %3008 = vmatpush.msra.mxu0 %v2938
    %3009 = vmatpush.msra.mxu0 %v2934
    %3010 = vmatpush.msra.mxu0 %v2930
    %3011 = vmatpush.msra.mxu0 %v2926
    %3012 = vmatpush.msra.mxu0 %v2922
    %3013 = vmatpush.msra.mxu0 %v2918
    %3014 = vmatpush.msra.mxu0 %v2914
    %3015 = vmatpush.msra.mxu0 %v2910
    %3016 = vmatpush.msra.mxu0 %v2906
    %3017 = vmatpush.msra.mxu0 %v2902
    %3018 = vmatpush.msra.mxu0 %v2898
    %3019 = vmatpush.msra.mxu0 %v2894
    %3020 = vmatpush.msra.mxu0 %v2890
    %3021 = vmatpush.msra.mxu0 %v2886
    %3022 = vmatpush.msra.mxu0 %v2882
    %3023 = vmatmul.f32.gmra.mxu0 %v2728
    %v3024 = vpop.f32.mrf.mxu0
    %v3025 = vadd.f32 %v2946, %v3024
    %3026 = vdwg.mxu0
    %v3027 = vxor.u32 %v2817, 2147483648
    %v3028 = vxor.u32 %v2837, 2147483648
    %v3029 = vmul.f32 %v3027, 1.442695
    %v3030 = vpow.pop %v3029
    %v3031 = vmul.f32 %v3028, 1.442695
    %v3032 = vpow.pop %v3031
    %v3033 = vadd.f32 %v3030, 1.0
    %v3034 = vadd.f32 %v3032, 1.0
    %v3035 = vrcp.pop %v3033
    %v3036 = vmul.f32 %v3033, %v3035
    %v3037 = vsub.f32 1.0, %v3036
    %v3038 = vmul.f32 %v3035, %v3037
    %v3039 = vadd.f32 %v3035, %v3038
    %vm3040 = vweird.f32 %v3033
    %vm3041 = vweird.f32 %v3035
    %vm3042 = vmor %vm3040, %vm3041
    %v3043 = vsel %vm3042, %v3035, %v3039
    %v3044 = vand.u32 2147483647, %v3033
    %vm3045 = vcmp.eq.f32.partialorder %v3044, 8.507059e+37
    %v3046 = vand.u32 %v3033, 2147483648
    %v3047 = vor.u32 1.1754944e-38, %v3046
    %v3048 = vsel %vm3045, %v3047, %v3043
    %v3049 = vmul.f32 1.0, %v3048
    %v3050 = vrcp.pop %v3034
    %v3051 = vmul.f32 %v3034, %v3050
    %v3052 = vsub.f32 1.0, %v3051
    %v3053 = vmul.f32 %v3050, %v3052
    %v3054 = vadd.f32 %v3050, %v3053
    %vm3055 = vweird.f32 %v3034
    %vm3056 = vweird.f32 %v3050
    %vm3057 = vmor %vm3055, %vm3056
    %v3058 = vsel %vm3057, %v3050, %v3054
    %v3059 = vand.u32 2147483647, %v3034
    %vm3060 = vcmp.eq.f32.partialorder %v3059, 8.507059e+37
    %v3061 = vand.u32 %v3034, 2147483648
    %v3062 = vor.u32 1.1754944e-38, %v3061
    %v3063 = vsel %vm3060, %v3062, %v3058
    %v3064 = vmul.f32 1.0, %v3063
    %v3065 = vtanh.pop %v2857
    %v3066 = vxor.u32 %v2877, 2147483648
    %v3067 = vmul.f32 %v3066, 1.442695
    %v3068 = vpow.pop %v3067
    %v3069 = vadd.f32 %v3068, 1.0
    %v3070 = vrcp.pop %v3069
    %v3071 = vmul.f32 %v3069, %v3070
    %v3072 = vsub.f32 1.0, %v3071
    %v3073 = vmul.f32 %v3070, %v3072
    %v3074 = vadd.f32 %v3070, %v3073
    %vm3075 = vweird.f32 %v3069
    %vm3076 = vweird.f32 %v3070
    %vm3077 = vmor %vm3075, %vm3076
    %v3078 = vsel %vm3077, %v3070, %v3074
    %v3079 = vand.u32 2147483647, %v3069
    %vm3080 = vcmp.eq.f32.partialorder %v3079, 8.507059e+37
    %v3081 = vand.u32 %v3069, 2147483648
    %v3082 = vor.u32 1.1754944e-38, %v3081
    %v3083 = vsel %vm3080, %v3082, %v3078
    %v3084 = vmul.f32 1.0, %v3083
    %v3085 = vmul.f32 %v3064, %v2663
    %v3086 = vmul.f32 %v3049, %v3065
    %v3087 = vadd.f32 %v3085, %v3086
    %v3088 = vtanh.pop %v3087
    %v3089 = vmul.f32 %v3084, %v3088
    %v3090 = vxor.u32 %v2965, 2147483648
    %v3091 = vxor.u32 %v2985, 2147483648
    %v3092 = vmul.f32 %v3090, 1.442695
    %v3093 = vpow.pop %v3092
    %v3094 = vmul.f32 %v3091, 1.442695
    %v3095 = vpow.pop %v3094
    %v3096 = vadd.f32 %v3093, 1.0
    %v3097 = vadd.f32 %v3095, 1.0
    %v3098 = vrcp.pop %v3096
    %v3099 = vmul.f32 %v3096, %v3098
    %v3100 = vsub.f32 1.0, %v3099
    %v3101 = vmul.f32 %v3098, %v3100
    %v3102 = vadd.f32 %v3098, %v3101
    %vm3103 = vweird.f32 %v3096
    %vm3104 = vweird.f32 %v3098
    %vm3105 = vmor %vm3103, %vm3104
    %v3106 = vsel %vm3105, %v3098, %v3102
    %v3107 = vand.u32 2147483647, %v3096
    %vm3108 = vcmp.eq.f32.partialorder %v3107, 8.507059e+37
    %v3109 = vand.u32 %v3096, 2147483648
    %v3110 = vor.u32 1.1754944e-38, %v3109
    %v3111 = vsel %vm3108, %v3110, %v3106
    %v3112 = vmul.f32 1.0, %v3111
    %v3113 = vrcp.pop %v3097
    %v3114 = vmul.f32 %v3097, %v3113
    %v3115 = vsub.f32 1.0, %v3114
    %v3116 = vmul.f32 %v3113, %v3115
    %v3117 = vadd.f32 %v3113, %v3116
    %vm3118 = vweird.f32 %v3097
    %vm3119 = vweird.f32 %v3113
    %vm3120 = vmor %vm3118, %vm3119
    %v3121 = vsel %vm3120, %v3113, %v3117
    %v3122 = vand.u32 2147483647, %v3097
    %vm3123 = vcmp.eq.f32.partialorder %v3122, 8.507059e+37
    %v3124 = vand.u32 %v3097, 2147483648
    %v3125 = vor.u32 1.1754944e-38, %v3124
    %v3126 = vsel %vm3123, %v3125, %v3121
    %v3127 = vmul.f32 1.0, %v3126
    %v3128 = vtanh.pop %v3005
    %v3129 = vxor.u32 %v3025, 2147483648
    %v3130 = vmul.f32 %v3129, 1.442695
    %v3131 = vpow.pop %v3130
    %v3132 = vadd.f32 %v3131, 1.0
    %v3133 = vrcp.pop %v3132
    %v3134 = vmul.f32 %v3132, %v3133
    %v3135 = vsub.f32 1.0, %v3134
    %v3136 = vmul.f32 %v3133, %v3135
    %v3137 = vadd.f32 %v3133, %v3136
    %vm3138 = vweird.f32 %v3132
    %vm3139 = vweird.f32 %v3133
    %vm3140 = vmor %vm3138, %vm3139
    %v3141 = vsel %vm3140, %v3133, %v3137
    %v3142 = vand.u32 2147483647, %v3132
    %vm3143 = vcmp.eq.f32.partialorder %v3142, 8.507059e+37
    %v3144 = vand.u32 %v3132, 2147483648
    %v3145 = vor.u32 1.1754944e-38, %v3144
    %v3146 = vsel %vm3143, %v3145, %v3141
    %v3147 = vmul.f32 1.0, %v3146
    %v3148 = vmul.f32 %v3127, %v2726
    %v3149 = vmul.f32 %v3112, %v3128
    %v3150 = vadd.f32 %v3148, %v3149
    %v3151 = vtanh.pop %v3150
    %v3152 = vmul.f32 %v3147, %v3151
    %3153 = vst [vmem:[#allocation15 + $0x50] sm:$0xff] %v3089
    %3154 = vst [vmem:[#allocation15 + $0x28] sm:$0xff] %v3152
    %v3155 = vld [vmem:[#allocation6] sm:$0xff]
    %v3156 = vld [vmem:[#allocation6 + $0x8] sm:$0xff]
    %v3157 = vld [vmem:[#allocation6 + $0x10] sm:$0xff]
    %v3158 = vld [vmem:[#allocation6 + $0x18] sm:$0xff]
    %v3159 = vld [vmem:[#allocation6 + $0x20] sm:$0xff]
    %v3160 = vld [vmem:[#allocation6 + $0x28] sm:$0xff]
    %v3161 = vld [vmem:[#allocation6 + $0x30] sm:$0xff]
    %v3162 = vld [vmem:[#allocation6 + $0x38] sm:$0xff]
    %v3163 = vld [vmem:[#allocation6 + $0x40] sm:$0xff]
    %v3164 = vld [vmem:[#allocation6 + $0x48] sm:$0xff]
    %v3165 = vld [vmem:[#allocation6 + $0x50] sm:$0xff]
    %v3166 = vld [vmem:[#allocation6 + $0x58] sm:$0xff]
    %v3167 = vld [vmem:[#allocation6 + $0x60] sm:$0xff]
    %v3168 = vld [vmem:[#allocation6 + $0x68] sm:$0xff]
    %v3169 = vld [vmem:[#allocation6 + $0x70] sm:$0xff]
    %v3170 = vld [vmem:[#allocation6 + $0x78] sm:$0xff]
    %v3171 = vld [vmem:[#allocation6 + $0x80] sm:$0xff]
    %v3172 = vld [vmem:[#allocation6 + $0x88] sm:$0xff]
    %v3173 = vld [vmem:[#allocation6 + $0x90] sm:$0xff]
    %v3174 = vld [vmem:[#allocation6 + $0x98] sm:$0xff]
    %v3175 = vld [vmem:[#allocation6 + $0xa0] sm:$0xff]
    %v3176 = vld [vmem:[#allocation6 + $0xa8] sm:$0xff]
    %v3177 = vld [vmem:[#allocation6 + $0xb0] sm:$0xff]
    %v3178 = vld [vmem:[#allocation6 + $0xb8] sm:$0xff]
    %v3179 = vld [vmem:[#allocation6 + $0xc0] sm:$0xff]
    %v3180 = vld [vmem:[#allocation6 + $0xc8] sm:$0xff]
    %v3181 = vld [vmem:[#allocation6 + $0xd0] sm:$0xff]
    %v3182 = vld [vmem:[#allocation6 + $0xd8] sm:$0xff]
    %v3183 = vld [vmem:[#allocation6 + $0xe0] sm:$0xff]
    %v3184 = vld [vmem:[#allocation6 + $0xe8] sm:$0xff]
    %v3185 = vld [vmem:[#allocation6 + $0xf0] sm:$0xff]
    %v3186 = vld [vmem:[#allocation6 + $0xf8] sm:$0xff]
    %v3187 = vld [vmem:[#allocation6 + $0x100] sm:$0xff]
    %v3188 = vld [vmem:[#allocation6 + $0x108] sm:$0xff]
    %v3189 = vld [vmem:[#allocation6 + $0x110] sm:$0xff]
    %v3190 = vld [vmem:[#allocation6 + $0x118] sm:$0xff]
    %v3191 = vld [vmem:[#allocation6 + $0x120] sm:$0xff]
    %v3192 = vld [vmem:[#allocation6 + $0x128] sm:$0xff]
    %v3193 = vld [vmem:[#allocation6 + $0x130] sm:$0xff]
    %v3194 = vld [vmem:[#allocation6 + $0x138] sm:$0xff]
    %v3195 = vld [vmem:[#allocation6 + $0x140] sm:$0xff]
    %v3196 = vld [vmem:[#allocation6 + $0x148] sm:$0xff]
    %v3197 = vld [vmem:[#allocation6 + $0x150] sm:$0xff]
    %v3198 = vld [vmem:[#allocation6 + $0x158] sm:$0xff]
    %v3199 = vld [vmem:[#allocation6 + $0x160] sm:$0xff]
    %v3200 = vld [vmem:[#allocation6 + $0x168] sm:$0xff]
    %v3201 = vld [vmem:[#allocation6 + $0x170] sm:$0xff]
    %v3202 = vld [vmem:[#allocation6 + $0x178] sm:$0xff]
    %v3203 = vld [vmem:[#allocation6 + $0x180] sm:$0xff]
    %v3204 = vld [vmem:[#allocation6 + $0x188] sm:$0xff]
    %v3205 = vld [vmem:[#allocation6 + $0x190] sm:$0xff]
    %v3206 = vld [vmem:[#allocation6 + $0x198] sm:$0xff]
    %v3207 = vld [vmem:[#allocation6 + $0x1a0] sm:$0xff]
    %v3208 = vld [vmem:[#allocation6 + $0x1a8] sm:$0xff]
    %v3209 = vld [vmem:[#allocation6 + $0x1b0] sm:$0xff]
    %v3210 = vld [vmem:[#allocation6 + $0x1b8] sm:$0xff]
    %v3211 = vld [vmem:[#allocation6 + $0x1c0] sm:$0xff]
    %v3212 = vld [vmem:[#allocation6 + $0x1c8] sm:$0xff]
    %v3213 = vld [vmem:[#allocation6 + $0x1d0] sm:$0xff]
    %v3214 = vld [vmem:[#allocation6 + $0x1d8] sm:$0xff]
    %v3215 = vld [vmem:[#allocation6 + $0x1e0] sm:$0xff]
    %v3216 = vld [vmem:[#allocation6 + $0x1e8] sm:$0xff]
    %v3217 = vld [vmem:[#allocation6 + $0x1f0] sm:$0xff]
    %v3218 = vld [vmem:[#allocation6 + $0x1f8] sm:$0xff]
    %v3219 = vld [vmem:[#allocation2 + $0x180] sm:$0xff]
    %v3220 = vld [vmem:[#allocation2 + $0x188] sm:$0xff]
    %v3221 = vld [vmem:[#allocation2 + $0x190] sm:$0xff]
    %v3222 = vld [vmem:[#allocation2 + $0x198] sm:$0xff]
    %3223 = vmatpush.msra.mxu0 %v3215
    %3224 = vmatpush.msra.mxu0 %v3211
    %3225 = vmatpush.msra.mxu0 %v3207
    %3226 = vmatpush.msra.mxu0 %v3203
    %3227 = vmatpush.msra.mxu0 %v3199
    %3228 = vmatpush.msra.mxu0 %v3195
    %3229 = vmatpush.msra.mxu0 %v3191
    %3230 = vmatpush.msra.mxu0 %v3187
    %3231 = vmatpush.msra.mxu0 %v3183
    %3232 = vmatpush.msra.mxu0 %v3179
    %3233 = vmatpush.msra.mxu0 %v3175
    %3234 = vmatpush.msra.mxu0 %v3171
    %3235 = vmatpush.msra.mxu0 %v3167
    %3236 = vmatpush.msra.mxu0 %v3163
    %3237 = vmatpush.msra.mxu0 %v3159
    %3238 = vmatpush.msra.mxu0 %v3155
    %3239 = vmatmul.f32.gmra.mxu0 %v3089
    %v3240 = vpop.f32.mrf.mxu0
    %v3241 = vadd.f32 %v3219, %v3240
    %3242 = vdwg.mxu0
    %3243 = vmatpush.msra.mxu0 %v3216
    %3244 = vmatpush.msra.mxu0 %v3212
    %3245 = vmatpush.msra.mxu0 %v3208
    %3246 = vmatpush.msra.mxu0 %v3204
    %3247 = vmatpush.msra.mxu0 %v3200
    %3248 = vmatpush.msra.mxu0 %v3196
    %3249 = vmatpush.msra.mxu0 %v3192
    %3250 = vmatpush.msra.mxu0 %v3188
    %3251 = vmatpush.msra.mxu0 %v3184
    %3252 = vmatpush.msra.mxu0 %v3180
    %3253 = vmatpush.msra.mxu0 %v3176
    %3254 = vmatpush.msra.mxu0 %v3172
    %3255 = vmatpush.msra.mxu0 %v3168
    %3256 = vmatpush.msra.mxu0 %v3164
    %3257 = vmatpush.msra.mxu0 %v3160
    %3258 = vmatpush.msra.mxu0 %v3156
    %3259 = vmatmul.f32.gmra.mxu0 %v3089
    %v3260 = vpop.f32.mrf.mxu0
    %v3261 = vadd.f32 %v3220, %v3260
    %3262 = vdwg.mxu0
    %3263 = vmatpush.msra.mxu0 %v3217
    %3264 = vmatpush.msra.mxu0 %v3213
    %3265 = vmatpush.msra.mxu0 %v3209
    %3266 = vmatpush.msra.mxu0 %v3205
    %3267 = vmatpush.msra.mxu0 %v3201
    %3268 = vmatpush.msra.mxu0 %v3197
    %3269 = vmatpush.msra.mxu0 %v3193
    %3270 = vmatpush.msra.mxu0 %v3189
    %3271 = vmatpush.msra.mxu0 %v3185
    %3272 = vmatpush.msra.mxu0 %v3181
    %3273 = vmatpush.msra.mxu0 %v3177
    %3274 = vmatpush.msra.mxu0 %v3173
    %3275 = vmatpush.msra.mxu0 %v3169
    %3276 = vmatpush.msra.mxu0 %v3165
    %3277 = vmatpush.msra.mxu0 %v3161
    %3278 = vmatpush.msra.mxu0 %v3157
    %3279 = vmatmul.f32.gmra.mxu0 %v3089
    %v3280 = vpop.f32.mrf.mxu0
    %v3281 = vadd.f32 %v3221, %v3280
    %3282 = vdwg.mxu0
    %3283 = vmatpush.msra.mxu0 %v3218
    %3284 = vmatpush.msra.mxu0 %v3214
    %3285 = vmatpush.msra.mxu0 %v3210
    %3286 = vmatpush.msra.mxu0 %v3206
    %3287 = vmatpush.msra.mxu0 %v3202
    %3288 = vmatpush.msra.mxu0 %v3198
    %3289 = vmatpush.msra.mxu0 %v3194
    %3290 = vmatpush.msra.mxu0 %v3190
    %3291 = vmatpush.msra.mxu0 %v3186
    %3292 = vmatpush.msra.mxu0 %v3182
    %3293 = vmatpush.msra.mxu0 %v3178
    %3294 = vmatpush.msra.mxu0 %v3174
    %3295 = vmatpush.msra.mxu0 %v3170
    %3296 = vmatpush.msra.mxu0 %v3166
    %3297 = vmatpush.msra.mxu0 %v3162
    %3298 = vmatpush.msra.mxu0 %v3158
    %3299 = vmatmul.f32.gmra.mxu0 %v3089
    %v3300 = vpop.f32.mrf.mxu0
    %v3301 = vadd.f32 %v3222, %v3300
    %3302 = vdwg.mxu0
    %v3303 = vld [vmem:[#allocation8] sm:$0xff]
    %v3304 = vld [vmem:[#allocation8 + $0x8] sm:$0xff]
    %v3305 = vld [vmem:[#allocation8 + $0x10] sm:$0xff]
    %v3306 = vld [vmem:[#allocation8 + $0x18] sm:$0xff]
    %v3307 = vld [vmem:[#allocation8 + $0x20] sm:$0xff]
    %v3308 = vld [vmem:[#allocation8 + $0x28] sm:$0xff]
    %v3309 = vld [vmem:[#allocation8 + $0x30] sm:$0xff]
    %v3310 = vld [vmem:[#allocation8 + $0x38] sm:$0xff]
    %v3311 = vld [vmem:[#allocation8 + $0x40] sm:$0xff]
    %v3312 = vld [vmem:[#allocation8 + $0x48] sm:$0xff]
    %v3313 = vld [vmem:[#allocation8 + $0x50] sm:$0xff]
    %v3314 = vld [vmem:[#allocation8 + $0x58] sm:$0xff]
    %v3315 = vld [vmem:[#allocation8 + $0x60] sm:$0xff]
    %v3316 = vld [vmem:[#allocation8 + $0x68] sm:$0xff]
    %v3317 = vld [vmem:[#allocation8 + $0x70] sm:$0xff]
    %v3318 = vld [vmem:[#allocation8 + $0x78] sm:$0xff]
    %v3319 = vld [vmem:[#allocation8 + $0x80] sm:$0xff]
    %v3320 = vld [vmem:[#allocation8 + $0x88] sm:$0xff]
    %v3321 = vld [vmem:[#allocation8 + $0x90] sm:$0xff]
    %v3322 = vld [vmem:[#allocation8 + $0x98] sm:$0xff]
    %v3323 = vld [vmem:[#allocation8 + $0xa0] sm:$0xff]
    %v3324 = vld [vmem:[#allocation8 + $0xa8] sm:$0xff]
    %v3325 = vld [vmem:[#allocation8 + $0xb0] sm:$0xff]
    %v3326 = vld [vmem:[#allocation8 + $0xb8] sm:$0xff]
    %v3327 = vld [vmem:[#allocation8 + $0xc0] sm:$0xff]
    %v3328 = vld [vmem:[#allocation8 + $0xc8] sm:$0xff]
    %v3329 = vld [vmem:[#allocation8 + $0xd0] sm:$0xff]
    %v3330 = vld [vmem:[#allocation8 + $0xd8] sm:$0xff]
    %v3331 = vld [vmem:[#allocation8 + $0xe0] sm:$0xff]
    %v3332 = vld [vmem:[#allocation8 + $0xe8] sm:$0xff]
    %v3333 = vld [vmem:[#allocation8 + $0xf0] sm:$0xff]
    %v3334 = vld [vmem:[#allocation8 + $0xf8] sm:$0xff]
    %v3335 = vld [vmem:[#allocation8 + $0x100] sm:$0xff]
    %v3336 = vld [vmem:[#allocation8 + $0x108] sm:$0xff]
    %v3337 = vld [vmem:[#allocation8 + $0x110] sm:$0xff]
    %v3338 = vld [vmem:[#allocation8 + $0x118] sm:$0xff]
    %v3339 = vld [vmem:[#allocation8 + $0x120] sm:$0xff]
    %v3340 = vld [vmem:[#allocation8 + $0x128] sm:$0xff]
    %v3341 = vld [vmem:[#allocation8 + $0x130] sm:$0xff]
    %v3342 = vld [vmem:[#allocation8 + $0x138] sm:$0xff]
    %v3343 = vld [vmem:[#allocation8 + $0x140] sm:$0xff]
    %v3344 = vld [vmem:[#allocation8 + $0x148] sm:$0xff]
    %v3345 = vld [vmem:[#allocation8 + $0x150] sm:$0xff]
    %v3346 = vld [vmem:[#allocation8 + $0x158] sm:$0xff]
    %v3347 = vld [vmem:[#allocation8 + $0x160] sm:$0xff]
    %v3348 = vld [vmem:[#allocation8 + $0x168] sm:$0xff]
    %v3349 = vld [vmem:[#allocation8 + $0x170] sm:$0xff]
    %v3350 = vld [vmem:[#allocation8 + $0x178] sm:$0xff]
    %v3351 = vld [vmem:[#allocation8 + $0x180] sm:$0xff]
    %v3352 = vld [vmem:[#allocation8 + $0x188] sm:$0xff]
    %v3353 = vld [vmem:[#allocation8 + $0x190] sm:$0xff]
    %v3354 = vld [vmem:[#allocation8 + $0x198] sm:$0xff]
    %v3355 = vld [vmem:[#allocation8 + $0x1a0] sm:$0xff]
    %v3356 = vld [vmem:[#allocation8 + $0x1a8] sm:$0xff]
    %v3357 = vld [vmem:[#allocation8 + $0x1b0] sm:$0xff]
    %v3358 = vld [vmem:[#allocation8 + $0x1b8] sm:$0xff]
    %v3359 = vld [vmem:[#allocation8 + $0x1c0] sm:$0xff]
    %v3360 = vld [vmem:[#allocation8 + $0x1c8] sm:$0xff]
    %v3361 = vld [vmem:[#allocation8 + $0x1d0] sm:$0xff]
    %v3362 = vld [vmem:[#allocation8 + $0x1d8] sm:$0xff]
    %v3363 = vld [vmem:[#allocation8 + $0x1e0] sm:$0xff]
    %v3364 = vld [vmem:[#allocation8 + $0x1e8] sm:$0xff]
    %v3365 = vld [vmem:[#allocation8 + $0x1f0] sm:$0xff]
    %v3366 = vld [vmem:[#allocation8 + $0x1f8] sm:$0xff]
    %v3367 = vld [vmem:[#allocation2 + $0x60] sm:$0xff]
    %v3368 = vld [vmem:[#allocation2 + $0x68] sm:$0xff]
    %v3369 = vld [vmem:[#allocation2 + $0x70] sm:$0xff]
    %v3370 = vld [vmem:[#allocation2 + $0x78] sm:$0xff]
    %3371 = vmatpush.msra.mxu0 %v3363
    %3372 = vmatpush.msra.mxu0 %v3359
    %3373 = vmatpush.msra.mxu0 %v3355
    %3374 = vmatpush.msra.mxu0 %v3351
    %3375 = vmatpush.msra.mxu0 %v3347
    %3376 = vmatpush.msra.mxu0 %v3343
    %3377 = vmatpush.msra.mxu0 %v3339
    %3378 = vmatpush.msra.mxu0 %v3335
    %3379 = vmatpush.msra.mxu0 %v3331
    %3380 = vmatpush.msra.mxu0 %v3327
    %3381 = vmatpush.msra.mxu0 %v3323
    %3382 = vmatpush.msra.mxu0 %v3319
    %3383 = vmatpush.msra.mxu0 %v3315
    %3384 = vmatpush.msra.mxu0 %v3311
    %3385 = vmatpush.msra.mxu0 %v3307
    %3386 = vmatpush.msra.mxu0 %v3303
    %3387 = vmatmul.f32.gmra.mxu0 %v3152
    %v3388 = vpop.f32.mrf.mxu0
    %v3389 = vadd.f32 %v3367, %v3388
    %3390 = vdwg.mxu0
    %3391 = vmatpush.msra.mxu0 %v3364
    %3392 = vmatpush.msra.mxu0 %v3360
    %3393 = vmatpush.msra.mxu0 %v3356
    %3394 = vmatpush.msra.mxu0 %v3352
    %3395 = vmatpush.msra.mxu0 %v3348
    %3396 = vmatpush.msra.mxu0 %v3344
    %3397 = vmatpush.msra.mxu0 %v3340
    %3398 = vmatpush.msra.mxu0 %v3336
    %3399 = vmatpush.msra.mxu0 %v3332
    %3400 = vmatpush.msra.mxu0 %v3328
    %3401 = vmatpush.msra.mxu0 %v3324
    %3402 = vmatpush.msra.mxu0 %v3320
    %3403 = vmatpush.msra.mxu0 %v3316
    %3404 = vmatpush.msra.mxu0 %v3312
    %3405 = vmatpush.msra.mxu0 %v3308
    %3406 = vmatpush.msra.mxu0 %v3304
    %3407 = vmatmul.f32.gmra.mxu0 %v3152
    %v3408 = vpop.f32.mrf.mxu0
    %v3409 = vadd.f32 %v3368, %v3408
    %3410 = vdwg.mxu0
    %3411 = vmatpush.msra.mxu0 %v3365
    %3412 = vmatpush.msra.mxu0 %v3361
    %3413 = vmatpush.msra.mxu0 %v3357
    %3414 = vmatpush.msra.mxu0 %v3353
    %3415 = vmatpush.msra.mxu0 %v3349
    %3416 = vmatpush.msra.mxu0 %v3345
    %3417 = vmatpush.msra.mxu0 %v3341
    %3418 = vmatpush.msra.mxu0 %v3337
    %3419 = vmatpush.msra.mxu0 %v3333
    %3420 = vmatpush.msra.mxu0 %v3329
    %3421 = vmatpush.msra.mxu0 %v3325
    %3422 = vmatpush.msra.mxu0 %v3321
    %3423 = vmatpush.msra.mxu0 %v3317
    %3424 = vmatpush.msra.mxu0 %v3313
    %3425 = vmatpush.msra.mxu0 %v3309
    %3426 = vmatpush.msra.mxu0 %v3305
    %3427 = vmatmul.f32.gmra.mxu0 %v3152
    %v3428 = vpop.f32.mrf.mxu0
    %v3429 = vadd.f32 %v3369, %v3428
    %3430 = vdwg.mxu0
    %3431 = vmatpush.msra.mxu0 %v3366
    %3432 = vmatpush.msra.mxu0 %v3362
    %3433 = vmatpush.msra.mxu0 %v3358
    %3434 = vmatpush.msra.mxu0 %v3354
    %3435 = vmatpush.msra.mxu0 %v3350
    %3436 = vmatpush.msra.mxu0 %v3346
    %3437 = vmatpush.msra.mxu0 %v3342
    %3438 = vmatpush.msra.mxu0 %v3338
    %3439 = vmatpush.msra.mxu0 %v3334
    %3440 = vmatpush.msra.mxu0 %v3330
    %3441 = vmatpush.msra.mxu0 %v3326
    %3442 = vmatpush.msra.mxu0 %v3322
    %3443 = vmatpush.msra.mxu0 %v3318
    %3444 = vmatpush.msra.mxu0 %v3314
    %3445 = vmatpush.msra.mxu0 %v3310
    %3446 = vmatpush.msra.mxu0 %v3306
    %3447 = vmatmul.f32.gmra.mxu0 %v3152
    %v3448 = vpop.f32.mrf.mxu0
    %v3449 = vadd.f32 %v3370, %v3448
    %3450 = vdwg.mxu0
    %v3451 = vxor.u32 %v3241, 2147483648
    %v3452 = vxor.u32 %v3261, 2147483648
    %v3453 = vmul.f32 %v3451, 1.442695
    %v3454 = vpow.pop %v3453
    %v3455 = vmul.f32 %v3452, 1.442695
    %v3456 = vpow.pop %v3455
    %v3457 = vadd.f32 %v3454, 1.0
    %v3458 = vadd.f32 %v3456, 1.0
    %v3459 = vrcp.pop %v3457
    %v3460 = vmul.f32 %v3457, %v3459
    %v3461 = vsub.f32 1.0, %v3460
    %v3462 = vmul.f32 %v3459, %v3461
    %v3463 = vadd.f32 %v3459, %v3462
    %vm3464 = vweird.f32 %v3457
    %vm3465 = vweird.f32 %v3459
    %vm3466 = vmor %vm3464, %vm3465
    %v3467 = vsel %vm3466, %v3459, %v3463
    %v3468 = vand.u32 2147483647, %v3457
    %vm3469 = vcmp.eq.f32.partialorder %v3468, 8.507059e+37
    %v3470 = vand.u32 %v3457, 2147483648
    %v3471 = vor.u32 1.1754944e-38, %v3470
    %v3472 = vsel %vm3469, %v3471, %v3467
    %v3473 = vmul.f32 1.0, %v3472
    %v3474 = vrcp.pop %v3458
    %v3475 = vmul.f32 %v3458, %v3474
    %v3476 = vsub.f32 1.0, %v3475
    %v3477 = vmul.f32 %v3474, %v3476
    %v3478 = vadd.f32 %v3474, %v3477
    %vm3479 = vweird.f32 %v3458
    %vm3480 = vweird.f32 %v3474
    %vm3481 = vmor %vm3479, %vm3480
    %v3482 = vsel %vm3481, %v3474, %v3478
    %v3483 = vand.u32 2147483647, %v3458
    %vm3484 = vcmp.eq.f32.partialorder %v3483, 8.507059e+37
    %v3485 = vand.u32 %v3458, 2147483648
    %v3486 = vor.u32 1.1754944e-38, %v3485
    %v3487 = vsel %vm3484, %v3486, %v3482
    %v3488 = vmul.f32 1.0, %v3487
    %v3489 = vtanh.pop %v3281
    %v3490 = vxor.u32 %v3301, 2147483648
    %v3491 = vmul.f32 %v3490, 1.442695
    %v3492 = vpow.pop %v3491
    %v3493 = vadd.f32 %v3492, 1.0
    %v3494 = vrcp.pop %v3493
    %v3495 = vmul.f32 %v3493, %v3494
    %v3496 = vsub.f32 1.0, %v3495
    %v3497 = vmul.f32 %v3494, %v3496
    %v3498 = vadd.f32 %v3494, %v3497
    %vm3499 = vweird.f32 %v3493
    %vm3500 = vweird.f32 %v3494
    %vm3501 = vmor %vm3499, %vm3500
    %v3502 = vsel %vm3501, %v3494, %v3498
    %v3503 = vand.u32 2147483647, %v3493
    %vm3504 = vcmp.eq.f32.partialorder %v3503, 8.507059e+37
    %v3505 = vand.u32 %v3493, 2147483648
    %v3506 = vor.u32 1.1754944e-38, %v3505
    %v3507 = vsel %vm3504, %v3506, %v3502
    %v3508 = vmul.f32 1.0, %v3507
    %v3509 = vmul.f32 %v3488, %v3087
    %v3510 = vmul.f32 %v3473, %v3489
    %v3511 = vadd.f32 %v3509, %v3510
    %v3512 = vtanh.pop %v3511
    %v3513 = vmul.f32 %v3508, %v3512
    %v3514 = vxor.u32 %v3389, 2147483648
    %v3515 = vxor.u32 %v3409, 2147483648
    %v3516 = vmul.f32 %v3514, 1.442695
    %v3517 = vpow.pop %v3516
    %v3518 = vmul.f32 %v3515, 1.442695
    %v3519 = vpow.pop %v3518
    %v3520 = vadd.f32 %v3517, 1.0
    %v3521 = vadd.f32 %v3519, 1.0
    %v3522 = vrcp.pop %v3520
    %v3523 = vmul.f32 %v3520, %v3522
    %v3524 = vsub.f32 1.0, %v3523
    %v3525 = vmul.f32 %v3522, %v3524
    %v3526 = vadd.f32 %v3522, %v3525
    %vm3527 = vweird.f32 %v3520
    %vm3528 = vweird.f32 %v3522
    %vm3529 = vmor %vm3527, %vm3528
    %v3530 = vsel %vm3529, %v3522, %v3526
    %v3531 = vand.u32 2147483647, %v3520
    %vm3532 = vcmp.eq.f32.partialorder %v3531, 8.507059e+37
    %v3533 = vand.u32 %v3520, 2147483648
    %v3534 = vor.u32 1.1754944e-38, %v3533
    %v3535 = vsel %vm3532, %v3534, %v3530
    %v3536 = vmul.f32 1.0, %v3535
    %v3537 = vrcp.pop %v3521
    %v3538 = vmul.f32 %v3521, %v3537
    %v3539 = vsub.f32 1.0, %v3538
    %v3540 = vmul.f32 %v3537, %v3539
    %v3541 = vadd.f32 %v3537, %v3540
    %vm3542 = vweird.f32 %v3521
    %vm3543 = vweird.f32 %v3537
    %vm3544 = vmor %vm3542, %vm3543
    %v3545 = vsel %vm3544, %v3537, %v3541
    %v3546 = vand.u32 2147483647, %v3521
    %vm3547 = vcmp.eq.f32.partialorder %v3546, 8.507059e+37
    %v3548 = vand.u32 %v3521, 2147483648
    %v3549 = vor.u32 1.1754944e-38, %v3548
    %v3550 = vsel %vm3547, %v3549, %v3545
    %v3551 = vmul.f32 1.0, %v3550
    %v3552 = vtanh.pop %v3429
    %v3553 = vxor.u32 %v3449, 2147483648
    %v3554 = vmul.f32 %v3553, 1.442695
    %v3555 = vpow.pop %v3554
    %v3556 = vadd.f32 %v3555, 1.0
    %v3557 = vrcp.pop %v3556
    %v3558 = vmul.f32 %v3556, %v3557
    %v3559 = vsub.f32 1.0, %v3558
    %v3560 = vmul.f32 %v3557, %v3559
    %v3561 = vadd.f32 %v3557, %v3560
    %vm3562 = vweird.f32 %v3556
    %vm3563 = vweird.f32 %v3557
    %vm3564 = vmor %vm3562, %vm3563
    %v3565 = vsel %vm3564, %v3557, %v3561
    %v3566 = vand.u32 2147483647, %v3556
    %vm3567 = vcmp.eq.f32.partialorder %v3566, 8.507059e+37
    %v3568 = vand.u32 %v3556, 2147483648
    %v3569 = vor.u32 1.1754944e-38, %v3568
    %v3570 = vsel %vm3567, %v3569, %v3565
    %v3571 = vmul.f32 1.0, %v3570
    %v3572 = vmul.f32 %v3551, %v3150
    %v3573 = vmul.f32 %v3536, %v3552
    %v3574 = vadd.f32 %v3572, %v3573
    %v3575 = vtanh.pop %v3574
    %v3576 = vmul.f32 %v3571, %v3575
    %3577 = vst [vmem:[#allocation15 + $0x60] sm:$0xff] %v3513
    %3578 = vst [vmem:[#allocation15 + $0x18] sm:$0xff] %v3576
    %v3579 = vld [vmem:[#allocation6] sm:$0xff]
    %v3580 = vld [vmem:[#allocation6 + $0x8] sm:$0xff]
    %v3581 = vld [vmem:[#allocation6 + $0x10] sm:$0xff]
    %v3582 = vld [vmem:[#allocation6 + $0x18] sm:$0xff]
    %v3583 = vld [vmem:[#allocation6 + $0x20] sm:$0xff]
    %v3584 = vld [vmem:[#allocation6 + $0x28] sm:$0xff]
    %v3585 = vld [vmem:[#allocation6 + $0x30] sm:$0xff]
    %v3586 = vld [vmem:[#allocation6 + $0x38] sm:$0xff]
    %v3587 = vld [vmem:[#allocation6 + $0x40] sm:$0xff]
    %v3588 = vld [vmem:[#allocation6 + $0x48] sm:$0xff]
    %v3589 = vld [vmem:[#allocation6 + $0x50] sm:$0xff]
    %v3590 = vld [vmem:[#allocation6 + $0x58] sm:$0xff]
    %v3591 = vld [vmem:[#allocation6 + $0x60] sm:$0xff]
    %v3592 = vld [vmem:[#allocation6 + $0x68] sm:$0xff]
    %v3593 = vld [vmem:[#allocation6 + $0x70] sm:$0xff]
    %v3594 = vld [vmem:[#allocation6 + $0x78] sm:$0xff]
    %v3595 = vld [vmem:[#allocation6 + $0x80] sm:$0xff]
    %v3596 = vld [vmem:[#allocation6 + $0x88] sm:$0xff]
    %v3597 = vld [vmem:[#allocation6 + $0x90] sm:$0xff]
    %v3598 = vld [vmem:[#allocation6 + $0x98] sm:$0xff]
    %v3599 = vld [vmem:[#allocation6 + $0xa0] sm:$0xff]
    %v3600 = vld [vmem:[#allocation6 + $0xa8] sm:$0xff]
    %v3601 = vld [vmem:[#allocation6 + $0xb0] sm:$0xff]
    %v3602 = vld [vmem:[#allocation6 + $0xb8] sm:$0xff]
    %v3603 = vld [vmem:[#allocation6 + $0xc0] sm:$0xff]
    %v3604 = vld [vmem:[#allocation6 + $0xc8] sm:$0xff]
    %v3605 = vld [vmem:[#allocation6 + $0xd0] sm:$0xff]
    %v3606 = vld [vmem:[#allocation6 + $0xd8] sm:$0xff]
    %v3607 = vld [vmem:[#allocation6 + $0xe0] sm:$0xff]
    %v3608 = vld [vmem:[#allocation6 + $0xe8] sm:$0xff]
    %v3609 = vld [vmem:[#allocation6 + $0xf0] sm:$0xff]
    %v3610 = vld [vmem:[#allocation6 + $0xf8] sm:$0xff]
    %v3611 = vld [vmem:[#allocation6 + $0x100] sm:$0xff]
    %v3612 = vld [vmem:[#allocation6 + $0x108] sm:$0xff]
    %v3613 = vld [vmem:[#allocation6 + $0x110] sm:$0xff]
    %v3614 = vld [vmem:[#allocation6 + $0x118] sm:$0xff]
    %v3615 = vld [vmem:[#allocation6 + $0x120] sm:$0xff]
    %v3616 = vld [vmem:[#allocation6 + $0x128] sm:$0xff]
    %v3617 = vld [vmem:[#allocation6 + $0x130] sm:$0xff]
    %v3618 = vld [vmem:[#allocation6 + $0x138] sm:$0xff]
    %v3619 = vld [vmem:[#allocation6 + $0x140] sm:$0xff]
    %v3620 = vld [vmem:[#allocation6 + $0x148] sm:$0xff]
    %v3621 = vld [vmem:[#allocation6 + $0x150] sm:$0xff]
    %v3622 = vld [vmem:[#allocation6 + $0x158] sm:$0xff]
    %v3623 = vld [vmem:[#allocation6 + $0x160] sm:$0xff]
    %v3624 = vld [vmem:[#allocation6 + $0x168] sm:$0xff]
    %v3625 = vld [vmem:[#allocation6 + $0x170] sm:$0xff]
    %v3626 = vld [vmem:[#allocation6 + $0x178] sm:$0xff]
    %v3627 = vld [vmem:[#allocation6 + $0x180] sm:$0xff]
    %v3628 = vld [vmem:[#allocation6 + $0x188] sm:$0xff]
    %v3629 = vld [vmem:[#allocation6 + $0x190] sm:$0xff]
    %v3630 = vld [vmem:[#allocation6 + $0x198] sm:$0xff]
    %v3631 = vld [vmem:[#allocation6 + $0x1a0] sm:$0xff]
    %v3632 = vld [vmem:[#allocation6 + $0x1a8] sm:$0xff]
    %v3633 = vld [vmem:[#allocation6 + $0x1b0] sm:$0xff]
    %v3634 = vld [vmem:[#allocation6 + $0x1b8] sm:$0xff]
    %v3635 = vld [vmem:[#allocation6 + $0x1c0] sm:$0xff]
    %v3636 = vld [vmem:[#allocation6 + $0x1c8] sm:$0xff]
    %v3637 = vld [vmem:[#allocation6 + $0x1d0] sm:$0xff]
    %v3638 = vld [vmem:[#allocation6 + $0x1d8] sm:$0xff]
    %v3639 = vld [vmem:[#allocation6 + $0x1e0] sm:$0xff]
    %v3640 = vld [vmem:[#allocation6 + $0x1e8] sm:$0xff]
    %v3641 = vld [vmem:[#allocation6 + $0x1f0] sm:$0xff]
    %v3642 = vld [vmem:[#allocation6 + $0x1f8] sm:$0xff]
    %v3643 = vld [vmem:[#allocation2 + $0x1c0] sm:$0xff]
    %v3644 = vld [vmem:[#allocation2 + $0x1c8] sm:$0xff]
    %v3645 = vld [vmem:[#allocation2 + $0x1d0] sm:$0xff]
    %v3646 = vld [vmem:[#allocation2 + $0x1d8] sm:$0xff]
    %3647 = vmatpush.msra.mxu0 %v3639
    %3648 = vmatpush.msra.mxu0 %v3635
    %3649 = vmatpush.msra.mxu0 %v3631
    %3650 = vmatpush.msra.mxu0 %v3627
    %3651 = vmatpush.msra.mxu0 %v3623
    %3652 = vmatpush.msra.mxu0 %v3619
    %3653 = vmatpush.msra.mxu0 %v3615
    %3654 = vmatpush.msra.mxu0 %v3611
    %3655 = vmatpush.msra.mxu0 %v3607
    %3656 = vmatpush.msra.mxu0 %v3603
    %3657 = vmatpush.msra.mxu0 %v3599
    %3658 = vmatpush.msra.mxu0 %v3595
    %3659 = vmatpush.msra.mxu0 %v3591
    %3660 = vmatpush.msra.mxu0 %v3587
    %3661 = vmatpush.msra.mxu0 %v3583
    %3662 = vmatpush.msra.mxu0 %v3579
    %3663 = vmatmul.f32.gmra.mxu0 %v3513
    %v3664 = vpop.f32.mrf.mxu0
    %v3665 = vadd.f32 %v3643, %v3664
    %3666 = vdwg.mxu0
    %3667 = vmatpush.msra.mxu0 %v3640
    %3668 = vmatpush.msra.mxu0 %v3636
    %3669 = vmatpush.msra.mxu0 %v3632
    %3670 = vmatpush.msra.mxu0 %v3628
    %3671 = vmatpush.msra.mxu0 %v3624
    %3672 = vmatpush.msra.mxu0 %v3620
    %3673 = vmatpush.msra.mxu0 %v3616
    %3674 = vmatpush.msra.mxu0 %v3612
    %3675 = vmatpush.msra.mxu0 %v3608
    %3676 = vmatpush.msra.mxu0 %v3604
    %3677 = vmatpush.msra.mxu0 %v3600
    %3678 = vmatpush.msra.mxu0 %v3596
    %3679 = vmatpush.msra.mxu0 %v3592
    %3680 = vmatpush.msra.mxu0 %v3588
    %3681 = vmatpush.msra.mxu0 %v3584
    %3682 = vmatpush.msra.mxu0 %v3580
    %3683 = vmatmul.f32.gmra.mxu0 %v3513
    %v3684 = vpop.f32.mrf.mxu0
    %v3685 = vadd.f32 %v3644, %v3684
    %3686 = vdwg.mxu0
    %3687 = vmatpush.msra.mxu0 %v3641
    %3688 = vmatpush.msra.mxu0 %v3637
    %3689 = vmatpush.msra.mxu0 %v3633
    %3690 = vmatpush.msra.mxu0 %v3629
    %3691 = vmatpush.msra.mxu0 %v3625
    %3692 = vmatpush.msra.mxu0 %v3621
    %3693 = vmatpush.msra.mxu0 %v3617
    %3694 = vmatpush.msra.mxu0 %v3613
    %3695 = vmatpush.msra.mxu0 %v3609
    %3696 = vmatpush.msra.mxu0 %v3605
    %3697 = vmatpush.msra.mxu0 %v3601
    %3698 = vmatpush.msra.mxu0 %v3597
    %3699 = vmatpush.msra.mxu0 %v3593
    %3700 = vmatpush.msra.mxu0 %v3589
    %3701 = vmatpush.msra.mxu0 %v3585
    %3702 = vmatpush.msra.mxu0 %v3581
    %3703 = vmatmul.f32.gmra.mxu0 %v3513
    %v3704 = vpop.f32.mrf.mxu0
    %v3705 = vadd.f32 %v3645, %v3704
    %3706 = vdwg.mxu0
    %3707 = vmatpush.msra.mxu0 %v3642
    %3708 = vmatpush.msra.mxu0 %v3638
    %3709 = vmatpush.msra.mxu0 %v3634
    %3710 = vmatpush.msra.mxu0 %v3630
    %3711 = vmatpush.msra.mxu0 %v3626
    %3712 = vmatpush.msra.mxu0 %v3622
    %3713 = vmatpush.msra.mxu0 %v3618
    %3714 = vmatpush.msra.mxu0 %v3614
    %3715 = vmatpush.msra.mxu0 %v3610
    %3716 = vmatpush.msra.mxu0 %v3606
    %3717 = vmatpush.msra.mxu0 %v3602
    %3718 = vmatpush.msra.mxu0 %v3598
    %3719 = vmatpush.msra.mxu0 %v3594
    %3720 = vmatpush.msra.mxu0 %v3590
    %3721 = vmatpush.msra.mxu0 %v3586
    %3722 = vmatpush.msra.mxu0 %v3582
    %3723 = vmatmul.f32.gmra.mxu0 %v3513
    %v3724 = vpop.f32.mrf.mxu0
    %v3725 = vadd.f32 %v3646, %v3724
    %3726 = vdwg.mxu0
    %v3727 = vld [vmem:[#allocation8] sm:$0xff]
    %v3728 = vld [vmem:[#allocation8 + $0x8] sm:$0xff]
    %v3729 = vld [vmem:[#allocation8 + $0x10] sm:$0xff]
    %v3730 = vld [vmem:[#allocation8 + $0x18] sm:$0xff]
    %v3731 = vld [vmem:[#allocation8 + $0x20] sm:$0xff]
    %v3732 = vld [vmem:[#allocation8 + $0x28] sm:$0xff]
    %v3733 = vld [vmem:[#allocation8 + $0x30] sm:$0xff]
    %v3734 = vld [vmem:[#allocation8 + $0x38] sm:$0xff]
    %v3735 = vld [vmem:[#allocation8 + $0x40] sm:$0xff]
    %v3736 = vld [vmem:[#allocation8 + $0x48] sm:$0xff]
    %v3737 = vld [vmem:[#allocation8 + $0x50] sm:$0xff]
    %v3738 = vld [vmem:[#allocation8 + $0x58] sm:$0xff]
    %v3739 = vld [vmem:[#allocation8 + $0x60] sm:$0xff]
    %v3740 = vld [vmem:[#allocation8 + $0x68] sm:$0xff]
    %v3741 = vld [vmem:[#allocation8 + $0x70] sm:$0xff]
    %v3742 = vld [vmem:[#allocation8 + $0x78] sm:$0xff]
    %v3743 = vld [vmem:[#allocation8 + $0x80] sm:$0xff]
    %v3744 = vld [vmem:[#allocation8 + $0x88] sm:$0xff]
    %v3745 = vld [vmem:[#allocation8 + $0x90] sm:$0xff]
    %v3746 = vld [vmem:[#allocation8 + $0x98] sm:$0xff]
    %v3747 = vld [vmem:[#allocation8 + $0xa0] sm:$0xff]
    %v3748 = vld [vmem:[#allocation8 + $0xa8] sm:$0xff]
    %v3749 = vld [vmem:[#allocation8 + $0xb0] sm:$0xff]
    %v3750 = vld [vmem:[#allocation8 + $0xb8] sm:$0xff]
    %v3751 = vld [vmem:[#allocation8 + $0xc0] sm:$0xff]
    %v3752 = vld [vmem:[#allocation8 + $0xc8] sm:$0xff]
    %v3753 = vld [vmem:[#allocation8 + $0xd0] sm:$0xff]
    %v3754 = vld [vmem:[#allocation8 + $0xd8] sm:$0xff]
    %v3755 = vld [vmem:[#allocation8 + $0xe0] sm:$0xff]
    %v3756 = vld [vmem:[#allocation8 + $0xe8] sm:$0xff]
    %v3757 = vld [vmem:[#allocation8 + $0xf0] sm:$0xff]
    %v3758 = vld [vmem:[#allocation8 + $0xf8] sm:$0xff]
    %v3759 = vld [vmem:[#allocation8 + $0x100] sm:$0xff]
    %v3760 = vld [vmem:[#allocation8 + $0x108] sm:$0xff]
    %v3761 = vld [vmem:[#allocation8 + $0x110] sm:$0xff]
    %v3762 = vld [vmem:[#allocation8 + $0x118] sm:$0xff]
    %v3763 = vld [vmem:[#allocation8 + $0x120] sm:$0xff]
    %v3764 = vld [vmem:[#allocation8 + $0x128] sm:$0xff]
    %v3765 = vld [vmem:[#allocation8 + $0x130] sm:$0xff]
    %v3766 = vld [vmem:[#allocation8 + $0x138] sm:$0xff]
    %v3767 = vld [vmem:[#allocation8 + $0x140] sm:$0xff]
    %v3768 = vld [vmem:[#allocation8 + $0x148] sm:$0xff]
    %v3769 = vld [vmem:[#allocation8 + $0x150] sm:$0xff]
    %v3770 = vld [vmem:[#allocation8 + $0x158] sm:$0xff]
    %v3771 = vld [vmem:[#allocation8 + $0x160] sm:$0xff]
    %v3772 = vld [vmem:[#allocation8 + $0x168] sm:$0xff]
    %v3773 = vld [vmem:[#allocation8 + $0x170] sm:$0xff]
    %v3774 = vld [vmem:[#allocation8 + $0x178] sm:$0xff]
    %v3775 = vld [vmem:[#allocation8 + $0x180] sm:$0xff]
    %v3776 = vld [vmem:[#allocation8 + $0x188] sm:$0xff]
    %v3777 = vld [vmem:[#allocation8 + $0x190] sm:$0xff]
    %v3778 = vld [vmem:[#allocation8 + $0x198] sm:$0xff]
    %v3779 = vld [vmem:[#allocation8 + $0x1a0] sm:$0xff]
    %v3780 = vld [vmem:[#allocation8 + $0x1a8] sm:$0xff]
    %v3781 = vld [vmem:[#allocation8 + $0x1b0] sm:$0xff]
    %v3782 = vld [vmem:[#allocation8 + $0x1b8] sm:$0xff]
    %v3783 = vld [vmem:[#allocation8 + $0x1c0] sm:$0xff]
    %v3784 = vld [vmem:[#allocation8 + $0x1c8] sm:$0xff]
    %v3785 = vld [vmem:[#allocation8 + $0x1d0] sm:$0xff]
    %v3786 = vld [vmem:[#allocation8 + $0x1d8] sm:$0xff]
    %v3787 = vld [vmem:[#allocation8 + $0x1e0] sm:$0xff]
    %v3788 = vld [vmem:[#allocation8 + $0x1e8] sm:$0xff]
    %v3789 = vld [vmem:[#allocation8 + $0x1f0] sm:$0xff]
    %v3790 = vld [vmem:[#allocation8 + $0x1f8] sm:$0xff]
    %v3791 = vld [vmem:[#allocation2 + $0x20] sm:$0xff]
    %v3792 = vld [vmem:[#allocation2 + $0x28] sm:$0xff]
    %v3793 = vld [vmem:[#allocation2 + $0x30] sm:$0xff]
    %v3794 = vld [vmem:[#allocation2 + $0x38] sm:$0xff]
    %3795 = vmatpush.msra.mxu0 %v3787
    %3796 = vmatpush.msra.mxu0 %v3783
    %3797 = vmatpush.msra.mxu0 %v3779
    %3798 = vmatpush.msra.mxu0 %v3775
    %3799 = vmatpush.msra.mxu0 %v3771
    %3800 = vmatpush.msra.mxu0 %v3767
    %3801 = vmatpush.msra.mxu0 %v3763
    %3802 = vmatpush.msra.mxu0 %v3759
    %3803 = vmatpush.msra.mxu0 %v3755
    %3804 = vmatpush.msra.mxu0 %v3751
    %3805 = vmatpush.msra.mxu0 %v3747
    %3806 = vmatpush.msra.mxu0 %v3743
    %3807 = vmatpush.msra.mxu0 %v3739
    %3808 = vmatpush.msra.mxu0 %v3735
    %3809 = vmatpush.msra.mxu0 %v3731
    %3810 = vmatpush.msra.mxu0 %v3727
    %3811 = vmatmul.f32.gmra.mxu0 %v3576
    %v3812 = vpop.f32.mrf.mxu0
    %v3813 = vadd.f32 %v3791, %v3812
    %3814 = vdwg.mxu0
    %3815 = vmatpush.msra.mxu0 %v3788
    %3816 = vmatpush.msra.mxu0 %v3784
    %3817 = vmatpush.msra.mxu0 %v3780
    %3818 = vmatpush.msra.mxu0 %v3776
    %3819 = vmatpush.msra.mxu0 %v3772
    %3820 = vmatpush.msra.mxu0 %v3768
    %3821 = vmatpush.msra.mxu0 %v3764
    %3822 = vmatpush.msra.mxu0 %v3760
    %3823 = vmatpush.msra.mxu0 %v3756
    %3824 = vmatpush.msra.mxu0 %v3752
    %3825 = vmatpush.msra.mxu0 %v3748
    %3826 = vmatpush.msra.mxu0 %v3744
    %3827 = vmatpush.msra.mxu0 %v3740
    %3828 = vmatpush.msra.mxu0 %v3736
    %3829 = vmatpush.msra.mxu0 %v3732
    %3830 = vmatpush.msra.mxu0 %v3728
    %3831 = vmatmul.f32.gmra.mxu0 %v3576
    %v3832 = vpop.f32.mrf.mxu0
    %v3833 = vadd.f32 %v3792, %v3832
    %3834 = vdwg.mxu0
    %3835 = vmatpush.msra.mxu0 %v3789
    %3836 = vmatpush.msra.mxu0 %v3785
    %3837 = vmatpush.msra.mxu0 %v3781
    %3838 = vmatpush.msra.mxu0 %v3777
    %3839 = vmatpush.msra.mxu0 %v3773
    %3840 = vmatpush.msra.mxu0 %v3769
    %3841 = vmatpush.msra.mxu0 %v3765
    %3842 = vmatpush.msra.mxu0 %v3761
    %3843 = vmatpush.msra.mxu0 %v3757
    %3844 = vmatpush.msra.mxu0 %v3753
    %3845 = vmatpush.msra.mxu0 %v3749
    %3846 = vmatpush.msra.mxu0 %v3745
    %3847 = vmatpush.msra.mxu0 %v3741
    %3848 = vmatpush.msra.mxu0 %v3737
    %3849 = vmatpush.msra.mxu0 %v3733
    %3850 = vmatpush.msra.mxu0 %v3729
    %3851 = vmatmul.f32.gmra.mxu0 %v3576
    %v3852 = vpop.f32.mrf.mxu0
    %v3853 = vadd.f32 %v3793, %v3852
    %3854 = vdwg.mxu0
    %3855 = vmatpush.msra.mxu0 %v3790
    %3856 = vmatpush.msra.mxu0 %v3786
    %3857 = vmatpush.msra.mxu0 %v3782
    %3858 = vmatpush.msra.mxu0 %v3778
    %3859 = vmatpush.msra.mxu0 %v3774
    %3860 = vmatpush.msra.mxu0 %v3770
    %3861 = vmatpush.msra.mxu0 %v3766
    %3862 = vmatpush.msra.mxu0 %v3762
    %3863 = vmatpush.msra.mxu0 %v3758
    %3864 = vmatpush.msra.mxu0 %v3754
    %3865 = vmatpush.msra.mxu0 %v3750
    %3866 = vmatpush.msra.mxu0 %v3746
    %3867 = vmatpush.msra.mxu0 %v3742
    %3868 = vmatpush.msra.mxu0 %v3738
    %3869 = vmatpush.msra.mxu0 %v3734
    %3870 = vmatpush.msra.mxu0 %v3730
    %3871 = vmatmul.f32.gmra.mxu0 %v3576
    %v3872 = vpop.f32.mrf.mxu0
    %v3873 = vadd.f32 %v3794, %v3872
    %3874 = vdwg.mxu0
    %v3875 = vxor.u32 %v3665, 2147483648
    %v3876 = vxor.u32 %v3685, 2147483648
    %v3877 = vmul.f32 %v3875, 1.442695
    %v3878 = vpow.pop %v3877
    %v3879 = vmul.f32 %v3876, 1.442695
    %v3880 = vpow.pop %v3879
    %v3881 = vadd.f32 %v3878, 1.0
    %v3882 = vadd.f32 %v3880, 1.0
    %v3883 = vrcp.pop %v3881
    %v3884 = vmul.f32 %v3881, %v3883
    %v3885 = vsub.f32 1.0, %v3884
    %v3886 = vmul.f32 %v3883, %v3885
    %v3887 = vadd.f32 %v3883, %v3886
    %vm3888 = vweird.f32 %v3881
    %vm3889 = vweird.f32 %v3883
    %vm3890 = vmor %vm3888, %vm3889
    %v3891 = vsel %vm3890, %v3883, %v3887
    %v3892 = vand.u32 2147483647, %v3881
    %vm3893 = vcmp.eq.f32.partialorder %v3892, 8.507059e+37
    %v3894 = vand.u32 %v3881, 2147483648
    %v3895 = vor.u32 1.1754944e-38, %v3894
    %v3896 = vsel %vm3893, %v3895, %v3891
    %v3897 = vmul.f32 1.0, %v3896
    %v3898 = vrcp.pop %v3882
    %v3899 = vmul.f32 %v3882, %v3898
    %v3900 = vsub.f32 1.0, %v3899
    %v3901 = vmul.f32 %v3898, %v3900
    %v3902 = vadd.f32 %v3898, %v3901
    %vm3903 = vweird.f32 %v3882
    %vm3904 = vweird.f32 %v3898
    %vm3905 = vmor %vm3903, %vm3904
    %v3906 = vsel %vm3905, %v3898, %v3902
    %v3907 = vand.u32 2147483647, %v3882
    %vm3908 = vcmp.eq.f32.partialorder %v3907, 8.507059e+37
    %v3909 = vand.u32 %v3882, 2147483648
    %v3910 = vor.u32 1.1754944e-38, %v3909
    %v3911 = vsel %vm3908, %v3910, %v3906
    %v3912 = vmul.f32 1.0, %v3911
    %v3913 = vtanh.pop %v3705
    %v3914 = vxor.u32 %v3725, 2147483648
    %v3915 = vmul.f32 %v3914, 1.442695
    %v3916 = vpow.pop %v3915
    %v3917 = vadd.f32 %v3916, 1.0
    %v3918 = vrcp.pop %v3917
    %v3919 = vmul.f32 %v3917, %v3918
    %v3920 = vsub.f32 1.0, %v3919
    %v3921 = vmul.f32 %v3918, %v3920
    %v3922 = vadd.f32 %v3918, %v3921
    %vm3923 = vweird.f32 %v3917
    %vm3924 = vweird.f32 %v3918
    %vm3925 = vmor %vm3923, %vm3924
    %v3926 = vsel %vm3925, %v3918, %v3922
    %v3927 = vand.u32 2147483647, %v3917
    %vm3928 = vcmp.eq.f32.partialorder %v3927, 8.507059e+37
    %v3929 = vand.u32 %v3917, 2147483648
    %v3930 = vor.u32 1.1754944e-38, %v3929
    %v3931 = vsel %vm3928, %v3930, %v3926
    %v3932 = vmul.f32 1.0, %v3931
    %v3933 = vmul.f32 %v3912, %v3511
    %v3934 = vmul.f32 %v3897, %v3913
    %v3935 = vadd.f32 %v3933, %v3934
    %v3936 = vtanh.pop %v3935
    %v3937 = vmul.f32 %v3932, %v3936
    %v3938 = vxor.u32 %v3813, 2147483648
    %v3939 = vxor.u32 %v3833, 2147483648
    %v3940 = vmul.f32 %v3938, 1.442695
    %v3941 = vpow.pop %v3940
    %v3942 = vmul.f32 %v3939, 1.442695
    %v3943 = vpow.pop %v3942
    %v3944 = vadd.f32 %v3941, 1.0
    %v3945 = vadd.f32 %v3943, 1.0
    %v3946 = vrcp.pop %v3944
    %v3947 = vmul.f32 %v3944, %v3946
    %v3948 = vsub.f32 1.0, %v3947
    %v3949 = vmul.f32 %v3946, %v3948
    %v3950 = vadd.f32 %v3946, %v3949
    %vm3951 = vweird.f32 %v3944
    %vm3952 = vweird.f32 %v3946
    %vm3953 = vmor %vm3951, %vm3952
    %v3954 = vsel %vm3953, %v3946, %v3950
    %v3955 = vand.u32 2147483647, %v3944
    %vm3956 = vcmp.eq.f32.partialorder %v3955, 8.507059e+37
    %v3957 = vand.u32 %v3944, 2147483648
    %v3958 = vor.u32 1.1754944e-38, %v3957
    %v3959 = vsel %vm3956, %v3958, %v3954
    %v3960 = vmul.f32 1.0, %v3959
    %v3961 = vrcp.pop %v3945
    %v3962 = vmul.f32 %v3945, %v3961
    %v3963 = vsub.f32 1.0, %v3962
    %v3964 = vmul.f32 %v3961, %v3963
    %v3965 = vadd.f32 %v3961, %v3964
    %vm3966 = vweird.f32 %v3945
    %vm3967 = vweird.f32 %v3961
    %vm3968 = vmor %vm3966, %vm3967
    %v3969 = vsel %vm3968, %v3961, %v3965
    %v3970 = vand.u32 2147483647, %v3945
    %vm3971 = vcmp.eq.f32.partialorder %v3970, 8.507059e+37
    %v3972 = vand.u32 %v3945, 2147483648
    %v3973 = vor.u32 1.1754944e-38, %v3972
    %v3974 = vsel %vm3971, %v3973, %v3969
    %v3975 = vmul.f32 1.0, %v3974
    %v3976 = vtanh.pop %v3853
    %v3977 = vxor.u32 %v3873, 2147483648
    %v3978 = vmul.f32 %v3977, 1.442695
    %v3979 = vpow.pop %v3978
    %v3980 = vadd.f32 %v3979, 1.0
    %v3981 = vrcp.pop %v3980
    %v3982 = vmul.f32 %v3980, %v3981
    %v3983 = vsub.f32 1.0, %v3982
    %v3984 = vmul.f32 %v3981, %v3983
    %v3985 = vadd.f32 %v3981, %v3984
    %vm3986 = vweird.f32 %v3980
    %vm3987 = vweird.f32 %v3981
    %vm3988 = vmor %vm3986, %vm3987
    %v3989 = vsel %vm3988, %v3981, %v3985
    %v3990 = vand.u32 2147483647, %v3980
    %vm3991 = vcmp.eq.f32.partialorder %v3990, 8.507059e+37
    %v3992 = vand.u32 %v3980, 2147483648
    %v3993 = vor.u32 1.1754944e-38, %v3992
    %v3994 = vsel %vm3991, %v3993, %v3989
    %v3995 = vmul.f32 1.0, %v3994
    %v3996 = vmul.f32 %v3975, %v3574
    %v3997 = vmul.f32 %v3960, %v3976
    %v3998 = vadd.f32 %v3996, %v3997
    %v3999 = vtanh.pop %v3998
    %v4000 = vmul.f32 %v3995, %v3999
    %4001 = vst [vmem:[#allocation15 + $0x70] sm:$0xff] %v3937
    %4002 = vst [vmem:[#allocation15 + $0x8] sm:$0xff] %v4000
    %v4003 = vld [vmem:[#allocation9] sm:$0xff]
    %v4004 = vld [vmem:[#allocation9 + $0x8] sm:$0xff]
    %v4005 = vld [vmem:[#allocation9 + $0x10] sm:$0xff]
    %v4006 = vld [vmem:[#allocation9 + $0x18] sm:$0xff]
    %v4007 = vld [vmem:[#allocation9 + $0x20] sm:$0xff]
    %v4008 = vld [vmem:[#allocation9 + $0x28] sm:$0xff]
    %v4009 = vld [vmem:[#allocation9 + $0x30] sm:$0xff]
    %v4010 = vld [vmem:[#allocation9 + $0x38] sm:$0xff]
    %v4011 = vld [vmem:[#allocation9 + $0x40] sm:$0xff]
    %v4012 = vld [vmem:[#allocation9 + $0x48] sm:$0xff]
    %v4013 = vld [vmem:[#allocation9 + $0x50] sm:$0xff]
    %v4014 = vld [vmem:[#allocation9 + $0x58] sm:$0xff]
    %v4015 = vld [vmem:[#allocation9 + $0x60] sm:$0xff]
    %v4016 = vld [vmem:[#allocation9 + $0x68] sm:$0xff]
    %v4017 = vld [vmem:[#allocation9 + $0x70] sm:$0xff]
    %v4018 = vld [vmem:[#allocation9 + $0x78] sm:$0xff]
    %v4019 = vld [vmem:[#allocation11] sm:$0xff]
    %v4020 = vld [vmem:[#allocation11 + $0x8] sm:$0xff]
    %v4021 = vld [vmem:[#allocation11 + $0x10] sm:$0xff]
    %v4022 = vld [vmem:[#allocation11 + $0x18] sm:$0xff]
    %v4023 = vld [vmem:[#allocation11 + $0x20] sm:$0xff]
    %v4024 = vld [vmem:[#allocation11 + $0x28] sm:$0xff]
    %v4025 = vld [vmem:[#allocation11 + $0x30] sm:$0xff]
    %v4026 = vld [vmem:[#allocation11 + $0x38] sm:$0xff]
    %v4027 = vld [vmem:[#allocation11 + $0x40] sm:$0xff]
    %v4028 = vld [vmem:[#allocation11 + $0x48] sm:$0xff]
    %v4029 = vld [vmem:[#allocation11 + $0x50] sm:$0xff]
    %v4030 = vld [vmem:[#allocation11 + $0x58] sm:$0xff]
    %v4031 = vld [vmem:[#allocation11 + $0x60] sm:$0xff]
    %v4032 = vld [vmem:[#allocation11 + $0x68] sm:$0xff]
    %v4033 = vld [vmem:[#allocation11 + $0x70] sm:$0xff]
    %v4034 = vld [vmem:[#allocation11 + $0x78] sm:$0xff]
    %4035 = vmatpush.msra.mxu0 %v4034
    %4036 = vmatpush.msra.mxu0 %v4033
    %4037 = vmatpush.msra.mxu0 %v4032
    %4038 = vmatpush.msra.mxu0 %v4031
    %4039 = vmatpush.msra.mxu0 %v4030
    %4040 = vmatpush.msra.mxu0 %v4029
    %4041 = vmatpush.msra.mxu0 %v4028
    %4042 = vmatpush.msra.mxu0 %v4027
    %4043 = vmatpush.msra.mxu0 %v4026
    %4044 = vmatpush.msra.mxu0 %v4025
    %4045 = vmatpush.msra.mxu0 %v4024
    %4046 = vmatpush.msra.mxu0 %v4023
    %4047 = vmatpush.msra.mxu0 %v4022
    %4048 = vmatpush.msra.mxu0 %v4021
    %4049 = vmatpush.msra.mxu0 %v4020
    %4050 = vmatpush.msra.mxu0 %v4019
    %4051 = vmatmul.f32.gmra.mxu0 %v4000
    %v4052 = vpop.f32.mrf.mxu0
    %v4053 = vadd.f32 0.0, %v4052
    %4054 = vdwg.mxu0
    %4055 = vmatpush.msra.mxu0 %v4018
    %4056 = vmatpush.msra.mxu0 %v4017
    %4057 = vmatpush.msra.mxu0 %v4016
    %4058 = vmatpush.msra.mxu0 %v4015
    %4059 = vmatpush.msra.mxu0 %v4014
    %4060 = vmatpush.msra.mxu0 %v4013
    %4061 = vmatpush.msra.mxu0 %v4012
    %4062 = vmatpush.msra.mxu0 %v4011
    %4063 = vmatpush.msra.mxu0 %v4010
    %4064 = vmatpush.msra.mxu0 %v4009
    %4065 = vmatpush.msra.mxu0 %v4008
    %4066 = vmatpush.msra.mxu0 %v4007
    %4067 = vmatpush.msra.mxu0 %v4006
    %4068 = vmatpush.msra.mxu0 %v4005
    %4069 = vmatpush.msra.mxu0 %v4004
    %4070 = vmatpush.msra.mxu0 %v4003
    %4071 = vmatmul.f32.gmra.mxu0 %v3937
    %v4072 = vpop.f32.mrf.mxu0
    %v4073 = vadd.f32 %v4053, %v4072
    %4074 = vdwg.mxu0
    %v4075 = vld [vmem:[%s7] sm:$0x1]
    %v4077 = vperm.slane %v4075, 0
    %v4079 = vadd.f32 %v4073, %v4077
    %v4080 = vld [vmem:[#allocation12] sm:$0xff]
    %v4081 = vld [vmem:[#allocation12 + $0x8] sm:$0xff]
    %v4082 = vld [vmem:[#allocation12 + $0x10] sm:$0xff]
    %v4083 = vld [vmem:[#allocation12 + $0x18] sm:$0xff]
    %v4084 = vld [vmem:[#allocation12 + $0x20] sm:$0xff]
    %v4085 = vld [vmem:[#allocation12 + $0x28] sm:$0xff]
    %v4086 = vld [vmem:[#allocation12 + $0x30] sm:$0xff]
    %v4087 = vld [vmem:[#allocation12 + $0x38] sm:$0xff]
    %v4088 = vld [vmem:[#allocation12 + $0x40] sm:$0xff]
    %v4089 = vld [vmem:[#allocation12 + $0x48] sm:$0xff]
    %v4090 = vld [vmem:[#allocation12 + $0x50] sm:$0xff]
    %v4091 = vld [vmem:[#allocation12 + $0x58] sm:$0xff]
    %v4092 = vld [vmem:[#allocation12 + $0x60] sm:$0xff]
    %v4093 = vld [vmem:[#allocation12 + $0x68] sm:$0xff]
    %v4094 = vld [vmem:[#allocation12 + $0x70] sm:$0xff]
    %v4095 = vld [vmem:[#allocation12 + $0x78] sm:$0xff]
    %v4096 = vld [vmem:[#allocation14] sm:$0xff]
    %v4097 = vld [vmem:[#allocation14 + $0x8] sm:$0xff]
    %v4098 = vld [vmem:[#allocation14 + $0x10] sm:$0xff]
    %v4099 = vld [vmem:[#allocation14 + $0x18] sm:$0xff]
    %v4100 = vld [vmem:[#allocation14 + $0x20] sm:$0xff]
    %v4101 = vld [vmem:[#allocation14 + $0x28] sm:$0xff]
    %v4102 = vld [vmem:[#allocation14 + $0x30] sm:$0xff]
    %v4103 = vld [vmem:[#allocation14 + $0x38] sm:$0xff]
    %v4104 = vld [vmem:[#allocation14 + $0x40] sm:$0xff]
    %v4105 = vld [vmem:[#allocation14 + $0x48] sm:$0xff]
    %v4106 = vld [vmem:[#allocation14 + $0x50] sm:$0xff]
    %v4107 = vld [vmem:[#allocation14 + $0x58] sm:$0xff]
    %v4108 = vld [vmem:[#allocation14 + $0x60] sm:$0xff]
    %v4109 = vld [vmem:[#allocation14 + $0x68] sm:$0xff]
    %v4110 = vld [vmem:[#allocation14 + $0x70] sm:$0xff]
    %v4111 = vld [vmem:[#allocation14 + $0x78] sm:$0xff]
    %4112 = vmatpush.msra.mxu0 %v4111
    %4113 = vmatpush.msra.mxu0 %v4110
    %4114 = vmatpush.msra.mxu0 %v4109
    %4115 = vmatpush.msra.mxu0 %v4108
    %4116 = vmatpush.msra.mxu0 %v4107
    %4117 = vmatpush.msra.mxu0 %v4106
    %4118 = vmatpush.msra.mxu0 %v4105
    %4119 = vmatpush.msra.mxu0 %v4104
    %4120 = vmatpush.msra.mxu0 %v4103
    %4121 = vmatpush.msra.mxu0 %v4102
    %4122 = vmatpush.msra.mxu0 %v4101
    %4123 = vmatpush.msra.mxu0 %v4100
    %4124 = vmatpush.msra.mxu0 %v4099
    %4125 = vmatpush.msra.mxu0 %v4098
    %4126 = vmatpush.msra.mxu0 %v4097
    %4127 = vmatpush.msra.mxu0 %v4096
    %4128 = vmatmul.f32.gmra.mxu0 %v3998
    %v4129 = vpop.f32.mrf.mxu0
    %v4130 = vadd.f32 0.0, %v4129
    %4131 = vdwg.mxu0
    %4132 = vmatpush.msra.mxu0 %v4095
    %4133 = vmatpush.msra.mxu0 %v4094
    %4134 = vmatpush.msra.mxu0 %v4093
    %4135 = vmatpush.msra.mxu0 %v4092
    %4136 = vmatpush.msra.mxu0 %v4091
    %4137 = vmatpush.msra.mxu0 %v4090
    %4138 = vmatpush.msra.mxu0 %v4089
    %4139 = vmatpush.msra.mxu0 %v4088
    %4140 = vmatpush.msra.mxu0 %v4087
    %4141 = vmatpush.msra.mxu0 %v4086
    %4142 = vmatpush.msra.mxu0 %v4085
    %4143 = vmatpush.msra.mxu0 %v4084
    %4144 = vmatpush.msra.mxu0 %v4083
    %4145 = vmatpush.msra.mxu0 %v4082
    %4146 = vmatpush.msra.mxu0 %v4081
    %4147 = vmatpush.msra.mxu0 %v4080
    %4148 = vmatmul.f32.gmra.mxu0 %v3935
    %v4149 = vpop.f32.mrf.mxu0
    %v4150 = vadd.f32 %v4130, %v4149
    %4151 = vdwg.mxu0
    %v4152 = vld [vmem:[%s10] sm:$0x1]
    %v4154 = vperm.slane %v4152, 0
    %v4156 = vadd.f32 %v4150, %v4154
    %v4157 = vmax.f32 %v4079, 0.0
    %4158 = vst [vmem:[#allocation16] sm:$0xff] %v4157
    %v4159 = vmax.f32 %v4156, 0.0
    %4160 = vst [vmem:[#allocation18] sm:$0xff] %v4159
    // Predicated region
    $region74: #{tpu_custom_call.1} parent=1 // pred_check
      _
    $region75: #{tpu_custom_call.1} parent=1 // pred_check_branch
      %4162 = sbr.rel (0) target = $region77
    $region76: #{tpu_custom_call.1} parent=1 // pred_region
      %4164 = vsyncadd [#allocation5], 0
      %s4165 = sshll.u32 [#allocation15], 4
      %s4166 = int_to_ptr.vmem [resolvable:$true] %s4165
      %s4167 = sshll.u32 %s11, 4
      %s4168 = int_to_ptr.hbm [resolvable:$true] %s4167
      %4173 = dma.vmem_to_hbm [thread:$0]  %s4166, 2048, %s4168, [#allocation5], 256, 256, 16
    $region77: #{tpu_custom_call.1} parent=1 // pred_fallthru
      _
    // Predicated region
    $region78: #{tpu_custom_call.1} parent=1 // pred_check
      _
    $region79: #{tpu_custom_call.1} parent=1 // pred_check_branch
      %4175 = sbr.rel (0) target = $region81
    $region80: #{tpu_custom_call.1} parent=1 // pred_region
      %4177 = vsyncadd [#allocation17], 0
      %s4179 = sshll.u32 [#allocation16], 4
      %s4180 = int_to_ptr.vmem [resolvable:$true] %s4179
      %s4181 = sshll.u32 %s12, 4
      %s4182 = int_to_ptr.hbm [resolvable:$true] %s4181
      %4184 = dma.vmem_to_hbm [thread:$0]  %s4180, 128, %s4182, [#allocation17]
    $region81: #{tpu_custom_call.1} parent=1 // pred_fallthru
      _
    // Predicated region
    $region82: #{tpu_custom_call.1} parent=1 // pred_check
      _
    $region83: #{tpu_custom_call.1} parent=1 // pred_check_branch
      %4186 = sbr.rel (0) target = $region85
    $region84: #{tpu_custom_call.1} parent=1 // pred_region
      %4188 = vsyncadd [#allocation17], 0
      %s4190 = sshll.u32 [#allocation18], 4
      %s4191 = int_to_ptr.vmem [resolvable:$true] %s4190
      %s4192 = sshll.u32 %s13, 4
      %s4193 = int_to_ptr.hbm [resolvable:$true] %s4192
      %4195 = dma.vmem_to_hbm [thread:$0]  %s4191, 128, %s4193, [#allocation17]
    $region85: #{tpu_custom_call.1} parent=1 // pred_fallthru
      _
    // Predicated region
    $region86: #{tpu_custom_call.1} parent=1 // pred_check
      _
    $region87: #{tpu_custom_call.1} parent=1 // pred_check_branch
      %4197 = sbr.rel (0) target = $region89
    $region88: #{tpu_custom_call.1} parent=1 // pred_region
      %4199 = dma.done [#allocation5], 2048
    $region89: #{tpu_custom_call.1} parent=1 // pred_fallthru
      _
    // Predicated region
    $region90: #{tpu_custom_call.1} parent=1 // pred_check
      _
    $region91: #{tpu_custom_call.1} parent=1 // pred_check_branch
      %4201 = sbr.rel (0) target = $region93
    $region92: #{tpu_custom_call.1} parent=1 // pred_region
      %4203 = dma.done [#allocation17], 128
    $region93: #{tpu_custom_call.1} parent=1 // pred_fallthru
      _
    // Predicated region
    $region94: #{tpu_custom_call.1} parent=1 // pred_check
      _
    $region95: #{tpu_custom_call.1} parent=1 // pred_check_branch
      %4205 = sbr.rel (0) target = $region97
    $region96: #{tpu_custom_call.1} parent=1 // pred_region
      %4207 = dma.done [#allocation17], 128
    $region97: #{tpu_custom_call.1} parent=1 // pred_fallthru
      _
    %4208 = vsyncpa [#allocation4], 1
    %4209 = vsyncpa [#allocation7], 1
    %4210 = vsyncpa [#allocation10], 1
    %4211 = vsyncpa [#allocation13], 1
    %4212 = vsyncpa [#allocation5], 1
    %4213 = vsyncpa [#allocation17], 1

</llo_original>
